<compile_context>
chip_gen: v5e
topology: v5e:2x2
jax: 0.10.0
libtpu: 0.0.40
codegen_flags: <defaults>
</compile_context>

<pallas_src>
import functools

import jax
import jax.numpy as jnp
from jax.experimental import pallas as pl
from jax.experimental.pallas import tpu as pltpu


def conv_shape(inp, kernel_size, stride, padding=0):
    return (inp + 2 * padding - kernel_size) // stride + 1


# ---------------------------------------------------------------------------
# Pallas kernels
# ---------------------------------------------------------------------------
def _conv1_kernel(p_ref, w_ref, b_ref, o_ref):
    """conv1 as im2col-GEMM + bias + ReLU. rows = B*OH1*OW1, cols = 32 channels."""
    o_ref[...] = jnp.maximum(
        jnp.dot(p_ref[...], w_ref[...], preferred_element_type=jnp.float32) + b_ref[...],
        0.0)


def conv1_gemm(patches, w, b):
    M, K = patches.shape
    N = w.shape[1]
    return pl.pallas_call(
        _conv1_kernel,
        out_shape=jax.ShapeDtypeStruct((M, N), jnp.float32),
        grid=(1,),
        in_specs=[
            pl.BlockSpec((M, K), lambda i: (0, 0)),
            pl.BlockSpec((K, N), lambda i: (0, 0)),
            pl.BlockSpec((1, N), lambda i: (0, 0)),
        ],
        out_specs=pl.BlockSpec((M, N), lambda i: (0, 0)),
        compiler_params=pltpu.CompilerParams(dimension_semantics=("arbitrary",)),
    )(patches, w, b)


def _tail_kernel(h1_ref, w2_ref, b2_ref, w3_ref, b3_ref,
                 wf1_ref, bf1_ref, wf2_ref, bf2_ref,
                 wcat_ref, bcat_ref, wval_ref, bval_ref, wpol_ref, bpol_ref,
                 val_ref, probs_ref, *, o2h, o2w, o3h, o3w):
    """Everything after conv1, fused in one kernel: conv2, conv3, fc1, fc2, head.

    conv2 patches are assembled in-kernel from (B, OH1, OW1*C1) with static,
    lane-aligned strip slices; convs are expressed as static per-output-position
    slab GEMMs so every intermediate stays in vregs/VMEM.
    """
    f32 = jnp.float32
    c1 = w2_ref.shape[0] // 16        # conv1 channels (32); conv2 kernel is 4x4
    c2 = w2_ref.shape[1]              # 64 conv2/conv3 channels
    kc = 4 * c1                       # lanes per kh-strip: kw(4) * c1 = 128

    h1 = h1_ref[...]                  # (B, o1h, o1w*c1) — a handful of vregs
    o1h = h1.shape[1]
    w2 = w2_ref[...]
    b2 = b2_ref[...]

    # Hoisted slices (no CSE inside the kernel body — do it by hand).
    w2s = [w2[kh * kc:(kh + 1) * kc, :] for kh in range(4)]                 # (128, 64)
    strips = [[h1[:, r, (ow * 2) * c1:(ow * 2) * c1 + kc] for ow in range(o2w)]
              for r in range(o1h)]                                          # (B, 128)

    # ---- conv2 (k=4, s=2) + ReLU: 4 strip GEMMs per output position ----
    h2 = []
    for oh in range(o2h):
        for ow in range(o2w):
            acc = b2
            for kh in range(4):
                acc = acc + jnp.dot(strips[oh * 2 + kh][ow], w2s[kh],
                                    preferred_element_type=f32)
            h2.append(jnp.maximum(acc, 0.0))                                # (B, 64)

    # ---- conv3 (k=3, s=1) + ReLU + NCHW flatten + fc1, as slab GEMMs ----
    b3 = b3_ref[...]
    w3s = [w3_ref[t * c2:(t + 1) * c2, :] for t in range(9)]                # (64, 64)
    x1 = bf1_ref[...]
    for oh in range(o3h):
        for ow in range(o3w):
            acc = b3
            for kh in range(3):
                for kw in range(3):
                    src = h2[(oh + kh) * o2w + (ow + kw)]
                    acc = acc + jnp.dot(src, w3s[kh * 3 + kw],
                                        preferred_element_type=f32)
            h3 = jnp.maximum(acc, 0.0)                                      # (B, 64)
            p3 = oh * o3w + ow
            x1 = x1 + jnp.dot(h3, wf1_ref[p3 * c2:(p3 + 1) * c2, :],
                              preferred_element_type=f32)
    x1 = jnp.maximum(x1, 0.0)                                               # fc1+ReLU (B,256)

    # ---- fc2 + ReLU ----
    x2 = jnp.maximum(
        jnp.dot(x1, wf2_ref[...], preferred_element_type=f32) + bf2_ref[...], 0.0)  # (B,448)

    # ---- head: merged extra_value_fc/extra_policy_fc (policy half lane-aligned) ----
    hdim = wcat_ref.shape[0]
    off_pi = wcat_ref.shape[1] - hdim
    t = jnp.maximum(
        jnp.dot(x2, wcat_ref[...], preferred_element_type=f32) + bcat_ref[...], 0.0)
    x_v = x2 + t[:, :hdim]
    x_pi = x2 + t[:, off_pi:]

    # int_value & ext_value merged into one (448, 2) GEMM.
    val_ref[...] = jnp.dot(x_v, wval_ref[...], preferred_element_type=f32) + bval_ref[...]

    logits = jnp.dot(x_pi, wpol_ref[...], preferred_element_type=f32) + bpol_ref[...]
    m = jnp.max(logits, axis=-1, keepdims=True)
    e = jnp.exp(logits - m)
    probs_ref[...] = e / jnp.sum(e, axis=-1, keepdims=True)


def fused_tail(h1, p, o2h, o2w, o3h, o3w):
    B = h1.shape[0]
    n_actions = p["wpol"].shape[1]
    args = (h1, p["w2"], p["b2"], p["w3"], p["b3"],
            p["wf1"], p["bf1"], p["wf2"], p["bf2"],
            p["wcat"], p["bcat"], p["wval"], p["bval"], p["wpol"], p["bpol"])

    def full(a):
        nd = a.ndim
        return pl.BlockSpec(a.shape, lambda i, nd=nd: (0,) * nd)

    kernel = functools.partial(_tail_kernel, o2h=o2h, o2w=o2w, o3h=o3h, o3w=o3w)
    return pl.pallas_call(
        kernel,
        out_shape=(jax.ShapeDtypeStruct((B, 2), jnp.float32),
                   jax.ShapeDtypeStruct((B, n_actions), jnp.float32)),
        grid=(1,),
        in_specs=[full(a) for a in args],
        out_specs=(pl.BlockSpec((B, 2), lambda i: (0, 0)),
                   pl.BlockSpec((B, n_actions), lambda i: (0, 0))),
        compiler_params=pltpu.CompilerParams(dimension_semantics=("arbitrary",)),
    )(*args)


# ---------------------------------------------------------------------------
# Glue: im2col (NHWC), parameter construction / one-time weight prep, forward
# ---------------------------------------------------------------------------
def _im2col_nhwc(x, k, s):
    """x: (B, H, W, C) -> (B, OH, OW, k, k, C); patch[b,oh,ow,kh,kw,c] = x[b,oh*s+kh,ow*s+kw,c]."""
    _, H, W, _ = x.shape
    oh = (H - k) // s + 1
    ow = (W - k) // s + 1
    hi = (jnp.arange(oh) * s)[:, None] + jnp.arange(k)[None, :]   # (OH, k)
    wi = (jnp.arange(ow) * s)[:, None] + jnp.arange(k)[None, :]   # (OW, k)
    return x[:, hi[:, None, :, None], wi[None, :, None, :], :]


def init_params(key, state_shape, n_actions):
    """Parameters in PyTorch layouts (matches nn.Module init of the spec)."""
    c, w, h = state_shape
    c1w, c1h = conv_shape(w, 8, 4), conv_shape(h, 8, 4)
    c2w, c2h = conv_shape(c1w, 4, 2), conv_shape(c1h, 4, 2)
    c3w, c3h = conv_shape(c2w, 3, 1), conv_shape(c2h, 3, 1)
    flatten_size = c3w * c3h * 64

    keys = jax.random.split(key, 10)
    orth = lambda g: jax.nn.initializers.orthogonal(scale=g)
    g2, g01, g001 = jnp.sqrt(2.0), jnp.sqrt(0.1), jnp.sqrt(0.01)

    return {
        "conv1_w": orth(g2)(keys[0], (32, c, 8, 8), jnp.float32),
        "conv1_b": jnp.zeros((32,), jnp.float32),
        "conv2_w": orth(g2)(keys[1], (64, 32, 4, 4), jnp.float32),
        "conv2_b": jnp.zeros((64,), jnp.float32),
        "conv3_w": orth(g2)(keys[2], (64, 64, 3, 3), jnp.float32),
        "conv3_b": jnp.zeros((64,), jnp.float32),
        "fc1_w": orth(g2)(keys[3], (256, flatten_size), jnp.float32),
        "fc1_b": jnp.zeros((256,), jnp.float32),
        "fc2_w": orth(g2)(keys[4], (448, 256), jnp.float32),
        "fc2_b": jnp.zeros((448,), jnp.float32),
        "extra_value_fc_w": orth(g01)(keys[5], (448, 448), jnp.float32),
        "extra_value_fc_b": jnp.zeros((448,), jnp.float32),
        "extra_policy_fc_w": orth(g01)(keys[6], (448, 448), jnp.float32),
        "extra_policy_fc_b": jnp.zeros((448,), jnp.float32),
        "policy_w": orth(g001)(keys[7], (n_actions, 448), jnp.float32),
        "policy_b": jnp.zeros((n_actions,), jnp.float32),
        "int_value_w": orth(g001)(keys[8], (1, 448), jnp.float32),
        "int_value_b": jnp.zeros((1,), jnp.float32),
        "ext_value_w": orth(g001)(keys[9], (1, 448), jnp.float32),
        "ext_value_b": jnp.zeros((1,), jnp.float32),
    }


def prepare_params(params, state_shape):
    """One-time conversion of PyTorch-layout params into kernel-ready GEMM layouts.
    Folds the /255 quant-stub scale into conv1 and merges the head weight matrices."""
    _, s2, s3 = state_shape
    o3h = conv_shape(conv_shape(conv_shape(s2, 8, 4), 4, 2), 3, 1)
    o3w = conv_shape(conv_shape(conv_shape(s3, 8, 4), 4, 2), 3, 1)
    hdim = params["fc2_w"].shape[0]          # 448
    pad = (-hdim) % 128                      # 64 -> policy half starts on a lane boundary

    def conv_w(w):                           # (O, Cin, kh, kw) -> (kh*kw*Cin, O)
        return jnp.transpose(w, (2, 3, 1, 0)).reshape(-1, w.shape[0])

    wf1 = params["fc1_w"].reshape(256, 64, o3h, o3w)
    wf1 = jnp.transpose(wf1, (2, 3, 1, 0)).reshape(o3h * o3w * 64, 256)

    zcol = jnp.zeros((hdim, pad), jnp.float32)
    zrow = jnp.zeros((pad,), jnp.float32)
    return {
        "w1": conv_w(params["conv1_w"]) / 255.0,      # quant-stub /255 folded in
        "b1": params["conv1_b"].reshape(1, -1),
        "w2": conv_w(params["conv2_w"]),
        "b2": params["conv2_b"].reshape(1, -1),
        "w3": conv_w(params["conv3_w"]),
        "b3": params["conv3_b"].reshape(1, -1),
        "wf1": wf1,
        "bf1": params["fc1_b"].reshape(1, -1),
        "wf2": params["fc2_w"].T,
        "bf2": params["fc2_b"].reshape(1, -1),
        "wcat": jnp.concatenate(
            [params["extra_value_fc_w"].T, zcol, params["extra_policy_fc_w"].T], axis=1),
        "bcat": jnp.concatenate(
            [params["extra_value_fc_b"], zrow, params["extra_policy_fc_b"]]).reshape(1, -1),
        "wval": jnp.concatenate(
            [params["int_value_w"].T, params["ext_value_w"].T], axis=1),
        "bval": jnp.concatenate(
            [params["int_value_b"], params["ext_value_b"]]).reshape(1, -1),
        "wpol": params["policy_w"].T,
        "bpol": params["policy_b"].reshape(1, -1),
    }


@jax.jit
def quant_policy_forward(prepped, inputs):
    """QuantPolicyModel.forward. QuantStub/DeQuantStub/FloatFunctional are identities in
    float eager mode. Returns (int_value, ext_value, probs)."""
    B = inputs.shape[0]
    x = inputs.astype(jnp.float32)                 # /255 folded into conv1 weights
    x = jnp.transpose(x, (0, 2, 3, 1))             # NCHW -> NHWC (channels on lanes)

    # conv1: im2col (JAX, fused under jit) + Pallas GEMM+bias+ReLU  (call #1)
    p1 = _im2col_nhwc(x, 8, 4)
    o1h, o1w = p1.shape[1], p1.shape[2]
    h1 = conv1_gemm(p1.reshape(B * o1h * o1w, -1), prepped["w1"], prepped["b1"])
    # Free reshape: rows were (b, oh1, ow1), lanes = 32 channels -> (B, OH1, OW1*32)
    h1 = h1.reshape(B, o1h, o1w * 32)

    # conv2/conv3/fc1/fc2/head in ONE fused kernel (call #2); conv2 im2col is in-kernel.
    o2h, o2w = conv_shape(o1h, 4, 2), conv_shape(o1w, 4, 2)
    o3h, o3w = conv_shape(o2h, 3, 1), conv_shape(o2w, 3, 1)
    vals, probs = fused_tail(h1, prepped, o2h, o2w, o3h, o3w)

    # TODO(synk): torch.distributions.Categorical(probs) has no Pallas equivalent; probs returned.
    return vals[:, 0:1], vals[:, 1:2], probs


# ---------------------------------------------------------------------------
# Pure-JAX reference of the PyTorch forward (for numerical validation)
# ---------------------------------------------------------------------------
def reference_forward(params, inputs):
    def conv(x, w, b, s):
        y = jax.lax.conv_general_dilated(
            x, w, (s, s), "VALID", dimension_numbers=("NCHW", "OIHW", "NCHW"))
        return y + b[None, :, None, None]

    x = inputs / 255.0
    x = jax.nn.relu(conv(x, params["conv1_w"], params["conv1_b"], 4))
    x = jax.nn.relu(conv(x, params["conv2_w"], params["conv2_b"], 2))
    x = jax.nn.relu(conv(x, params["conv3_w"], params["conv3_b"], 1))
    x = x.reshape(x.shape[0], -1)
    x = jax.nn.relu(x @ params["fc1_w"].T + params["fc1_b"])
    x = jax.nn.relu(x @ params["fc2_w"].T + params["fc2_b"])
    x_v = x + jax.nn.relu(x @ params["extra_value_fc_w"].T + params["extra_value_fc_b"])
    x_pi = x + jax.nn.relu(x @ params["extra_policy_fc_w"].T + params["extra_policy_fc_b"])
    int_value = x_v @ params["int_value_w"].T + params["int_value_b"]
    ext_value = x_v @ params["ext_value_w"].T + params["ext_value_b"]
    logits = x_pi @ params["policy_w"].T + params["policy_b"]
    probs = jax.nn.softmax(logits, axis=1)
    return int_value, ext_value, probs


if __name__ == "__main__":
    state_shape = (4, 36, 36)   # (c, w, h); conv stack -> 8x8 -> 3x3 -> 1x1 spatial
    n_actions = 6
    batch = 2

    key = jax.random.PRNGKey(0)
    pkey, xkey = jax.random.split(key)
    params = init_params(pkey, state_shape, n_actions)
    prepped = prepare_params(params, state_shape)
    inputs = jax.random.uniform(
        xkey, (batch,) + state_shape, minval=0.0, maxval=255.0, dtype=jnp.float32)

    int_value, ext_value, probs = quant_policy_forward(prepped, inputs)
    jax.block_until_ready((int_value, ext_value, probs))

    # Shape / normalization checks
    assert int_value.shape == (batch, 1)
    assert ext_value.shape == (batch, 1)
    assert probs.shape == (batch, n_actions)
    assert bool(jnp.allclose(jnp.sum(probs, axis=1), 1.0, atol=1e-5))

    # Numerical check against a pure-JAX reference of the module forward
    iv_r, ev_r, probs_r = reference_forward(params, inputs)
    assert bool(jnp.allclose(int_value, iv_r, rtol=1e-3, atol=1e-3))
    assert bool(jnp.allclose(ext_value, ev_r, rtol=1e-3, atol=1e-3))
    assert bool(jnp.allclose(probs, probs_r, rtol=1e-3, atol=1e-3))

    print("KERNEL_OK")
</pallas_src>

<mosaic_0001>
module attributes {stable_mosaic.version = 11 : i64} {
  func.func @_conv1_kernel(%arg0: i32, %arg1: memref<128x256xf32, #tpu.memory_space<vmem>>, %arg2: memref<256x32xf32, #tpu.memory_space<vmem>>, %arg3: memref<1x32xf32, #tpu.memory_space<vmem>>, %arg4: memref<128x32xf32, #tpu.memory_space<vmem>>) attributes {dimension_semantics = [#tpu.dimension_semantics<arbitrary>], iteration_bounds = array<i64: 1>, scalar_prefetch = 0 : i64, scratch_operands = 0 : i64, tpu.core_type = #tpu.core_type<tc>, window_params = [{pipeline_mode = #tpu.pipeline_mode<synchronous>, transform_indices = @transform_0, window_bounds = array<i64: 128, 256>}, {pipeline_mode = #tpu.pipeline_mode<synchronous>, transform_indices = @transform_1, window_bounds = array<i64: 256, 32>}, {pipeline_mode = #tpu.pipeline_mode<synchronous>, transform_indices = @transform_2, window_bounds = array<i64: 1, 32>}, {pipeline_mode = #tpu.pipeline_mode<synchronous>, transform_indices = @transform_3, window_bounds = array<i64: 128, 32>}]} {
    %c0 = arith.constant 0 : index
    %c0_0 = arith.constant 0 : index
    %0 = vector.load %arg1[%c0, %c0_0] : memref<128x256xf32, #tpu.memory_space<vmem>>, vector<128x256xf32>
    %c0_1 = arith.constant 0 : index
    %c0_2 = arith.constant 0 : index
    %1 = vector.load %arg2[%c0_1, %c0_2] : memref<256x32xf32, #tpu.memory_space<vmem>>, vector<256x32xf32>
    %cst = arith.constant dense<0.000000e+00> : vector<128x32xf32>
    %2 = tpu.matmul %0, %1, %cst {dimension_numbers = #tpu.dot_dimension_numbers<[1], [0], [0], [1], [0, 0, 1, 1], [], []>} : vector<128x256xf32>, vector<256x32xf32>, vector<128x32xf32> -> vector<128x32xf32>
    %c0_3 = arith.constant 0 : index
    %c0_4 = arith.constant 0 : index
    %3 = vector.load %arg3[%c0_3, %c0_4] : memref<1x32xf32, #tpu.memory_space<vmem>>, vector<1x32xf32>
    %4 = vector.broadcast %3 : vector<1x32xf32> to vector<128x32xf32>
    %5 = arith.addf %2, %4 : vector<128x32xf32>
    %cst_5 = arith.constant 0.000000e+00 : f32
    %6 = vector.broadcast %cst_5 : f32 to vector<128x32xf32>
    %7 = arith.maximumf %5, %6 : vector<128x32xf32>
    %c0_6 = arith.constant 0 : index
    %c0_7 = arith.constant 0 : index
    %8 = vector.load %arg4[%c0_6, %c0_7] : memref<128x32xf32, #tpu.memory_space<vmem>>, vector<128x32xf32>
    tpu.vector_store %arg4[%c0_6, %c0_7], %7 {strides = array<i32>} : memref<128x32xf32, #tpu.memory_space<vmem>>, vector<128x32xf32>,
    return
  }
  func.func @transform_0(%arg0: i32) -> (i32, i32) {
    %c0_i32 = arith.constant 0 : i32
    %c0_i32_0 = arith.constant 0 : i32
    %c0_i32_1 = arith.constant 0 : i32
    return %c0_i32, %c0_i32_0 : i32, i32
  }
  func.func @transform_1(%arg0: i32) -> (i32, i32) {
    %c0_i32 = arith.constant 0 : i32
    %c0_i32_0 = arith.constant 0 : i32
    %c0_i32_1 = arith.constant 0 : i32
    return %c0_i32, %c0_i32_0 : i32, i32
  }
  func.func @transform_2(%arg0: i32) -> (i32, i32) {
    %c0_i32 = arith.constant 0 : i32
    %c0_i32_0 = arith.constant 0 : i32
    %c0_i32_1 = arith.constant 0 : i32
    return %c0_i32, %c0_i32_0 : i32, i32
  }
  func.func @transform_3(%arg0: i32) -> (i32, i32) {
    %c0_i32 = arith.constant 0 : i32
    %c0_i32_0 = arith.constant 0 : i32
    %c0_i32_1 = arith.constant 0 : i32
    return %c0_i32, %c0_i32_0 : i32, i32
  }
}

module attributes {stable_mosaic.version = 11 : i64} {
  func.func @_tail_kernel(%arg0: i32, %arg1: memref<2x8x256xf32, #tpu.memory_space<vmem>>, %arg2: memref<512x64xf32, #tpu.memory_space<vmem>>, %arg3: memref<1x64xf32, #tpu.memory_space<vmem>>, %arg4: memref<576x64xf32, #tpu.memory_space<vmem>>, %arg5: memref<1x64xf32, #tpu.memory_space<vmem>>, %arg6: memref<64x256xf32, #tpu.memory_space<vmem>>, %arg7: memref<1x256xf32, #tpu.memory_space<vmem>>, %arg8: memref<256x448xf32, #tpu.memory_space<vmem>>, %arg9: memref<1x448xf32, #tpu.memory_space<vmem>>, %arg10: memref<448x960xf32, #tpu.memory_space<vmem>>, %arg11: memref<1x960xf32, #tpu.memory_space<vmem>>, %arg12: memref<448x2xf32, #tpu.memory_space<vmem>>, %arg13: memref<1x2xf32, #tpu.memory_space<vmem>>, %arg14: memref<448x6xf32, #tpu.memory_space<vmem>>, %arg15: memref<1x6xf32, #tpu.memory_space<vmem>>, %arg16: memref<2x2xf32, #tpu.memory_space<vmem>>, %arg17: memref<2x6xf32, #tpu.memory_space<vmem>>) attributes {dimension_semantics = [#tpu.dimension_semantics<arbitrary>], iteration_bounds = array<i64: 1>, scalar_prefetch = 0 : i64, scratch_operands = 0 : i64, tpu.core_type = #tpu.core_type<tc>, window_params = [{pipeline_mode = #tpu.pipeline_mode<synchronous>, transform_indices = @transform_0, window_bounds = array<i64: 2, 8, 256>}, {pipeline_mode = #tpu.pipeline_mode<synchronous>, transform_indices = @transform_1, window_bounds = array<i64: 512, 64>}, {pipeline_mode = #tpu.pipeline_mode<synchronous>, transform_indices = @transform_2, window_bounds = array<i64: 1, 64>}, {pipeline_mode = #tpu.pipeline_mode<synchronous>, transform_indices = @transform_3, window_bounds = array<i64: 576, 64>}, {pipeline_mode = #tpu.pipeline_mode<synchronous>, transform_indices = @transform_4, window_bounds = array<i64: 1, 64>}, {pipeline_mode = #tpu.pipeline_mode<synchronous>, transform_indices = @transform_5, window_bounds = array<i64: 64, 256>}, {pipeline_mode = #tpu.pipeline_mode<synchronous>, transform_indices = @transform_6, window_bounds = array<i64: 1, 256>}, {pipeline_mode = #tpu.pipeline_mode<synchronous>, transform_indices = @transform_7, window_bounds = array<i64: 256, 448>}, {pipeline_mode = #tpu.pipeline_mode<synchronous>, transform_indices = @transform_8, window_bounds = array<i64: 1, 448>}, {pipeline_mode = #tpu.pipeline_mode<synchronous>, transform_indices = @transform_9, window_bounds = array<i64: 448, 960>}, {pipeline_mode = #tpu.pipeline_mode<synchronous>, transform_indices = @transform_10, window_bounds = array<i64: 1, 960>}, {pipeline_mode = #tpu.pipeline_mode<synchronous>, transform_indices = @transform_11, window_bounds = array<i64: 448, 2>}, {pipeline_mode = #tpu.pipeline_mode<synchronous>, transform_indices = @transform_12, window_bounds = array<i64: 1, 2>}, {pipeline_mode = #tpu.pipeline_mode<synchronous>, transform_indices = @transform_13, window_bounds = array<i64: 448, 6>}, {pipeline_mode = #tpu.pipeline_mode<synchronous>, transform_indices = @transform_14, window_bounds = array<i64: 1, 6>}, {pipeline_mode = #tpu.pipeline_mode<synchronous>, transform_indices = @transform_15, window_bounds = array<i64: 2, 2>}, {pipeline_mode = #tpu.pipeline_mode<synchronous>, transform_indices = @transform_16, window_bounds = array<i64: 2, 6>}]} {
    %c0 = arith.constant 0 : index
    %c0_0 = arith.constant 0 : index
    %c0_1 = arith.constant 0 : index
    %0 = vector.load %arg1[%c0, %c0_0, %c0_1] : memref<2x8x256xf32, #tpu.memory_space<vmem>>, vector<2x8x256xf32>
    %c0_2 = arith.constant 0 : index
    %c0_3 = arith.constant 0 : index
    %1 = vector.load %arg2[%c0_2, %c0_3] : memref<512x64xf32, #tpu.memory_space<vmem>>, vector<512x64xf32>
    %c0_4 = arith.constant 0 : index
    %c0_5 = arith.constant 0 : index
    %2 = vector.load %arg3[%c0_4, %c0_5] : memref<1x64xf32, #tpu.memory_space<vmem>>, vector<1x64xf32>
    %3 = vector.extract_strided_slice %1 {offsets = [0, 0], sizes = [128, 64], strides = [1, 1]} : vector<512x64xf32> to vector<128x64xf32>
    %4 = vector.extract_strided_slice %1 {offsets = [128, 0], sizes = [128, 64], strides = [1, 1]} : vector<512x64xf32> to vector<128x64xf32>
    %5 = vector.extract_strided_slice %1 {offsets = [256, 0], sizes = [128, 64], strides = [1, 1]} : vector<512x64xf32> to vector<128x64xf32>
    %6 = vector.extract_strided_slice %1 {offsets = [384, 0], sizes = [128, 64], strides = [1, 1]} : vector<512x64xf32> to vector<128x64xf32>
    %7 = vector.extract_strided_slice %0 {offsets = [0, 0, 0], sizes = [2, 1, 128], strides = [1, 1, 1]} : vector<2x8x256xf32> to vector<2x1x128xf32>
    %8 = vector.shape_cast %7 : vector<2x1x128xf32> to vector<2x128xf32>
    %9 = vector.extract_strided_slice %0 {offsets = [0, 0, 64], sizes = [2, 1, 128], strides = [1, 1, 1]} : vector<2x8x256xf32> to vector<2x1x128xf32>
    %10 = vector.shape_cast %9 : vector<2x1x128xf32> to vector<2x128xf32>
    %11 = vector.extract_strided_slice %0 {offsets = [0, 0, 128], sizes = [2, 1, 128], strides = [1, 1, 1]} : vector<2x8x256xf32> to vector<2x1x128xf32>
    %12 = vector.shape_cast %11 : vector<2x1x128xf32> to vector<2x128xf32>
    %13 = vector.extract_strided_slice %0 {offsets = [0, 1, 0], sizes = [2, 1, 128], strides = [1, 1, 1]} : vector<2x8x256xf32> to vector<2x1x128xf32>
    %14 = vector.shape_cast %13 : vector<2x1x128xf32> to vector<2x128xf32>
    %15 = vector.extract_strided_slice %0 {offsets = [0, 1, 64], sizes = [2, 1, 128], strides = [1, 1, 1]} : vector<2x8x256xf32> to vector<2x1x128xf32>
    %16 = vector.shape_cast %15 : vector<2x1x128xf32> to vector<2x128xf32>
    %17 = vector.extract_strided_slice %0 {offsets = [0, 1, 128], sizes = [2, 1, 128], strides = [1, 1, 1]} : vector<2x8x256xf32> to vector<2x1x128xf32>
    %18 = vector.shape_cast %17 : vector<2x1x128xf32> to vector<2x128xf32>
    %19 = vector.extract_strided_slice %0 {offsets = [0, 2, 0], sizes = [2, 1, 128], strides = [1, 1, 1]} : vector<2x8x256xf32> to vector<2x1x128xf32>
    %20 = vector.shape_cast %19 : vector<2x1x128xf32> to vector<2x128xf32>
    %21 = vector.extract_strided_slice %0 {offsets = [0, 2, 64], sizes = [2, 1, 128], strides = [1, 1, 1]} : vector<2x8x256xf32> to vector<2x1x128xf32>
    %22 = vector.shape_cast %21 : vector<2x1x128xf32> to vector<2x128xf32>
    %23 = vector.extract_strided_slice %0 {offsets = [0, 2, 128], sizes = [2, 1, 128], strides = [1, 1, 1]} : vector<2x8x256xf32> to vector<2x1x128xf32>
    %24 = vector.shape_cast %23 : vector<2x1x128xf32> to vector<2x128xf32>
    %25 = vector.extract_strided_slice %0 {offsets = [0, 3, 0], sizes = [2, 1, 128], strides = [1, 1, 1]} : vector<2x8x256xf32> to vector<2x1x128xf32>
    %26 = vector.shape_cast %25 : vector<2x1x128xf32> to vector<2x128xf32>
    %27 = vector.extract_strided_slice %0 {offsets = [0, 3, 64], sizes = [2, 1, 128], strides = [1, 1, 1]} : vector<2x8x256xf32> to vector<2x1x128xf32>
    %28 = vector.shape_cast %27 : vector<2x1x128xf32> to vector<2x128xf32>
    %29 = vector.extract_strided_slice %0 {offsets = [0, 3, 128], sizes = [2, 1, 128], strides = [1, 1, 1]} : vector<2x8x256xf32> to vector<2x1x128xf32>
    %30 = vector.shape_cast %29 : vector<2x1x128xf32> to vector<2x128xf32>
    %31 = vector.extract_strided_slice %0 {offsets = [0, 4, 0], sizes = [2, 1, 128], strides = [1, 1, 1]} : vector<2x8x256xf32> to vector<2x1x128xf32>
    %32 = vector.shape_cast %31 : vector<2x1x128xf32> to vector<2x128xf32>
    %33 = vector.extract_strided_slice %0 {offsets = [0, 4, 64], sizes = [2, 1, 128], strides = [1, 1, 1]} : vector<2x8x256xf32> to vector<2x1x128xf32>
    %34 = vector.shape_cast %33 : vector<2x1x128xf32> to vector<2x128xf32>
    %35 = vector.extract_strided_slice %0 {offsets = [0, 4, 128], sizes = [2, 1, 128], strides = [1, 1, 1]} : vector<2x8x256xf32> to vector<2x1x128xf32>
    %36 = vector.shape_cast %35 : vector<2x1x128xf32> to vector<2x128xf32>
    %37 = vector.extract_strided_slice %0 {offsets = [0, 5, 0], sizes = [2, 1, 128], strides = [1, 1, 1]} : vector<2x8x256xf32> to vector<2x1x128xf32>
    %38 = vector.shape_cast %37 : vector<2x1x128xf32> to vector<2x128xf32>
    %39 = vector.extract_strided_slice %0 {offsets = [0, 5, 64], sizes = [2, 1, 128], strides = [1, 1, 1]} : vector<2x8x256xf32> to vector<2x1x128xf32>
    %40 = vector.shape_cast %39 : vector<2x1x128xf32> to vector<2x128xf32>
    %41 = vector.extract_strided_slice %0 {offsets = [0, 5, 128], sizes = [2, 1, 128], strides = [1, 1, 1]} : vector<2x8x256xf32> to vector<2x1x128xf32>
    %42 = vector.shape_cast %41 : vector<2x1x128xf32> to vector<2x128xf32>
    %43 = vector.extract_strided_slice %0 {offsets = [0, 6, 0], sizes = [2, 1, 128], strides = [1, 1, 1]} : vector<2x8x256xf32> to vector<2x1x128xf32>
    %44 = vector.shape_cast %43 : vector<2x1x128xf32> to vector<2x128xf32>
    %45 = vector.extract_strided_slice %0 {offsets = [0, 6, 64], sizes = [2, 1, 128], strides = [1, 1, 1]} : vector<2x8x256xf32> to vector<2x1x128xf32>
    %46 = vector.shape_cast %45 : vector<2x1x128xf32> to vector<2x128xf32>
    %47 = vector.extract_strided_slice %0 {offsets = [0, 6, 128], sizes = [2, 1, 128], strides = [1, 1, 1]} : vector<2x8x256xf32> to vector<2x1x128xf32>
    %48 = vector.shape_cast %47 : vector<2x1x128xf32> to vector<2x128xf32>
    %49 = vector.extract_strided_slice %0 {offsets = [0, 7, 0], sizes = [2, 1, 128], strides = [1, 1, 1]} : vector<2x8x256xf32> to vector<2x1x128xf32>
    %50 = vector.shape_cast %49 : vector<2x1x128xf32> to vector<2x128xf32>
    %51 = vector.extract_strided_slice %0 {offsets = [0, 7, 64], sizes = [2, 1, 128], strides = [1, 1, 1]} : vector<2x8x256xf32> to vector<2x1x128xf32>
    %52 = vector.shape_cast %51 : vector<2x1x128xf32> to vector<2x128xf32>
    %53 = vector.extract_strided_slice %0 {offsets = [0, 7, 128], sizes = [2, 1, 128], strides = [1, 1, 1]} : vector<2x8x256xf32> to vector<2x1x128xf32>
    %54 = vector.shape_cast %53 : vector<2x1x128xf32> to vector<2x128xf32>
    %cst = arith.constant dense<0.000000e+00> : vector<2x64xf32>
    %55 = tpu.matmul %8, %3, %cst {dimension_numbers = #tpu.dot_dimension_numbers<[1], [0], [0], [1], [0, 0, 1, 1], [], []>} : vector<2x128xf32>, vector<128x64xf32>, vector<2x64xf32> -> vector<2x64xf32>
    %56 = vector.broadcast %2 : vector<1x64xf32> to vector<2x64xf32>
    %57 = arith.addf %56, %55 : vector<2x64xf32>
    %cst_6 = arith.constant dense<0.000000e+00> : vector<2x64xf32>
    %58 = tpu.matmul %14, %4, %cst_6 {dimension_numbers = #tpu.dot_dimension_numbers<[1], [0], [0], [1], [0, 0, 1, 1], [], []>} : vector<2x128xf32>, vector<128x64xf32>, vector<2x64xf32> -> vector<2x64xf32>
    %59 = arith.addf %57, %58 : vector<2x64xf32>
    %cst_7 = arith.constant dense<0.000000e+00> : vector<2x64xf32>
    %60 = tpu.matmul %20, %5, %cst_7 {dimension_numbers = #tpu.dot_dimension_numbers<[1], [0], [0], [1], [0, 0, 1, 1], [], []>} : vector<2x128xf32>, vector<128x64xf32>, vector<2x64xf32> -> vector<2x64xf32>
    %61 = arith.addf %59, %60 : vector<2x64xf32>
    %cst_8 = arith.constant dense<0.000000e+00> : vector<2x64xf32>
    %62 = tpu.matmul %26, %6, %cst_8 {dimension_numbers = #tpu.dot_dimension_numbers<[1], [0], [0], [1], [0, 0, 1, 1], [], []>} : vector<2x128xf32>, vector<128x64xf32>, vector<2x64xf32> -> vector<2x64xf32>
    %63 = arith.addf %61, %62 : vector<2x64xf32>
    %cst_9 = arith.constant 0.000000e+00 : f32
    %64 = vector.broadcast %cst_9 : f32 to vector<2x64xf32>
    %65 = arith.maximumf %63, %64 : vector<2x64xf32>
    %cst_10 = arith.constant dense<0.000000e+00> : vector<2x64xf32>
    %66 = tpu.matmul %10, %3, %cst_10 {dimension_numbers = #tpu.dot_dimension_numbers<[1], [0], [0], [1], [0, 0, 1, 1], [], []>} : vector<2x128xf32>, vector<128x64xf32>, vector<2x64xf32> -> vector<2x64xf32>
    %67 = vector.broadcast %2 : vector<1x64xf32> to vector<2x64xf32>
    %68 = arith.addf %67, %66 : vector<2x64xf32>
    %cst_11 = arith.constant dense<0.000000e+00> : vector<2x64xf32>
    %69 = tpu.matmul %16, %4, %cst_11 {dimension_numbers = #tpu.dot_dimension_numbers<[1], [0], [0], [1], [0, 0, 1, 1], [], []>} : vector<2x128xf32>, vector<128x64xf32>, vector<2x64xf32> -> vector<2x64xf32>
    %70 = arith.addf %68, %69 : vector<2x64xf32>
    %cst_12 = arith.constant dense<0.000000e+00> : vector<2x64xf32>
    %71 = tpu.matmul %22, %5, %cst_12 {dimension_numbers = #tpu.dot_dimension_numbers<[1], [0], [0], [1], [0, 0, 1, 1], [], []>} : vector<2x128xf32>, vector<128x64xf32>, vector<2x64xf32> -> vector<2x64xf32>
    %72 = arith.addf %70, %71 : vector<2x64xf32>
    %cst_13 = arith.constant dense<0.000000e+00> : vector<2x64xf32>
    %73 = tpu.matmul %28, %6, %cst_13 {dimension_numbers = #tpu.dot_dimension_numbers<[1], [0], [0], [1], [0, 0, 1, 1], [], []>} : vector<2x128xf32>, vector<128x64xf32>, vector<2x64xf32> -> vector<2x64xf32>
    %74 = arith.addf %72, %73 : vector<2x64xf32>
    %cst_14 = arith.constant 0.000000e+00 : f32
    %75 = vector.broadcast %cst_14 : f32 to vector<2x64xf32>
    %76 = arith.maximumf %74, %75 : vector<2x64xf32>
    %cst_15 = arith.constant dense<0.000000e+00> : vector<2x64xf32>
    %77 = tpu.matmul %12, %3, %cst_15 {dimension_numbers = #tpu.dot_dimension_numbers<[1], [0], [0], [1], [0, 0, 1, 1], [], []>} : vector<2x128xf32>, vector<128x64xf32>, vector<2x64xf32> -> vector<2x64xf32>
    %78 = vector.broadcast %2 : vector<1x64xf32> to vector<2x64xf32>
    %79 = arith.addf %78, %77 : vector<2x64xf32>
    %cst_16 = arith.constant dense<0.000000e+00> : vector<2x64xf32>
    %80 = tpu.matmul %18, %4, %cst_16 {dimension_numbers = #tpu.dot_dimension_numbers<[1], [0], [0], [1], [0, 0, 1, 1], [], []>} : vector<2x128xf32>, vector<128x64xf32>, vector<2x64xf32> -> vector<2x64xf32>
    %81 = arith.addf %79, %80 : vector<2x64xf32>
    %cst_17 = arith.constant dense<0.000000e+00> : vector<2x64xf32>
    %82 = tpu.matmul %24, %5, %cst_17 {dimension_numbers = #tpu.dot_dimension_numbers<[1], [0], [0], [1], [0, 0, 1, 1], [], []>} : vector<2x128xf32>, vector<128x64xf32>, vector<2x64xf32> -> vector<2x64xf32>
    %83 = arith.addf %81, %82 : vector<2x64xf32>
    %cst_18 = arith.constant dense<0.000000e+00> : vector<2x64xf32>
    %84 = tpu.matmul %30, %6, %cst_18 {dimension_numbers = #tpu.dot_dimension_numbers<[1], [0], [0], [1], [0, 0, 1, 1], [], []>} : vector<2x128xf32>, vector<128x64xf32>, vector<2x64xf32> -> vector<2x64xf32>
    %85 = arith.addf %83, %84 : vector<2x64xf32>
    %cst_19 = arith.constant 0.000000e+00 : f32
    %86 = vector.broadcast %cst_19 : f32 to vector<2x64xf32>
    %87 = arith.maximumf %85, %86 : vector<2x64xf32>
    %cst_20 = arith.constant dense<0.000000e+00> : vector<2x64xf32>
    %88 = tpu.matmul %20, %3, %cst_20 {dimension_numbers = #tpu.dot_dimension_numbers<[1], [0], [0], [1], [0, 0, 1, 1], [], []>} : vector<2x128xf32>, vector<128x64xf32>, vector<2x64xf32> -> vector<2x64xf32>
    %89 = vector.broadcast %2 : vector<1x64xf32> to vector<2x64xf32>
    %90 = arith.addf %89, %88 : vector<2x64xf32>
    %cst_21 = arith.constant dense<0.000000e+00> : vector<2x64xf32>
    %91 = tpu.matmul %26, %4, %cst_21 {dimension_numbers = #tpu.dot_dimension_numbers<[1], [0], [0], [1], [0, 0, 1, 1], [], []>} : vector<2x128xf32>, vector<128x64xf32>, vector<2x64xf32> -> vector<2x64xf32>
    %92 = arith.addf %90, %91 : vector<2x64xf32>
    %cst_22 = arith.constant dense<0.000000e+00> : vector<2x64xf32>
    %93 = tpu.matmul %32, %5, %cst_22 {dimension_numbers = #tpu.dot_dimension_numbers<[1], [0], [0], [1], [0, 0, 1, 1], [], []>} : vector<2x128xf32>, vector<128x64xf32>, vector<2x64xf32> -> vector<2x64xf32>
    %94 = arith.addf %92, %93 : vector<2x64xf32>
    %cst_23 = arith.constant dense<0.000000e+00> : vector<2x64xf32>
    %95 = tpu.matmul %38, %6, %cst_23 {dimension_numbers = #tpu.dot_dimension_numbers<[1], [0], [0], [1], [0, 0, 1, 1], [], []>} : vector<2x128xf32>, vector<128x64xf32>, vector<2x64xf32> -> vector<2x64xf32>
    %96 = arith.addf %94, %95 : vector<2x64xf32>
    %cst_24 = arith.constant 0.000000e+00 : f32
    %97 = vector.broadcast %cst_24 : f32 to vector<2x64xf32>
    %98 = arith.maximumf %96, %97 : vector<2x64xf32>
    %cst_25 = arith.constant dense<0.000000e+00> : vector<2x64xf32>
    %99 = tpu.matmul %22, %3, %cst_25 {dimension_numbers = #tpu.dot_dimension_numbers<[1], [0], [0], [1], [0, 0, 1, 1], [], []>} : vector<2x128xf32>, vector<128x64xf32>, vector<2x64xf32> -> vector<2x64xf32>
    %100 = vector.broadcast %2 : vector<1x64xf32> to vector<2x64xf32>
    %101 = arith.addf %100, %99 : vector<2x64xf32>
    %cst_26 = arith.constant dense<0.000000e+00> : vector<2x64xf32>
    %102 = tpu.matmul %28, %4, %cst_26 {dimension_numbers = #tpu.dot_dimension_numbers<[1], [0], [0], [1], [0, 0, 1, 1], [], []>} : vector<2x128xf32>, vector<128x64xf32>, vector<2x64xf32> -> vector<2x64xf32>
    %103 = arith.addf %101, %102 : vector<2x64xf32>
    %cst_27 = arith.constant dense<0.000000e+00> : vector<2x64xf32>
    %104 = tpu.matmul %34, %5, %cst_27 {dimension_numbers = #tpu.dot_dimension_numbers<[1], [0], [0], [1], [0, 0, 1, 1], [], []>} : vector<2x128xf32>, vector<128x64xf32>, vector<2x64xf32> -> vector<2x64xf32>
    %105 = arith.addf %103, %104 : vector<2x64xf32>
    %cst_28 = arith.constant dense<0.000000e+00> : vector<2x64xf32>
    %106 = tpu.matmul %40, %6, %cst_28 {dimension_numbers = #tpu.dot_dimension_numbers<[1], [0], [0], [1], [0, 0, 1, 1], [], []>} : vector<2x128xf32>, vector<128x64xf32>, vector<2x64xf32> -> vector<2x64xf32>
    %107 = arith.addf %105, %106 : vector<2x64xf32>
    %cst_29 = arith.constant 0.000000e+00 : f32
    %108 = vector.broadcast %cst_29 : f32 to vector<2x64xf32>
    %109 = arith.maximumf %107, %108 : vector<2x64xf32>
    %cst_30 = arith.constant dense<0.000000e+00> : vector<2x64xf32>
    %110 = tpu.matmul %24, %3, %cst_30 {dimension_numbers = #tpu.dot_dimension_numbers<[1], [0], [0], [1], [0, 0, 1, 1], [], []>} : vector<2x128xf32>, vector<128x64xf32>, vector<2x64xf32> -> vector<2x64xf32>
    %111 = vector.broadcast %2 : vector<1x64xf32> to vector<2x64xf32>
    %112 = arith.addf %111, %110 : vector<2x64xf32>
    %cst_31 = arith.constant dense<0.000000e+00> : vector<2x64xf32>
    %113 = tpu.matmul %30, %4, %cst_31 {dimension_numbers = #tpu.dot_dimension_numbers<[1], [0], [0], [1], [0, 0, 1, 1], [], []>} : vector<2x128xf32>, vector<128x64xf32>, vector<2x64xf32> -> vector<2x64xf32>
    %114 = arith.addf %112, %113 : vector<2x64xf32>
    %cst_32 = arith.constant dense<0.000000e+00> : vector<2x64xf32>
    %115 = tpu.matmul %36, %5, %cst_32 {dimension_numbers = #tpu.dot_dimension_numbers<[1], [0], [0], [1], [0, 0, 1, 1], [], []>} : vector<2x128xf32>, vector<128x64xf32>, vector<2x64xf32> -> vector<2x64xf32>
    %116 = arith.addf %114, %115 : vector<2x64xf32>
    %cst_33 = arith.constant dense<0.000000e+00> : vector<2x64xf32>
    %117 = tpu.matmul %42, %6, %cst_33 {dimension_numbers = #tpu.dot_dimension_numbers<[1], [0], [0], [1], [0, 0, 1, 1], [], []>} : vector<2x128xf32>, vector<128x64xf32>, vector<2x64xf32> -> vector<2x64xf32>
    %118 = arith.addf %116, %117 : vector<2x64xf32>
    %cst_34 = arith.constant 0.000000e+00 : f32
    %119 = vector.broadcast %cst_34 : f32 to vector<2x64xf32>
    %120 = arith.maximumf %118, %119 : vector<2x64xf32>
    %cst_35 = arith.constant dense<0.000000e+00> : vector<2x64xf32>
    %121 = tpu.matmul %32, %3, %cst_35 {dimension_numbers = #tpu.dot_dimension_numbers<[1], [0], [0], [1], [0, 0, 1, 1], [], []>} : vector<2x128xf32>, vector<128x64xf32>, vector<2x64xf32> -> vector<2x64xf32>
    %122 = vector.broadcast %2 : vector<1x64xf32> to vector<2x64xf32>
    %123 = arith.addf %122, %121 : vector<2x64xf32>
    %cst_36 = arith.constant dense<0.000000e+00> : vector<2x64xf32>
    %124 = tpu.matmul %38, %4, %cst_36 {dimension_numbers = #tpu.dot_dimension_numbers<[1], [0], [0], [1], [0, 0, 1, 1], [], []>} : vector<2x128xf32>, vector<128x64xf32>, vector<2x64xf32> -> vector<2x64xf32>
    %125 = arith.addf %123, %124 : vector<2x64xf32>
    %cst_37 = arith.constant dense<0.000000e+00> : vector<2x64xf32>
    %126 = tpu.matmul %44, %5, %cst_37 {dimension_numbers = #tpu.dot_dimension_numbers<[1], [0], [0], [1], [0, 0, 1, 1], [], []>} : vector<2x128xf32>, vector<128x64xf32>, vector<2x64xf32> -> vector<2x64xf32>
    %127 = arith.addf %125, %126 : vector<2x64xf32>
    %cst_38 = arith.constant dense<0.000000e+00> : vector<2x64xf32>
    %128 = tpu.matmul %50, %6, %cst_38 {dimension_numbers = #tpu.dot_dimension_numbers<[1], [0], [0], [1], [0, 0, 1, 1], [], []>} : vector<2x128xf32>, vector<128x64xf32>, vector<2x64xf32> -> vector<2x64xf32>
    %129 = arith.addf %127, %128 : vector<2x64xf32>
    %cst_39 = arith.constant 0.000000e+00 : f32
    %130 = vector.broadcast %cst_39 : f32 to vector<2x64xf32>
    %131 = arith.maximumf %129, %130 : vector<2x64xf32>
    %cst_40 = arith.constant dense<0.000000e+00> : vector<2x64xf32>
    %132 = tpu.matmul %34, %3, %cst_40 {dimension_numbers = #tpu.dot_dimension_numbers<[1], [0], [0], [1], [0, 0, 1, 1], [], []>} : vector<2x128xf32>, vector<128x64xf32>, vector<2x64xf32> -> vector<2x64xf32>
    %133 = vector.broadcast %2 : vector<1x64xf32> to vector<2x64xf32>
    %134 = arith.addf %133, %132 : vector<2x64xf32>
    %cst_41 = arith.constant dense<0.000000e+00> : vector<2x64xf32>
    %135 = tpu.matmul %40, %4, %cst_41 {dimension_numbers = #tpu.dot_dimension_numbers<[1], [0], [0], [1], [0, 0, 1, 1], [], []>} : vector<2x128xf32>, vector<128x64xf32>, vector<2x64xf32> -> vector<2x64xf32>
    %136 = arith.addf %134, %135 : vector<2x64xf32>
    %cst_42 = arith.constant dense<0.000000e+00> : vector<2x64xf32>
    %137 = tpu.matmul %46, %5, %cst_42 {dimension_numbers = #tpu.dot_dimension_numbers<[1], [0], [0], [1], [0, 0, 1, 1], [], []>} : vector<2x128xf32>, vector<128x64xf32>, vector<2x64xf32> -> vector<2x64xf32>
    %138 = arith.addf %136, %137 : vector<2x64xf32>
    %cst_43 = arith.constant dense<0.000000e+00> : vector<2x64xf32>
    %139 = tpu.matmul %52, %6, %cst_43 {dimension_numbers = #tpu.dot_dimension_numbers<[1], [0], [0], [1], [0, 0, 1, 1], [], []>} : vector<2x128xf32>, vector<128x64xf32>, vector<2x64xf32> -> vector<2x64xf32>
    %140 = arith.addf %138, %139 : vector<2x64xf32>
    %cst_44 = arith.constant 0.000000e+00 : f32
    %141 = vector.broadcast %cst_44 : f32 to vector<2x64xf32>
    %142 = arith.maximumf %140, %141 : vector<2x64xf32>
    %cst_45 = arith.constant dense<0.000000e+00> : vector<2x64xf32>
    %143 = tpu.matmul %36, %3, %cst_45 {dimension_numbers = #tpu.dot_dimension_numbers<[1], [0], [0], [1], [0, 0, 1, 1], [], []>} : vector<2x128xf32>, vector<128x64xf32>, vector<2x64xf32> -> vector<2x64xf32>
    %144 = vector.broadcast %2 : vector<1x64xf32> to vector<2x64xf32>
    %145 = arith.addf %144, %143 : vector<2x64xf32>
    %cst_46 = arith.constant dense<0.000000e+00> : vector<2x64xf32>
    %146 = tpu.matmul %42, %4, %cst_46 {dimension_numbers = #tpu.dot_dimension_numbers<[1], [0], [0], [1], [0, 0, 1, 1], [], []>} : vector<2x128xf32>, vector<128x64xf32>, vector<2x64xf32> -> vector<2x64xf32>
    %147 = arith.addf %145, %146 : vector<2x64xf32>
    %cst_47 = arith.constant dense<0.000000e+00> : vector<2x64xf32>
    %148 = tpu.matmul %48, %5, %cst_47 {dimension_numbers = #tpu.dot_dimension_numbers<[1], [0], [0], [1], [0, 0, 1, 1], [], []>} : vector<2x128xf32>, vector<128x64xf32>, vector<2x64xf32> -> vector<2x64xf32>
    %149 = arith.addf %147, %148 : vector<2x64xf32>
    %cst_48 = arith.constant dense<0.000000e+00> : vector<2x64xf32>
    %150 = tpu.matmul %54, %6, %cst_48 {dimension_numbers = #tpu.dot_dimension_numbers<[1], [0], [0], [1], [0, 0, 1, 1], [], []>} : vector<2x128xf32>, vector<128x64xf32>, vector<2x64xf32> -> vector<2x64xf32>
    %151 = arith.addf %149, %150 : vector<2x64xf32>
    %cst_49 = arith.constant 0.000000e+00 : f32
    %152 = vector.broadcast %cst_49 : f32 to vector<2x64xf32>
    %153 = arith.maximumf %151, %152 : vector<2x64xf32>
    %c0_50 = arith.constant 0 : index
    %c0_51 = arith.constant 0 : index
    %154 = vector.load %arg5[%c0_50, %c0_51] : memref<1x64xf32, #tpu.memory_space<vmem>>, vector<1x64xf32>
    %c0_52 = arith.constant 0 : index
    %c0_53 = arith.constant 0 : index
    %155 = vector.load %arg4[%c0_52, %c0_53] : memref<576x64xf32, #tpu.memory_space<vmem>>, vector<64x64xf32>
    %c64 = arith.constant 64 : index
    %c0_54 = arith.constant 0 : index
    %156 = vector.load %arg4[%c64, %c0_54] : memref<576x64xf32, #tpu.memory_space<vmem>>, vector<64x64xf32>
    %c128 = arith.constant 128 : index
    %c0_55 = arith.constant 0 : index
    %157 = vector.load %arg4[%c128, %c0_55] : memref<576x64xf32, #tpu.memory_space<vmem>>, vector<64x64xf32>
    %c192 = arith.constant 192 : index
    %c0_56 = arith.constant 0 : index
    %158 = vector.load %arg4[%c192, %c0_56] : memref<576x64xf32, #tpu.memory_space<vmem>>, vector<64x64xf32>
    %c256 = arith.constant 256 : index
    %c0_57 = arith.constant 0 : index
    %159 = vector.load %arg4[%c256, %c0_57] : memref<576x64xf32, #tpu.memory_space<vmem>>, vector<64x64xf32>
    %c320 = arith.constant 320 : index
    %c0_58 = arith.constant 0 : index
    %160 = vector.load %arg4[%c320, %c0_58] : memref<576x64xf32, #tpu.memory_space<vmem>>, vector<64x64xf32>
    %c384 = arith.constant 384 : index
    %c0_59 = arith.constant 0 : index
    %161 = vector.load %arg4[%c384, %c0_59] : memref<576x64xf32, #tpu.memory_space<vmem>>, vector<64x64xf32>
    %c448 = arith.constant 448 : index
    %c0_60 = arith.constant 0 : index
    %162 = vector.load %arg4[%c448, %c0_60] : memref<576x64xf32, #tpu.memory_space<vmem>>, vector<64x64xf32>
    %c512 = arith.constant 512 : index
    %c0_61 = arith.constant 0 : index
    %163 = vector.load %arg4[%c512, %c0_61] : memref<576x64xf32, #tpu.memory_space<vmem>>, vector<64x64xf32>
    %c0_62 = arith.constant 0 : index
    %c0_63 = arith.constant 0 : index
    %164 = vector.load %arg7[%c0_62, %c0_63] : memref<1x256xf32, #tpu.memory_space<vmem>>, vector<1x256xf32>
    %cst_64 = arith.constant dense<0.000000e+00> : vector<2x64xf32>
    %165 = tpu.matmul %65, %155, %cst_64 {dimension_numbers = #tpu.dot_dimension_numbers<[1], [0], [0], [1], [0, 0, 1, 1], [], []>} : vector<2x64xf32>, vector<64x64xf32>, vector<2x64xf32> -> vector<2x64xf32>
    %166 = vector.broadcast %154 : vector<1x64xf32> to vector<2x64xf32>
    %167 = arith.addf %166, %165 : vector<2x64xf32>
    %cst_65 = arith.constant dense<0.000000e+00> : vector<2x64xf32>
    %168 = tpu.matmul %76, %156, %cst_65 {dimension_numbers = #tpu.dot_dimension_numbers<[1], [0], [0], [1], [0, 0, 1, 1], [], []>} : vector<2x64xf32>, vector<64x64xf32>, vector<2x64xf32> -> vector<2x64xf32>
    %169 = arith.addf %167, %168 : vector<2x64xf32>
    %cst_66 = arith.constant dense<0.000000e+00> : vector<2x64xf32>
    %170 = tpu.matmul %87, %157, %cst_66 {dimension_numbers = #tpu.dot_dimension_numbers<[1], [0], [0], [1], [0, 0, 1, 1], [], []>} : vector<2x64xf32>, vector<64x64xf32>, vector<2x64xf32> -> vector<2x64xf32>
    %171 = arith.addf %169, %170 : vector<2x64xf32>
    %cst_67 = arith.constant dense<0.000000e+00> : vector<2x64xf32>
    %172 = tpu.matmul %98, %158, %cst_67 {dimension_numbers = #tpu.dot_dimension_numbers<[1], [0], [0], [1], [0, 0, 1, 1], [], []>} : vector<2x64xf32>, vector<64x64xf32>, vector<2x64xf32> -> vector<2x64xf32>
    %173 = arith.addf %171, %172 : vector<2x64xf32>
    %cst_68 = arith.constant dense<0.000000e+00> : vector<2x64xf32>
    %174 = tpu.matmul %109, %159, %cst_68 {dimension_numbers = #tpu.dot_dimension_numbers<[1], [0], [0], [1], [0, 0, 1, 1], [], []>} : vector<2x64xf32>, vector<64x64xf32>, vector<2x64xf32> -> vector<2x64xf32>
    %175 = arith.addf %173, %174 : vector<2x64xf32>
    %cst_69 = arith.constant dense<0.000000e+00> : vector<2x64xf32>
    %176 = tpu.matmul %120, %160, %cst_69 {dimension_numbers = #tpu.dot_dimension_numbers<[1], [0], [0], [1], [0, 0, 1, 1], [], []>} : vector<2x64xf32>, vector<64x64xf32>, vector<2x64xf32> -> vector<2x64xf32>
    %177 = arith.addf %175, %176 : vector<2x64xf32>
    %cst_70 = arith.constant dense<0.000000e+00> : vector<2x64xf32>
    %178 = tpu.matmul %131, %161, %cst_70 {dimension_numbers = #tpu.dot_dimension_numbers<[1], [0], [0], [1], [0, 0, 1, 1], [], []>} : vector<2x64xf32>, vector<64x64xf32>, vector<2x64xf32> -> vector<2x64xf32>
    %179 = arith.addf %177, %178 : vector<2x64xf32>
    %cst_71 = arith.constant dense<0.000000e+00> : vector<2x64xf32>
    %180 = tpu.matmul %142, %162, %cst_71 {dimension_numbers = #tpu.dot_dimension_numbers<[1], [0], [0], [1], [0, 0, 1, 1], [], []>} : vector<2x64xf32>, vector<64x64xf32>, vector<2x64xf32> -> vector<2x64xf32>
    %181 = arith.addf %179, %180 : vector<2x64xf32>
    %cst_72 = arith.constant dense<0.000000e+00> : vector<2x64xf32>
    %182 = tpu.matmul %153, %163, %cst_72 {dimension_numbers = #tpu.dot_dimension_numbers<[1], [0], [0], [1], [0, 0, 1, 1], [], []>} : vector<2x64xf32>, vector<64x64xf32>, vector<2x64xf32> -> vector<2x64xf32>
    %183 = arith.addf %181, %182 : vector<2x64xf32>
    %cst_73 = arith.constant 0.000000e+00 : f32
    %184 = vector.broadcast %cst_73 : f32 to vector<2x64xf32>
    %185 = arith.maximumf %183, %184 : vector<2x64xf32>
    %c0_74 = arith.constant 0 : index
    %c0_75 = arith.constant 0 : index
    %186 = vector.load %arg6[%c0_74, %c0_75] : memref<64x256xf32, #tpu.memory_space<vmem>>, vector<64x256xf32>
    %cst_76 = arith.constant dense<0.000000e+00> : vector<2x256xf32>
    %187 = tpu.matmul %185, %186, %cst_76 {dimension_numbers = #tpu.dot_dimension_numbers<[1], [0], [0], [1], [0, 0, 1, 1], [], []>} : vector<2x64xf32>, vector<64x256xf32>, vector<2x256xf32> -> vector<2x256xf32>
    %188 = vector.broadcast %164 : vector<1x256xf32> to vector<2x256xf32>
    %189 = arith.addf %188, %187 : vector<2x256xf32>
    %cst_77 = arith.constant 0.000000e+00 : f32
    %190 = vector.broadcast %cst_77 : f32 to vector<2x256xf32>
    %191 = arith.maximumf %189, %190 : vector<2x256xf32>
    %c0_78 = arith.constant 0 : index
    %c0_79 = arith.constant 0 : index
    %192 = vector.load %arg8[%c0_78, %c0_79] : memref<256x448xf32, #tpu.memory_space<vmem>>, vector<256x448xf32>
    %cst_80 = arith.constant dense<0.000000e+00> : vector<2x448xf32>
    %193 = tpu.matmul %191, %192, %cst_80 {dimension_numbers = #tpu.dot_dimension_numbers<[1], [0], [0], [1], [0, 0, 1, 1], [], []>} : vector<2x256xf32>, vector<256x448xf32>, vector<2x448xf32> -> vector<2x448xf32>
    %c0_81 = arith.constant 0 : index
    %c0_82 = arith.constant 0 : index
    %194 = vector.load %arg9[%c0_81, %c0_82] : memref<1x448xf32, #tpu.memory_space<vmem>>, vector<1x448xf32>
    %195 = vector.broadcast %194 : vector<1x448xf32> to vector<2x448xf32>
    %196 = arith.addf %193, %195 : vector<2x448xf32>
    %cst_83 = arith.constant 0.000000e+00 : f32
    %197 = vector.broadcast %cst_83 : f32 to vector<2x448xf32>
    %198 = arith.maximumf %196, %197 : vector<2x448xf32>
    %c0_84 = arith.constant 0 : index
    %c0_85 = arith.constant 0 : index
    %199 = vector.load %arg10[%c0_84, %c0_85] : memref<448x960xf32, #tpu.memory_space<vmem>>, vector<448x960xf32>
    %cst_86 = arith.constant dense<0.000000e+00> : vector<2x960xf32>
    %200 = tpu.matmul %198, %199, %cst_86 {dimension_numbers = #tpu.dot_dimension_numbers<[1], [0], [0], [1], [0, 0, 1, 1], [], []>} : vector<2x448xf32>, vector<448x960xf32>, vector<2x960xf32> -> vector<2x960xf32>
    %c0_87 = arith.constant 0 : index
    %c0_88 = arith.constant 0 : index
    %201 = vector.load %arg11[%c0_87, %c0_88] : memref<1x960xf32, #tpu.memory_space<vmem>>, vector<1x960xf32>
    %202 = vector.broadcast %201 : vector<1x960xf32> to vector<2x960xf32>
    %203 = arith.addf %200, %202 : vector<2x960xf32>
    %cst_89 = arith.constant 0.000000e+00 : f32
    %204 = vector.broadcast %cst_89 : f32 to vector<2x960xf32>
    %205 = arith.maximumf %203, %204 : vector<2x960xf32>
    %206 = vector.extract_strided_slice %205 {offsets = [0, 0], sizes = [2, 448], strides = [1, 1]} : vector<2x960xf32> to vector<2x448xf32>
    %207 = arith.addf %198, %206 : vector<2x448xf32>
    %208 = vector.extract_strided_slice %205 {offsets = [0, 512], sizes = [2, 448], strides = [1, 1]} : vector<2x960xf32> to vector<2x448xf32>
    %209 = arith.addf %198, %208 : vector<2x448xf32>
    %c0_90 = arith.constant 0 : index
    %c0_91 = arith.constant 0 : index
    %210 = vector.load %arg12[%c0_90, %c0_91] : memref<448x2xf32, #tpu.memory_space<vmem>>, vector<448x2xf32>
    %cst_92 = arith.constant dense<0.000000e+00> : vector<2x2xf32>
    %211 = tpu.matmul %207, %210, %cst_92 {dimension_numbers = #tpu.dot_dimension_numbers<[1], [0], [0], [1], [0, 0, 1, 1], [], []>} : vector<2x448xf32>, vector<448x2xf32>, vector<2x2xf32> -> vector<2x2xf32>
    %c0_93 = arith.constant 0 : index
    %c0_94 = arith.constant 0 : index
    %212 = vector.load %arg13[%c0_93, %c0_94] : memref<1x2xf32, #tpu.memory_space<vmem>>, vector<1x2xf32>
    %213 = vector.broadcast %212 : vector<1x2xf32> to vector<2x2xf32>
    %214 = arith.addf %211, %213 : vector<2x2xf32>
    %c0_95 = arith.constant 0 : index
    %c0_96 = arith.constant 0 : index
    %215 = vector.load %arg16[%c0_95, %c0_96] : memref<2x2xf32, #tpu.memory_space<vmem>>, vector<2x2xf32>
    tpu.vector_store %arg16[%c0_95, %c0_96], %214 {strides = array<i32>} : memref<2x2xf32, #tpu.memory_space<vmem>>, vector<2x2xf32>,
    %c0_97 = arith.constant 0 : index
    %c0_98 = arith.constant 0 : index
    %216 = vector.load %arg14[%c0_97, %c0_98] : memref<448x6xf32, #tpu.memory_space<vmem>>, vector<448x6xf32>
    %cst_99 = arith.constant dense<0.000000e+00> : vector<2x6xf32>
    %217 = tpu.matmul %209, %216, %cst_99 {dimension_numbers = #tpu.dot_dimension_numbers<[1], [0], [0], [1], [0, 0, 1, 1], [], []>} : vector<2x448xf32>, vector<448x6xf32>, vector<2x6xf32> -> vector<2x6xf32>
    %c0_100 = arith.constant 0 : index
    %c0_101 = arith.constant 0 : index
    %218 = vector.load %arg15[%c0_100, %c0_101] : memref<1x6xf32, #tpu.memory_space<vmem>>, vector<1x6xf32>
    %219 = vector.broadcast %218 : vector<1x6xf32> to vector<2x6xf32>
    %220 = arith.addf %217, %219 : vector<2x6xf32>
    %cst_102 = arith.constant dense<0xFF800000> : vector<2xf32>
    %221 = vector.multi_reduction <maximumf>, %220, %cst_102 [1] : vector<2x6xf32> to vector<2xf32>
    %222 = vector.shape_cast %221 : vector<2xf32> to vector<2x1xf32>
    %223 = vector.broadcast %222 : vector<2x1xf32> to vector<2x6xf32>
    %224 = arith.subf %220, %223 : vector<2x6xf32>
    %225 = math.exp %224 : vector<2x6xf32>
    %cst_103 = arith.constant dense<0.000000e+00> : vector<2xf32>
    %226 = vector.multi_reduction <add>, %225, %cst_103 [1] : vector<2x6xf32> to vector<2xf32>
    %227 = vector.shape_cast %226 : vector<2xf32> to vector<2x1xf32>
    %228 = vector.broadcast %227 : vector<2x1xf32> to vector<2x6xf32>
    %229 = arith.divf %225, %228 : vector<2x6xf32>
    %c0_104 = arith.constant 0 : index
    %c0_105 = arith.constant 0 : index
    %230 = vector.load %arg17[%c0_104, %c0_105] : memref<2x6xf32, #tpu.memory_space<vmem>>, vector<2x6xf32>
    tpu.vector_store %arg17[%c0_104, %c0_105], %229 {strides = array<i32>} : memref<2x6xf32, #tpu.memory_space<vmem>>, vector<2x6xf32>,
    return
  }
  func.func @transform_0(%arg0: i32) -> (i32, i32, i32) {
    %c0_i32 = arith.constant 0 : i32
    %c0_i32_0 = arith.constant 0 : i32
    %c0_i32_1 = arith.constant 0 : i32
    %c0_i32_2 = arith.constant 0 : i32
    return %c0_i32, %c0_i32_0, %c0_i32_1 : i32, i32, i32
  }
  func.func @transform_1(%arg0: i32) -> (i32, i32) {
    %c0_i32 = arith.constant 0 : i32
    %c0_i32_0 = arith.constant 0 : i32
    %c0_i32_1 = arith.constant 0 : i32
    return %c0_i32, %c0_i32_0 : i32, i32
  }
  func.func @transform_2(%arg0: i32) -> (i32, i32) {
    %c0_i32 = arith.constant 0 : i32
    %c0_i32_0 = arith.constant 0 : i32
    %c0_i32_1 = arith.constant 0 : i32
    return %c0_i32, %c0_i32_0 : i32, i32
  }
  func.func @transform_3(%arg0: i32) -> (i32, i32) {
    %c0_i32 = arith.constant 0 : i32
    %c0_i32_0 = arith.constant 0 : i32
    %c0_i32_1 = arith.constant 0 : i32
    return %c0_i32, %c0_i32_0 : i32, i32
  }
  func.func @transform_4(%arg0: i32) -> (i32, i32) {
    %c0_i32 = arith.constant 0 : i32
    %c0_i32_0 = arith.constant 0 : i32
    %c0_i32_1 = arith.constant 0 : i32
    return %c0_i32, %c0_i32_0 : i32, i32
  }
  func.func @transform_5(%arg0: i32) -> (i32, i32) {
    %c0_i32 = arith.constant 0 : i32
    %c0_i32_0 = arith.constant 0 : i32
    %c0_i32_1 = arith.constant 0 : i32
    return %c0_i32, %c0_i32_0 : i32, i32
  }
  func.func @transform_6(%arg0: i32) -> (i32, i32) {
    %c0_i32 = arith.constant 0 : i32
    %c0_i32_0 = arith.constant 0 : i32
    %c0_i32_1 = arith.constant 0 : i32
    return %c0_i32, %c0_i32_0 : i32, i32
  }
  func.func @transform_7(%arg0: i32) -> (i32, i32) {
    %c0_i32 = arith.constant 0 : i32
    %c0_i32_0 = arith.constant 0 : i32
    %c0_i32_1 = arith.constant 0 : i32
    return %c0_i32, %c0_i32_0 : i32, i32
  }
  func.func @transform_8(%arg0: i32) -> (i32, i32) {
    %c0_i32 = arith.constant 0 : i32
    %c0_i32_0 = arith.constant 0 : i32
    %c0_i32_1 = arith.constant 0 : i32
    return %c0_i32, %c0_i32_0 : i32, i32
  }
  func.func @transform_9(%arg0: i32) -> (i32, i32) {
    %c0_i32 = arith.constant 0 : i32
    %c0_i32_0 = arith.constant 0 : i32
    %c0_i32_1 = arith.constant 0 : i32
    return %c0_i32, %c0_i32_0 : i32, i32
  }
  func.func @transform_10(%arg0: i32) -> (i32, i32) {
    %c0_i32 = arith.constant 0 : i32
    %c0_i32_0 = arith.constant 0 : i32
    %c0_i32_1 = arith.constant 0 : i32
    return %c0_i32, %c0_i32_0 : i32, i32
  }
  func.func @transform_11(%arg0: i32) -> (i32, i32) {
    %c0_i32 = arith.constant 0 : i32
    %c0_i32_0 = arith.constant 0 : i32
    %c0_i32_1 = arith.constant 0 : i32
    return %c0_i32, %c0_i32_0 : i32, i32
  }
  func.func @transform_12(%arg0: i32) -> (i32, i32) {
    %c0_i32 = arith.constant 0 : i32
    %c0_i32_0 = arith.constant 0 : i32
    %c0_i32_1 = arith.constant 0 : i32
    return %c0_i32, %c0_i32_0 : i32, i32
  }
  func.func @transform_13(%arg0: i32) -> (i32, i32) {
    %c0_i32 = arith.constant 0 : i32
    %c0_i32_0 = arith.constant 0 : i32
    %c0_i32_1 = arith.constant 0 : i32
    return %c0_i32, %c0_i32_0 : i32, i32
  }
  func.func @transform_14(%arg0: i32) -> (i32, i32) {
    %c0_i32 = arith.constant 0 : i32
    %c0_i32_0 = arith.constant 0 : i32
    %c0_i32_1 = arith.constant 0 : i32
    return %c0_i32, %c0_i32_0 : i32, i32
  }
  func.func @transform_15(%arg0: i32) -> (i32, i32) {
    %c0_i32 = arith.constant 0 : i32
    %c0_i32_0 = arith.constant 0 : i32
    %c0_i32_1 = arith.constant 0 : i32
    return %c0_i32, %c0_i32_0 : i32, i32
  }
  func.func @transform_16(%arg0: i32) -> (i32, i32) {
    %c0_i32 = arith.constant 0 : i32
    %c0_i32_0 = arith.constant 0 : i32
    %c0_i32_1 = arith.constant 0 : i32
    return %c0_i32, %c0_i32_0 : i32, i32
  }
}

</mosaic_0001>

<llo_original>
// kernel: quant_policy_forward.2
$region0: #{quant_policy_forward.2}
  #allocation0 [shape = 'u32[]', space=smem, size = 0x4, offset = 0x4, fixed_abs, tag = 'smem constant byte address 0x4 - core index']
  #allocation1 [shape = 'u32[72,128]{1,0:T(1,128)}', space=vmem, size = 0x9000, scoped, tag = 'internal scratch']
  %s0 = inlined_call_operand.vmem [shape: f32[128,256], index: 0, kind: input, shape index: {}]
  %s1 = inlined_call_operand.vmem [shape: f32[256,32], index: 1, kind: input, shape index: {}]
  %s2 = inlined_call_operand.vmem [shape: f32[1,32], index: 2, kind: input, shape index: {}]
  %s3 = inlined_call_operand.vmem [shape: f32[128,32], index: 3, kind: output, shape index: {}]
  %s4 = sld [smem:[#allocation0]]
  $region22: #{quant_policy_forward.2} parent=0
    _
  %s6 = ssub.s32 1, %s4
  %s7 = scalar_select 0, %s6, %s4
  // Predicated region
  $region2: #{quant_policy_forward.2} parent=0 // pred_check
    _
  $region3: #{quant_policy_forward.2} parent=0 // pred_check_branch
    %9 = sbr.rel (0) target = $region5
  $region4: #{quant_policy_forward.2} parent=0 // pred_region
    _
  $region5: #{quant_policy_forward.2} parent=0 // pred_fallthru
    _
  // Predicated region
  $region6: #{quant_policy_forward.2} parent=0 // pred_check
    _
  $region7: #{quant_policy_forward.2} parent=0 // pred_check_branch
    %11 = sbr.rel (0) target = $region9
  $region8: #{quant_policy_forward.2} parent=0 // pred_region
    _
  $region9: #{quant_policy_forward.2} parent=0 // pred_fallthru
    _
  // Predicated region
  $region10: #{quant_policy_forward.2} parent=0 // pred_check
    _
  $region11: #{quant_policy_forward.2} parent=0 // pred_check_branch
    %13 = sbr.rel (0) target = $region13
  $region12: #{quant_policy_forward.2} parent=0 // pred_region
    _
  $region13: #{quant_policy_forward.2} parent=0 // pred_fallthru
    _
  %v14 = vld [vmem:[%s0] sm:$0xff]
  %v15 = vld [vmem:[%s0 + $0x8] sm:$0xff]
  %v16 = vld [vmem:[%s0 + $0x10] sm:$0xff]
  %v17 = vld [vmem:[%s0 + $0x18] sm:$0xff]
  %v18 = vld [vmem:[%s0 + $0x20] sm:$0xff]
  %v19 = vld [vmem:[%s0 + $0x28] sm:$0xff]
  %v20 = vld [vmem:[%s0 + $0x30] sm:$0xff]
  %v21 = vld [vmem:[%s0 + $0x38] sm:$0xff]
  %v22 = vld [vmem:[%s0 + $0x40] sm:$0xff]
  %v23 = vld [vmem:[%s0 + $0x48] sm:$0xff]
  %v24 = vld [vmem:[%s0 + $0x50] sm:$0xff]
  %v25 = vld [vmem:[%s0 + $0x58] sm:$0xff]
  %v26 = vld [vmem:[%s0 + $0x60] sm:$0xff]
  %v27 = vld [vmem:[%s0 + $0x68] sm:$0xff]
  %v28 = vld [vmem:[%s0 + $0x70] sm:$0xff]
  %v29 = vld [vmem:[%s0 + $0x78] sm:$0xff]
  %v30 = vld [vmem:[%s0 + $0x80] sm:$0xff]
  %v31 = vld [vmem:[%s0 + $0x88] sm:$0xff]
  %v32 = vld [vmem:[%s0 + $0x90] sm:$0xff]
  %v33 = vld [vmem:[%s0 + $0x98] sm:$0xff]
  %v34 = vld [vmem:[%s0 + $0xa0] sm:$0xff]
  %v35 = vld [vmem:[%s0 + $0xa8] sm:$0xff]
  %v36 = vld [vmem:[%s0 + $0xb0] sm:$0xff]
  %v37 = vld [vmem:[%s0 + $0xb8] sm:$0xff]
  %v38 = vld [vmem:[%s0 + $0xc0] sm:$0xff]
  %v39 = vld [vmem:[%s0 + $0xc8] sm:$0xff]
  %v40 = vld [vmem:[%s0 + $0xd0] sm:$0xff]
  %v41 = vld [vmem:[%s0 + $0xd8] sm:$0xff]
  %v42 = vld [vmem:[%s0 + $0xe0] sm:$0xff]
  %v43 = vld [vmem:[%s0 + $0xe8] sm:$0xff]
  %v44 = vld [vmem:[%s0 + $0xf0] sm:$0xff]
  %v45 = vld [vmem:[%s0 + $0xf8] sm:$0xff]
  %v46 = vld [vmem:[%s1] sm:$0xff]
  %v47 = vld [vmem:[%s1 + $0x8] sm:$0xff]
  %v48 = vld [vmem:[%s1 + $0x10] sm:$0xff]
  %v49 = vld [vmem:[%s1 + $0x18] sm:$0xff]
  %v50 = vld [vmem:[%s1 + $0x20] sm:$0xff]
  %v51 = vld [vmem:[%s1 + $0x28] sm:$0xff]
  %v52 = vld [vmem:[%s1 + $0x30] sm:$0xff]
  %v53 = vld [vmem:[%s1 + $0x38] sm:$0xff]
  %v54 = vld [vmem:[%s1 + $0x40] sm:$0xff]
  %v55 = vld [vmem:[%s1 + $0x48] sm:$0xff]
  %v56 = vld [vmem:[%s1 + $0x50] sm:$0xff]
  %v57 = vld [vmem:[%s1 + $0x58] sm:$0xff]
  %v58 = vld [vmem:[%s1 + $0x60] sm:$0xff]
  %v59 = vld [vmem:[%s1 + $0x68] sm:$0xff]
  %v60 = vld [vmem:[%s1 + $0x70] sm:$0xff]
  %v61 = vld [vmem:[%s1 + $0x78] sm:$0xff]
  %v62 = vld [vmem:[%s1 + $0x80] sm:$0xff]
  %v63 = vld [vmem:[%s1 + $0x88] sm:$0xff]
  %v64 = vld [vmem:[%s1 + $0x90] sm:$0xff]
  %v65 = vld [vmem:[%s1 + $0x98] sm:$0xff]
  %v66 = vld [vmem:[%s1 + $0xa0] sm:$0xff]
  %v67 = vld [vmem:[%s1 + $0xa8] sm:$0xff]
  %v68 = vld [vmem:[%s1 + $0xb0] sm:$0xff]
  %v69 = vld [vmem:[%s1 + $0xb8] sm:$0xff]
  %v70 = vld [vmem:[%s1 + $0xc0] sm:$0xff]
  %v71 = vld [vmem:[%s1 + $0xc8] sm:$0xff]
  %v72 = vld [vmem:[%s1 + $0xd0] sm:$0xff]
  %v73 = vld [vmem:[%s1 + $0xd8] sm:$0xff]
  %v74 = vld [vmem:[%s1 + $0xe0] sm:$0xff]
  %v75 = vld [vmem:[%s1 + $0xe8] sm:$0xff]
  %v76 = vld [vmem:[%s1 + $0xf0] sm:$0xff]
  %v77 = vld [vmem:[%s1 + $0xf8] sm:$0xff]
  %v78 = vld [vmem:[%s2] sm:$0x1]
  %v80 = vperm.slane %v78, 0
  %82 = vmatpush.msra.mxu0 %v61
  %83 = vmatpush.msra.mxu0 %v60
  %84 = vmatpush.msra.mxu0 %v59
  %85 = vmatpush.msra.mxu0 %v58
  %86 = vmatpush.msra.mxu0 %v57
  %87 = vmatpush.msra.mxu0 %v56
  %88 = vmatpush.msra.mxu0 %v55
  %89 = vmatpush.msra.mxu0 %v54
  %90 = vmatpush.msra.mxu0 %v53
  %91 = vmatpush.msra.mxu0 %v52
  %92 = vmatpush.msra.mxu0 %v51
  %93 = vmatpush.msra.mxu0 %v50
  %94 = vmatpush.msra.mxu0 %v49
  %95 = vmatpush.msra.mxu0 %v48
  %96 = vmatpush.msra.mxu0 %v47
  %97 = vmatpush.msra.mxu0 %v46
  %98 = vmatmul.f32.gmra.mxu0 %v14
  %v99 = vpop.f32.mrf.mxu0
  %v100 = vadd.f32 %v80, %v99
  %101 = vmatmul.f32.gmra.mxu0 %v16
  %v102 = vpop.f32.mrf.mxu0
  %v103 = vadd.f32 %v80, %v102
  %104 = vmatmul.f32.gmra.mxu0 %v18
  %v105 = vpop.f32.mrf.mxu0
  %v106 = vadd.f32 %v80, %v105
  %107 = vmatmul.f32.gmra.mxu0 %v20
  %v108 = vpop.f32.mrf.mxu0
  %v109 = vadd.f32 %v80, %v108
  %110 = vmatmul.f32.gmra.mxu0 %v22
  %v111 = vpop.f32.mrf.mxu0
  %v112 = vadd.f32 %v80, %v111
  %113 = vmatmul.f32.gmra.mxu0 %v24
  %v114 = vpop.f32.mrf.mxu0
  %v115 = vadd.f32 %v80, %v114
  %116 = vmatmul.f32.gmra.mxu0 %v26
  %v117 = vpop.f32.mrf.mxu0
  %v118 = vadd.f32 %v80, %v117
  %119 = vmatmul.f32.gmra.mxu0 %v28
  %v120 = vpop.f32.mrf.mxu0
  %v121 = vadd.f32 %v80, %v120
  %122 = vmatmul.f32.gmra.mxu0 %v30
  %v123 = vpop.f32.mrf.mxu0
  %v124 = vadd.f32 %v80, %v123
  %125 = vmatmul.f32.gmra.mxu0 %v32
  %v126 = vpop.f32.mrf.mxu0
  %v127 = vadd.f32 %v80, %v126
  %128 = vmatmul.f32.gmra.mxu0 %v34
  %v129 = vpop.f32.mrf.mxu0
  %v130 = vadd.f32 %v80, %v129
  %131 = vmatmul.f32.gmra.mxu0 %v36
  %v132 = vpop.f32.mrf.mxu0
  %v133 = vadd.f32 %v80, %v132
  %134 = vmatmul.f32.gmra.mxu0 %v38
  %v135 = vpop.f32.mrf.mxu0
  %v136 = vadd.f32 %v80, %v135
  %137 = vmatmul.f32.gmra.mxu0 %v40
  %v138 = vpop.f32.mrf.mxu0
  %v139 = vadd.f32 %v80, %v138
  %140 = vmatmul.f32.gmra.mxu0 %v42
  %v141 = vpop.f32.mrf.mxu0
  %v142 = vadd.f32 %v80, %v141
  %143 = vmatmul.f32.gmra.mxu0 %v44
  %v144 = vpop.f32.mrf.mxu0
  %v145 = vadd.f32 %v80, %v144
  %146 = vdwg.mxu0
  %147 = vmatpush.msra.mxu0 %v77
  %148 = vmatpush.msra.mxu0 %v76
  %149 = vmatpush.msra.mxu0 %v75
  %150 = vmatpush.msra.mxu0 %v74
  %151 = vmatpush.msra.mxu0 %v73
  %152 = vmatpush.msra.mxu0 %v72
  %153 = vmatpush.msra.mxu0 %v71
  %154 = vmatpush.msra.mxu0 %v70
  %155 = vmatpush.msra.mxu0 %v69
  %156 = vmatpush.msra.mxu0 %v68
  %157 = vmatpush.msra.mxu0 %v67
  %158 = vmatpush.msra.mxu0 %v66
  %159 = vmatpush.msra.mxu0 %v65
  %160 = vmatpush.msra.mxu0 %v64
  %161 = vmatpush.msra.mxu0 %v63
  %162 = vmatpush.msra.mxu0 %v62
  %163 = vmatmul.f32.gmra.mxu0 %v15
  %v164 = vpop.f32.mrf.mxu0
  %v165 = vadd.f32 %v100, %v164
  %166 = vmatmul.f32.gmra.mxu0 %v17
  %v167 = vpop.f32.mrf.mxu0
  %v168 = vadd.f32 %v103, %v167
  %169 = vmatmul.f32.gmra.mxu0 %v19
  %v170 = vpop.f32.mrf.mxu0
  %v171 = vadd.f32 %v106, %v170
  %172 = vmatmul.f32.gmra.mxu0 %v21
  %v173 = vpop.f32.mrf.mxu0
  %v174 = vadd.f32 %v109, %v173
  %175 = vmatmul.f32.gmra.mxu0 %v23
  %v176 = vpop.f32.mrf.mxu0
  %v177 = vadd.f32 %v112, %v176
  %178 = vmatmul.f32.gmra.mxu0 %v25
  %v179 = vpop.f32.mrf.mxu0
  %v180 = vadd.f32 %v115, %v179
  %181 = vmatmul.f32.gmra.mxu0 %v27
  %v182 = vpop.f32.mrf.mxu0
  %v183 = vadd.f32 %v118, %v182
  %184 = vmatmul.f32.gmra.mxu0 %v29
  %v185 = vpop.f32.mrf.mxu0
  %v186 = vadd.f32 %v121, %v185
  %187 = vmatmul.f32.gmra.mxu0 %v31
  %v188 = vpop.f32.mrf.mxu0
  %v189 = vadd.f32 %v124, %v188
  %190 = vmatmul.f32.gmra.mxu0 %v33
  %v191 = vpop.f32.mrf.mxu0
  %v192 = vadd.f32 %v127, %v191
  %193 = vmatmul.f32.gmra.mxu0 %v35
  %v194 = vpop.f32.mrf.mxu0
  %v195 = vadd.f32 %v130, %v194
  %196 = vmatmul.f32.gmra.mxu0 %v37
  %v197 = vpop.f32.mrf.mxu0
  %v198 = vadd.f32 %v133, %v197
  %199 = vmatmul.f32.gmra.mxu0 %v39
  %v200 = vpop.f32.mrf.mxu0
  %v201 = vadd.f32 %v136, %v200
  %202 = vmatmul.f32.gmra.mxu0 %v41
  %v203 = vpop.f32.mrf.mxu0
  %v204 = vadd.f32 %v139, %v203
  %205 = vmatmul.f32.gmra.mxu0 %v43
  %v206 = vpop.f32.mrf.mxu0
  %v207 = vadd.f32 %v142, %v206
  %208 = vmatmul.f32.gmra.mxu0 %v45
  %v209 = vpop.f32.mrf.mxu0
  %v210 = vadd.f32 %v145, %v209
  %211 = vdwg.mxu0
  %v212 = vmax.f32 %v165, 0.0
  %v213 = vmax.f32 %v168, 0.0
  %v214 = vmax.f32 %v171, 0.0
  %v215 = vmax.f32 %v174, 0.0
  %v216 = vmax.f32 %v177, 0.0
  %v217 = vmax.f32 %v180, 0.0
  %v218 = vmax.f32 %v183, 0.0
  %v219 = vmax.f32 %v186, 0.0
  %v220 = vmax.f32 %v189, 0.0
  %v221 = vmax.f32 %v192, 0.0
  %v222 = vmax.f32 %v195, 0.0
  %v223 = vmax.f32 %v198, 0.0
  %v224 = vmax.f32 %v201, 0.0
  %v225 = vmax.f32 %v204, 0.0
  %v226 = vmax.f32 %v207, 0.0
  %v227 = vmax.f32 %v210, 0.0
  %vm228 = vcmask 261120
  %229 = vst.msk [vmem:[%s3] sm:$0xff] %vm228, %v212
  %230 = vst.msk [vmem:[%s3 + $0x8] sm:$0xff] %vm228, %v213
  %231 = vst.msk [vmem:[%s3 + $0x10] sm:$0xff] %vm228, %v214
  %232 = vst.msk [vmem:[%s3 + $0x18] sm:$0xff] %vm228, %v215
  %233 = vst.msk [vmem:[%s3 + $0x20] sm:$0xff] %vm228, %v216
  %234 = vst.msk [vmem:[%s3 + $0x28] sm:$0xff] %vm228, %v217
  %235 = vst.msk [vmem:[%s3 + $0x30] sm:$0xff] %vm228, %v218
  %236 = vst.msk [vmem:[%s3 + $0x38] sm:$0xff] %vm228, %v219
  %237 = vst.msk [vmem:[%s3 + $0x40] sm:$0xff] %vm228, %v220
  %238 = vst.msk [vmem:[%s3 + $0x48] sm:$0xff] %vm228, %v221
  %239 = vst.msk [vmem:[%s3 + $0x50] sm:$0xff] %vm228, %v222
  %240 = vst.msk [vmem:[%s3 + $0x58] sm:$0xff] %vm228, %v223
  %241 = vst.msk [vmem:[%s3 + $0x60] sm:$0xff] %vm228, %v224
  %242 = vst.msk [vmem:[%s3 + $0x68] sm:$0xff] %vm228, %v225
  %243 = vst.msk [vmem:[%s3 + $0x70] sm:$0xff] %vm228, %v226
  %244 = vst.msk [vmem:[%s3 + $0x78] sm:$0xff] %vm228, %v227
  // Predicated region
  $region14: #{quant_policy_forward.2} parent=0 // pred_check
    _
  $region15: #{quant_policy_forward.2} parent=0 // pred_check_branch
    %246 = sbr.rel (0) target = $region17
  $region16: #{quant_policy_forward.2} parent=0 // pred_region
    _
  $region17: #{quant_policy_forward.2} parent=0 // pred_fallthru
    _
  // Predicated region
  $region18: #{quant_policy_forward.2} parent=0 // pred_check
    _
  $region19: #{quant_policy_forward.2} parent=0 // pred_check_branch
    %248 = sbr.rel (0) target = $region21
  $region20: #{quant_policy_forward.2} parent=0 // pred_region
    _
  $region21: #{quant_policy_forward.2} parent=0 // pred_fallthru
    _

// kernel: quant_policy_forward.3
$region0: #{quant_policy_forward.3}
  #allocation0 [shape = 'u32[]', space=smem, size = 0x4, offset = 0x4, fixed_abs, tag = 'smem constant byte address 0x4 - core index']
  #allocation1 [shape = 'u32[72,128]{1,0:T(1,128)}', space=vmem, size = 0x9000, scoped, tag = 'internal scratch']
  %s0 = inlined_call_operand.vmem [shape: f32[2,8,256], index: 0, kind: input, shape index: {}]
  %s1 = inlined_call_operand.vmem [shape: f32[512,64], index: 1, kind: input, shape index: {}]
  %s2 = inlined_call_operand.vmem [shape: f32[1,64], index: 2, kind: input, shape index: {}]
  %s3 = inlined_call_operand.vmem [shape: f32[576,64], index: 3, kind: input, shape index: {}]
  %s4 = inlined_call_operand.vmem [shape: f32[1,64], index: 4, kind: input, shape index: {}]
  %s5 = inlined_call_operand.vmem [shape: f32[64,256], index: 5, kind: input, shape index: {}]
  %s6 = inlined_call_operand.vmem [shape: f32[1,256], index: 6, kind: input, shape index: {}]
  %s7 = inlined_call_operand.vmem [shape: f32[256,448], index: 7, kind: input, shape index: {}]
  %s8 = inlined_call_operand.vmem [shape: f32[1,448], index: 8, kind: input, shape index: {}]
  %s9 = inlined_call_operand.vmem [shape: f32[448,960], index: 9, kind: input, shape index: {}]
  %s10 = inlined_call_operand.vmem [shape: f32[1,960], index: 10, kind: input, shape index: {}]
  %s11 = inlined_call_operand.vmem [shape: f32[448,2], index: 11, kind: input, shape index: {}]
  %s12 = inlined_call_operand.vmem [shape: f32[1,2], index: 12, kind: input, shape index: {}]
  %s13 = inlined_call_operand.vmem [shape: f32[448,6], index: 13, kind: input, shape index: {}]
  %s14 = inlined_call_operand.vmem [shape: f32[1,6], index: 14, kind: input, shape index: {}]
  %s15 = inlined_call_operand.vmem [shape: f32[2,2], index: 15, kind: output, shape index: {0}]
  %s16 = inlined_call_operand.hbm [shape: f32[2,6], index: 16, kind: output, shape index: {1}]
  %17 = xla_tuple %s15, %s16
  %s18 = sld [smem:[#allocation0]]
  $region78: #{quant_policy_forward.3} parent=0
    _
  %s20 = ssub.s32 1, %s18
  %s21 = scalar_select 0, %s20, %s18
  $region1: #{quant_policy_forward.3} parent=0
    #allocation2 [shape = 'u8[1024]{0}', space=vmem, size = 0x400, scoped, tag = 'output window, operand 1, single buffered']
    #allocation3 [shape = 's32[1]{0}', space=sflag, size = 0x4, scoped, tag = 'scoped memory for quant_policy_forward.3']
    %22 = vsyncpa [#allocation3], 0
    // Predicated region
    $region2: #{quant_policy_forward.3} parent=1 // pred_check
      _
    $region3: #{quant_policy_forward.3} parent=1 // pred_check_branch
      %24 = sbr.rel (0) target = $region5
    $region4: #{quant_policy_forward.3} parent=1 // pred_region
      _
    $region5: #{quant_policy_forward.3} parent=1 // pred_fallthru
      _
    // Predicated region
    $region6: #{quant_policy_forward.3} parent=1 // pred_check
      _
    $region7: #{quant_policy_forward.3} parent=1 // pred_check_branch
      %26 = sbr.rel (0) target = $region9
    $region8: #{quant_policy_forward.3} parent=1 // pred_region
      _
    $region9: #{quant_policy_forward.3} parent=1 // pred_fallthru
      _
    // Predicated region
    $region10: #{quant_policy_forward.3} parent=1 // pred_check
      _
    $region11: #{quant_policy_forward.3} parent=1 // pred_check_branch
      %28 = sbr.rel (0) target = $region13
    $region12: #{quant_policy_forward.3} parent=1 // pred_region
      _
    $region13: #{quant_policy_forward.3} parent=1 // pred_fallthru
      _
    // Predicated region
    $region14: #{quant_policy_forward.3} parent=1 // pred_check
      _
    $region15: #{quant_policy_forward.3} parent=1 // pred_check_branch
      %30 = sbr.rel (0) target = $region17
    $region16: #{quant_policy_forward.3} parent=1 // pred_region
      _
    $region17: #{quant_policy_forward.3} parent=1 // pred_fallthru
      _
    // Predicated region
    $region18: #{quant_policy_forward.3} parent=1 // pred_check
      _
    $region19: #{quant_policy_forward.3} parent=1 // pred_check_branch
      %32 = sbr.rel (0) target = $region21
    $region20: #{quant_policy_forward.3} parent=1 // pred_region
      _
    $region21: #{quant_policy_forward.3} parent=1 // pred_fallthru
      _
    // Predicated region
    $region22: #{quant_policy_forward.3} parent=1 // pred_check
      _
    $region23: #{quant_policy_forward.3} parent=1 // pred_check_branch
      %34 = sbr.rel (0) target = $region25
    $region24: #{quant_policy_forward.3} parent=1 // pred_region
      _
    $region25: #{quant_policy_forward.3} parent=1 // pred_fallthru
      _
    // Predicated region
    $region26: #{quant_policy_forward.3} parent=1 // pred_check
      _
    $region27: #{quant_policy_forward.3} parent=1 // pred_check_branch
      %36 = sbr.rel (0) target = $region29
    $region28: #{quant_policy_forward.3} parent=1 // pred_region
      _
    $region29: #{quant_policy_forward.3} parent=1 // pred_fallthru
      _
    // Predicated region
    $region30: #{quant_policy_forward.3} parent=1 // pred_check
      _
    $region31: #{quant_policy_forward.3} parent=1 // pred_check_branch
      %38 = sbr.rel (0) target = $region33
    $region32: #{quant_policy_forward.3} parent=1 // pred_region
      _
    $region33: #{quant_policy_forward.3} parent=1 // pred_fallthru
      _
    // Predicated region
    $region34: #{quant_policy_forward.3} parent=1 // pred_check
      _
    $region35: #{quant_policy_forward.3} parent=1 // pred_check_branch
      %40 = sbr.rel (0) target = $region37
    $region36: #{quant_policy_forward.3} parent=1 // pred_region
      _
    $region37: #{quant_policy_forward.3} parent=1 // pred_fallthru
      _
    // Predicated region
    $region38: #{quant_policy_forward.3} parent=1 // pred_check
      _
    $region39: #{quant_policy_forward.3} parent=1 // pred_check_branch
      %42 = sbr.rel (0) target = $region41
    $region40: #{quant_policy_forward.3} parent=1 // pred_region
      _
    $region41: #{quant_policy_forward.3} parent=1 // pred_fallthru
      _
    // Predicated region
    $region42: #{quant_policy_forward.3} parent=1 // pred_check
      _
    $region43: #{quant_policy_forward.3} parent=1 // pred_check_branch
      %44 = sbr.rel (0) target = $region45
    $region44: #{quant_policy_forward.3} parent=1 // pred_region
      _
    $region45: #{quant_policy_forward.3} parent=1 // pred_fallthru
      _
    // Predicated region
    $region46: #{quant_policy_forward.3} parent=1 // pred_check
      _
    $region47: #{quant_policy_forward.3} parent=1 // pred_check_branch
      %46 = sbr.rel (0) target = $region49
    $region48: #{quant_policy_forward.3} parent=1 // pred_region
      _
    $region49: #{quant_policy_forward.3} parent=1 // pred_fallthru
      _
    // Predicated region
    $region50: #{quant_policy_forward.3} parent=1 // pred_check
      _
    $region51: #{quant_policy_forward.3} parent=1 // pred_check_branch
      %48 = sbr.rel (0) target = $region53
    $region52: #{quant_policy_forward.3} parent=1 // pred_region
      _
    $region53: #{quant_policy_forward.3} parent=1 // pred_fallthru
      _
    // Predicated region
    $region54: #{quant_policy_forward.3} parent=1 // pred_check
      _
    $region55: #{quant_policy_forward.3} parent=1 // pred_check_branch
      %50 = sbr.rel (0) target = $region57
    $region56: #{quant_policy_forward.3} parent=1 // pred_region
      _
    $region57: #{quant_policy_forward.3} parent=1 // pred_fallthru
      _
    // Predicated region
    $region58: #{quant_policy_forward.3} parent=1 // pred_check
      _
    $region59: #{quant_policy_forward.3} parent=1 // pred_check_branch
      %52 = sbr.rel (0) target = $region61
    $region60: #{quant_policy_forward.3} parent=1 // pred_region
      _
    $region61: #{quant_policy_forward.3} parent=1 // pred_fallthru
      _
    %v53 = vld [vmem:[%s0] sm:$0xff]
    %v54 = vld [vmem:[%s0 + $0x8] sm:$0xff]
    %v55 = vld [vmem:[%s0 + $0x10] sm:$0xff]
    %v56 = vld [vmem:[%s0 + $0x18] sm:$0xff]
    %v57 = vld [vmem:[%s1] sm:$0xff]
    %v58 = vld [vmem:[%s1 + $0x8] sm:$0xff]
    %v59 = vld [vmem:[%s1 + $0x10] sm:$0xff]
    %v60 = vld [vmem:[%s1 + $0x18] sm:$0xff]
    %v61 = vld [vmem:[%s1 + $0x20] sm:$0xff]
    %v62 = vld [vmem:[%s1 + $0x28] sm:$0xff]
    %v63 = vld [vmem:[%s1 + $0x30] sm:$0xff]
    %v64 = vld [vmem:[%s1 + $0x38] sm:$0xff]
    %v65 = vld [vmem:[%s1 + $0x40] sm:$0xff]
    %v66 = vld [vmem:[%s1 + $0x48] sm:$0xff]
    %v67 = vld [vmem:[%s1 + $0x50] sm:$0xff]
    %v68 = vld [vmem:[%s1 + $0x58] sm:$0xff]
    %v69 = vld [vmem:[%s1 + $0x60] sm:$0xff]
    %v70 = vld [vmem:[%s1 + $0x68] sm:$0xff]
    %v71 = vld [vmem:[%s1 + $0x70] sm:$0xff]
    %v72 = vld [vmem:[%s1 + $0x78] sm:$0xff]
    %v73 = vld [vmem:[%s1 + $0x80] sm:$0xff]
    %v74 = vld [vmem:[%s1 + $0x88] sm:$0xff]
    %v75 = vld [vmem:[%s1 + $0x90] sm:$0xff]
    %v76 = vld [vmem:[%s1 + $0x98] sm:$0xff]
    %v77 = vld [vmem:[%s1 + $0xa0] sm:$0xff]
    %v78 = vld [vmem:[%s1 + $0xa8] sm:$0xff]
    %v79 = vld [vmem:[%s1 + $0xb0] sm:$0xff]
    %v80 = vld [vmem:[%s1 + $0xb8] sm:$0xff]
    %v81 = vld [vmem:[%s1 + $0xc0] sm:$0xff]
    %v82 = vld [vmem:[%s1 + $0xc8] sm:$0xff]
    %v83 = vld [vmem:[%s1 + $0xd0] sm:$0xff]
    %v84 = vld [vmem:[%s1 + $0xd8] sm:$0xff]
    %v85 = vld [vmem:[%s1 + $0xe0] sm:$0xff]
    %v86 = vld [vmem:[%s1 + $0xe8] sm:$0xff]
    %v87 = vld [vmem:[%s1 + $0xf0] sm:$0xff]
    %v88 = vld [vmem:[%s1 + $0xf8] sm:$0xff]
    %v89 = vld [vmem:[%s1 + $0x100] sm:$0xff]
    %v90 = vld [vmem:[%s1 + $0x108] sm:$0xff]
    %v91 = vld [vmem:[%s1 + $0x110] sm:$0xff]
    %v92 = vld [vmem:[%s1 + $0x118] sm:$0xff]
    %v93 = vld [vmem:[%s1 + $0x120] sm:$0xff]
    %v94 = vld [vmem:[%s1 + $0x128] sm:$0xff]
    %v95 = vld [vmem:[%s1 + $0x130] sm:$0xff]
    %v96 = vld [vmem:[%s1 + $0x138] sm:$0xff]
    %v97 = vld [vmem:[%s1 + $0x140] sm:$0xff]
    %v98 = vld [vmem:[%s1 + $0x148] sm:$0xff]
    %v99 = vld [vmem:[%s1 + $0x150] sm:$0xff]
    %v100 = vld [vmem:[%s1 + $0x158] sm:$0xff]
    %v101 = vld [vmem:[%s1 + $0x160] sm:$0xff]
    %v102 = vld [vmem:[%s1 + $0x168] sm:$0xff]
    %v103 = vld [vmem:[%s1 + $0x170] sm:$0xff]
    %v104 = vld [vmem:[%s1 + $0x178] sm:$0xff]
    %v105 = vld [vmem:[%s1 + $0x180] sm:$0xff]
    %v106 = vld [vmem:[%s1 + $0x188] sm:$0xff]
    %v107 = vld [vmem:[%s1 + $0x190] sm:$0xff]
    %v108 = vld [vmem:[%s1 + $0x198] sm:$0xff]
    %v109 = vld [vmem:[%s1 + $0x1a0] sm:$0xff]
    %v110 = vld [vmem:[%s1 + $0x1a8] sm:$0xff]
    %v111 = vld [vmem:[%s1 + $0x1b0] sm:$0xff]
    %v112 = vld [vmem:[%s1 + $0x1b8] sm:$0xff]
    %v113 = vld [vmem:[%s1 + $0x1c0] sm:$0xff]
    %v114 = vld [vmem:[%s1 + $0x1c8] sm:$0xff]
    %v115 = vld [vmem:[%s1 + $0x1d0] sm:$0xff]
    %v116 = vld [vmem:[%s1 + $0x1d8] sm:$0xff]
    %v117 = vld [vmem:[%s1 + $0x1e0] sm:$0xff]
    %v118 = vld [vmem:[%s1 + $0x1e8] sm:$0xff]
    %v119 = vld [vmem:[%s1 + $0x1f0] sm:$0xff]
    %v120 = vld [vmem:[%s1 + $0x1f8] sm:$0xff]
    %v121 = vld [vmem:[%s2] sm:$0x1]
    %v124 = vrot.slane %v55, 7
    %vm125 = vcmask 1041409
    %v126 = vsel %vm125, %v124, %v53
    %128 = vmatpush.msra.mxu0 %v72
    %129 = vmatpush.msra.mxu0 %v71
    %130 = vmatpush.msra.mxu0 %v70
    %131 = vmatpush.msra.mxu0 %v69
    %132 = vmatpush.msra.mxu0 %v68
    %133 = vmatpush.msra.mxu0 %v67
    %134 = vmatpush.msra.mxu0 %v66
    %135 = vmatpush.msra.mxu0 %v65
    %136 = vmatpush.msra.mxu0 %v64
    %137 = vmatpush.msra.mxu0 %v63
    %138 = vmatpush.msra.mxu0 %v62
    %139 = vmatpush.msra.mxu0 %v61
    %140 = vmatpush.msra.mxu0 %v60
    %141 = vmatpush.msra.mxu0 %v59
    %142 = vmatpush.msra.mxu0 %v58
    %143 = vmatpush.msra.mxu0 %v57
    %144 = vmatmul.f32.gmra.mxu0 %v126
    %v145 = vpop.f32.mrf.mxu0
    %v146 = vadd.f32 0.0, %v145
    %147 = vdwg.mxu0
    %v149 = vperm.slane %v121, 0
    %v151 = vadd.f32 %v149, %v146
    %v152 = vrot.slane %v53, 1
    %v153 = vsel %vm125, %v55, %v152
    %155 = vmatpush.msra.mxu0 %v88
    %156 = vmatpush.msra.mxu0 %v87
    %157 = vmatpush.msra.mxu0 %v86
    %158 = vmatpush.msra.mxu0 %v85
    %159 = vmatpush.msra.mxu0 %v84
    %160 = vmatpush.msra.mxu0 %v83
    %161 = vmatpush.msra.mxu0 %v82
    %162 = vmatpush.msra.mxu0 %v81
    %163 = vmatpush.msra.mxu0 %v80
    %164 = vmatpush.msra.mxu0 %v79
    %165 = vmatpush.msra.mxu0 %v78
    %166 = vmatpush.msra.mxu0 %v77
    %167 = vmatpush.msra.mxu0 %v76
    %168 = vmatpush.msra.mxu0 %v75
    %169 = vmatpush.msra.mxu0 %v74
    %170 = vmatpush.msra.mxu0 %v73
    %171 = vmatmul.f32.gmra.mxu0 %v153
    %v172 = vpop.f32.mrf.mxu0
    %v173 = vadd.f32 0.0, %v172
    %174 = vdwg.mxu0
    %v175 = vadd.f32 %v151, %v173
    %v176 = vrot.slane %v53, 2
    %v177 = vrot.slane %v55, 1
    %v178 = vsel %vm125, %v177, %v176
    %180 = vmatpush.msra.mxu0 %v104
    %181 = vmatpush.msra.mxu0 %v103
    %182 = vmatpush.msra.mxu0 %v102
    %183 = vmatpush.msra.mxu0 %v101
    %184 = vmatpush.msra.mxu0 %v100
    %185 = vmatpush.msra.mxu0 %v99
    %186 = vmatpush.msra.mxu0 %v98
    %187 = vmatpush.msra.mxu0 %v97
    %188 = vmatpush.msra.mxu0 %v96
    %189 = vmatpush.msra.mxu0 %v95
    %190 = vmatpush.msra.mxu0 %v94
    %191 = vmatpush.msra.mxu0 %v93
    %192 = vmatpush.msra.mxu0 %v92
    %193 = vmatpush.msra.mxu0 %v91
    %194 = vmatpush.msra.mxu0 %v90
    %195 = vmatpush.msra.mxu0 %v89
    %196 = vmatmul.f32.gmra.mxu0 %v178
    %v197 = vpop.f32.mrf.mxu0
    %v198 = vadd.f32 0.0, %v197
    %199 = vdwg.mxu0
    %v200 = vadd.f32 %v175, %v198
    %v201 = vrot.slane %v53, 3
    %v202 = vrot.slane %v55, 2
    %v203 = vsel %vm125, %v202, %v201
    %205 = vmatpush.msra.mxu0 %v120
    %206 = vmatpush.msra.mxu0 %v119
    %207 = vmatpush.msra.mxu0 %v118
    %208 = vmatpush.msra.mxu0 %v117
    %209 = vmatpush.msra.mxu0 %v116
    %210 = vmatpush.msra.mxu0 %v115
    %211 = vmatpush.msra.mxu0 %v114
    %212 = vmatpush.msra.mxu0 %v113
    %213 = vmatpush.msra.mxu0 %v112
    %214 = vmatpush.msra.mxu0 %v111
    %215 = vmatpush.msra.mxu0 %v110
    %216 = vmatpush.msra.mxu0 %v109
    %217 = vmatpush.msra.mxu0 %v108
    %218 = vmatpush.msra.mxu0 %v107
    %219 = vmatpush.msra.mxu0 %v106
    %220 = vmatpush.msra.mxu0 %v105
    %221 = vmatmul.f32.gmra.mxu0 %v203
    %v222 = vpop.f32.mrf.mxu0
    %v223 = vadd.f32 0.0, %v222
    %224 = vdwg.mxu0
    %v225 = vadd.f32 %v200, %v223
    %v226 = vmax.f32 %v225, 0.0
    %v229 = vrot.slane %v56, 7
    %v230 = vsel %vm125, %v229, %v54
    %231 = vrot.lane.b32.xlu0 %v126, 64
    %v232 = vpop.permute.xlu0 %231
    %233 = vrot.lane.b32.xlu0 %v230, 64
    %v234 = vpop.permute.xlu0 %233
    %vm235 = vcmask 523264
    %v236 = vsel %vm235, %v232, %v234
    %238 = vmatpush.msra.mxu0 %v72
    %239 = vmatpush.msra.mxu0 %v71
    %240 = vmatpush.msra.mxu0 %v70
    %241 = vmatpush.msra.mxu0 %v69
    %242 = vmatpush.msra.mxu0 %v68
    %243 = vmatpush.msra.mxu0 %v67
    %244 = vmatpush.msra.mxu0 %v66
    %245 = vmatpush.msra.mxu0 %v65
    %246 = vmatpush.msra.mxu0 %v64
    %247 = vmatpush.msra.mxu0 %v63
    %248 = vmatpush.msra.mxu0 %v62
    %249 = vmatpush.msra.mxu0 %v61
    %250 = vmatpush.msra.mxu0 %v60
    %251 = vmatpush.msra.mxu0 %v59
    %252 = vmatpush.msra.mxu0 %v58
    %253 = vmatpush.msra.mxu0 %v57
    %254 = vmatmul.f32.gmra.mxu0 %v236
    %v255 = vpop.f32.mrf.mxu0
    %v256 = vadd.f32 0.0, %v255
    %257 = vdwg.mxu0
    %v258 = vadd.f32 %v149, %v256
    %v259 = vrot.slane %v54, 1
    %v260 = vsel %vm125, %v56, %v259
    %261 = vrot.lane.b32.xlu0 %v153, 64
    %v262 = vpop.permute.xlu0 %261
    %263 = vrot.lane.b32.xlu0 %v260, 64
    %v264 = vpop.permute.xlu0 %263
    %v265 = vsel %vm235, %v262, %v264
    %267 = vmatpush.msra.mxu0 %v88
    %268 = vmatpush.msra.mxu0 %v87
    %269 = vmatpush.msra.mxu0 %v86
    %270 = vmatpush.msra.mxu0 %v85
    %271 = vmatpush.msra.mxu0 %v84
    %272 = vmatpush.msra.mxu0 %v83
    %273 = vmatpush.msra.mxu0 %v82
    %274 = vmatpush.msra.mxu0 %v81
    %275 = vmatpush.msra.mxu0 %v80
    %276 = vmatpush.msra.mxu0 %v79
    %277 = vmatpush.msra.mxu0 %v78
    %278 = vmatpush.msra.mxu0 %v77
    %279 = vmatpush.msra.mxu0 %v76
    %280 = vmatpush.msra.mxu0 %v75
    %281 = vmatpush.msra.mxu0 %v74
    %282 = vmatpush.msra.mxu0 %v73
    %283 = vmatmul.f32.gmra.mxu0 %v265
    %v284 = vpop.f32.mrf.mxu0
    %v285 = vadd.f32 0.0, %v284
    %286 = vdwg.mxu0
    %v287 = vadd.f32 %v258, %v285
    %v288 = vrot.slane %v54, 2
    %v289 = vrot.slane %v56, 1
    %v290 = vsel %vm125, %v289, %v288
    %291 = vrot.lane.b32.xlu0 %v178, 64
    %v292 = vpop.permute.xlu0 %291
    %293 = vrot.lane.b32.xlu0 %v290, 64
    %v294 = vpop.permute.xlu0 %293
    %v295 = vsel %vm235, %v292, %v294
    %297 = vmatpush.msra.mxu0 %v104
    %298 = vmatpush.msra.mxu0 %v103
    %299 = vmatpush.msra.mxu0 %v102
    %300 = vmatpush.msra.mxu0 %v101
    %301 = vmatpush.msra.mxu0 %v100
    %302 = vmatpush.msra.mxu0 %v99
    %303 = vmatpush.msra.mxu0 %v98
    %304 = vmatpush.msra.mxu0 %v97
    %305 = vmatpush.msra.mxu0 %v96
    %306 = vmatpush.msra.mxu0 %v95
    %307 = vmatpush.msra.mxu0 %v94
    %308 = vmatpush.msra.mxu0 %v93
    %309 = vmatpush.msra.mxu0 %v92
    %310 = vmatpush.msra.mxu0 %v91
    %311 = vmatpush.msra.mxu0 %v90
    %312 = vmatpush.msra.mxu0 %v89
    %313 = vmatmul.f32.gmra.mxu0 %v295
    %v314 = vpop.f32.mrf.mxu0
    %v315 = vadd.f32 0.0, %v314
    %316 = vdwg.mxu0
    %v317 = vadd.f32 %v287, %v315
    %v318 = vrot.slane %v54, 3
    %v319 = vrot.slane %v56, 2
    %v320 = vsel %vm125, %v319, %v318
    %321 = vrot.lane.b32.xlu0 %v203, 64
    %v322 = vpop.permute.xlu0 %321
    %323 = vrot.lane.b32.xlu0 %v320, 64
    %v324 = vpop.permute.xlu0 %323
    %v325 = vsel %vm235, %v322, %v324
    %327 = vmatpush.msra.mxu0 %v120
    %328 = vmatpush.msra.mxu0 %v119
    %329 = vmatpush.msra.mxu0 %v118
    %330 = vmatpush.msra.mxu0 %v117
    %331 = vmatpush.msra.mxu0 %v116
    %332 = vmatpush.msra.mxu0 %v115
    %333 = vmatpush.msra.mxu0 %v114
    %334 = vmatpush.msra.mxu0 %v113
    %335 = vmatpush.msra.mxu0 %v112
    %336 = vmatpush.msra.mxu0 %v111
    %337 = vmatpush.msra.mxu0 %v110
    %338 = vmatpush.msra.mxu0 %v109
    %339 = vmatpush.msra.mxu0 %v108
    %340 = vmatpush.msra.mxu0 %v107
    %341 = vmatpush.msra.mxu0 %v106
    %342 = vmatpush.msra.mxu0 %v105
    %343 = vmatmul.f32.gmra.mxu0 %v325
    %v344 = vpop.f32.mrf.mxu0
    %v345 = vadd.f32 0.0, %v344
    %346 = vdwg.mxu0
    %v347 = vadd.f32 %v317, %v345
    %v348 = vmax.f32 %v347, 0.0
    %350 = vmatpush.msra.mxu0 %v72
    %351 = vmatpush.msra.mxu0 %v71
    %352 = vmatpush.msra.mxu0 %v70
    %353 = vmatpush.msra.mxu0 %v69
    %354 = vmatpush.msra.mxu0 %v68
    %355 = vmatpush.msra.mxu0 %v67
    %356 = vmatpush.msra.mxu0 %v66
    %357 = vmatpush.msra.mxu0 %v65
    %358 = vmatpush.msra.mxu0 %v64
    %359 = vmatpush.msra.mxu0 %v63
    %360 = vmatpush.msra.mxu0 %v62
    %361 = vmatpush.msra.mxu0 %v61
    %362 = vmatpush.msra.mxu0 %v60
    %363 = vmatpush.msra.mxu0 %v59
    %364 = vmatpush.msra.mxu0 %v58
    %365 = vmatpush.msra.mxu0 %v57
    %366 = vmatmul.f32.gmra.mxu0 %v230
    %v367 = vpop.f32.mrf.mxu0
    %v368 = vadd.f32 0.0, %v367
    %369 = vdwg.mxu0
    %v370 = vadd.f32 %v149, %v368
    %372 = vmatpush.msra.mxu0 %v88
    %373 = vmatpush.msra.mxu0 %v87
    %374 = vmatpush.msra.mxu0 %v86
    %375 = vmatpush.msra.mxu0 %v85
    %376 = vmatpush.msra.mxu0 %v84
    %377 = vmatpush.msra.mxu0 %v83
    %378 = vmatpush.msra.mxu0 %v82
    %379 = vmatpush.msra.mxu0 %v81
    %380 = vmatpush.msra.mxu0 %v80
    %381 = vmatpush.msra.mxu0 %v79
    %382 = vmatpush.msra.mxu0 %v78
    %383 = vmatpush.msra.mxu0 %v77
    %384 = vmatpush.msra.mxu0 %v76
    %385 = vmatpush.msra.mxu0 %v75
    %386 = vmatpush.msra.mxu0 %v74
    %387 = vmatpush.msra.mxu0 %v73
    %388 = vmatmul.f32.gmra.mxu0 %v260
    %v389 = vpop.f32.mrf.mxu0
    %v390 = vadd.f32 0.0, %v389
    %391 = vdwg.mxu0
    %v392 = vadd.f32 %v370, %v390
    %394 = vmatpush.msra.mxu0 %v104
    %395 = vmatpush.msra.mxu0 %v103
    %396 = vmatpush.msra.mxu0 %v102
    %397 = vmatpush.msra.mxu0 %v101
    %398 = vmatpush.msra.mxu0 %v100
    %399 = vmatpush.msra.mxu0 %v99
    %400 = vmatpush.msra.mxu0 %v98
    %401 = vmatpush.msra.mxu0 %v97
    %402 = vmatpush.msra.mxu0 %v96
    %403 = vmatpush.msra.mxu0 %v95
    %404 = vmatpush.msra.mxu0 %v94
    %405 = vmatpush.msra.mxu0 %v93
    %406 = vmatpush.msra.mxu0 %v92
    %407 = vmatpush.msra.mxu0 %v91
    %408 = vmatpush.msra.mxu0 %v90
    %409 = vmatpush.msra.mxu0 %v89
    %410 = vmatmul.f32.gmra.mxu0 %v290
    %v411 = vpop.f32.mrf.mxu0
    %v412 = vadd.f32 0.0, %v411
    %413 = vdwg.mxu0
    %v414 = vadd.f32 %v392, %v412
    %416 = vmatpush.msra.mxu0 %v120
    %417 = vmatpush.msra.mxu0 %v119
    %418 = vmatpush.msra.mxu0 %v118
    %419 = vmatpush.msra.mxu0 %v117
    %420 = vmatpush.msra.mxu0 %v116
    %421 = vmatpush.msra.mxu0 %v115
    %422 = vmatpush.msra.mxu0 %v114
    %423 = vmatpush.msra.mxu0 %v113
    %424 = vmatpush.msra.mxu0 %v112
    %425 = vmatpush.msra.mxu0 %v111
    %426 = vmatpush.msra.mxu0 %v110
    %427 = vmatpush.msra.mxu0 %v109
    %428 = vmatpush.msra.mxu0 %v108
    %429 = vmatpush.msra.mxu0 %v107
    %430 = vmatpush.msra.mxu0 %v106
    %431 = vmatpush.msra.mxu0 %v105
    %432 = vmatmul.f32.gmra.mxu0 %v320
    %v433 = vpop.f32.mrf.mxu0
    %v434 = vadd.f32 0.0, %v433
    %435 = vdwg.mxu0
    %v436 = vadd.f32 %v414, %v434
    %v437 = vmax.f32 %v436, 0.0
    %438 = vmatpush.msra.mxu0 %v72
    %439 = vmatpush.msra.mxu0 %v71
    %440 = vmatpush.msra.mxu0 %v70
    %441 = vmatpush.msra.mxu0 %v69
    %442 = vmatpush.msra.mxu0 %v68
    %443 = vmatpush.msra.mxu0 %v67
    %444 = vmatpush.msra.mxu0 %v66
    %445 = vmatpush.msra.mxu0 %v65
    %446 = vmatpush.msra.mxu0 %v64
    %447 = vmatpush.msra.mxu0 %v63
    %448 = vmatpush.msra.mxu0 %v62
    %449 = vmatpush.msra.mxu0 %v61
    %450 = vmatpush.msra.mxu0 %v60
    %451 = vmatpush.msra.mxu0 %v59
    %452 = vmatpush.msra.mxu0 %v58
    %453 = vmatpush.msra.mxu0 %v57
    %454 = vmatmul.f32.gmra.mxu0 %v178
    %v455 = vpop.f32.mrf.mxu0
    %v456 = vadd.f32 0.0, %v455
    %457 = vdwg.mxu0
    %v458 = vadd.f32 %v149, %v456
    %459 = vmatpush.msra.mxu0 %v88
    %460 = vmatpush.msra.mxu0 %v87
    %461 = vmatpush.msra.mxu0 %v86
    %462 = vmatpush.msra.mxu0 %v85
    %463 = vmatpush.msra.mxu0 %v84
    %464 = vmatpush.msra.mxu0 %v83
    %465 = vmatpush.msra.mxu0 %v82
    %466 = vmatpush.msra.mxu0 %v81
    %467 = vmatpush.msra.mxu0 %v80
    %468 = vmatpush.msra.mxu0 %v79
    %469 = vmatpush.msra.mxu0 %v78
    %470 = vmatpush.msra.mxu0 %v77
    %471 = vmatpush.msra.mxu0 %v76
    %472 = vmatpush.msra.mxu0 %v75
    %473 = vmatpush.msra.mxu0 %v74
    %474 = vmatpush.msra.mxu0 %v73
    %475 = vmatmul.f32.gmra.mxu0 %v203
    %v476 = vpop.f32.mrf.mxu0
    %v477 = vadd.f32 0.0, %v476
    %478 = vdwg.mxu0
    %v479 = vadd.f32 %v458, %v477
    %v480 = vrot.slane %v53, 4
    %v481 = vrot.slane %v55, 3
    %v482 = vsel %vm125, %v481, %v480
    %484 = vmatpush.msra.mxu0 %v104
    %485 = vmatpush.msra.mxu0 %v103
    %486 = vmatpush.msra.mxu0 %v102
    %487 = vmatpush.msra.mxu0 %v101
    %488 = vmatpush.msra.mxu0 %v100
    %489 = vmatpush.msra.mxu0 %v99
    %490 = vmatpush.msra.mxu0 %v98
    %491 = vmatpush.msra.mxu0 %v97
    %492 = vmatpush.msra.mxu0 %v96
    %493 = vmatpush.msra.mxu0 %v95
    %494 = vmatpush.msra.mxu0 %v94
    %495 = vmatpush.msra.mxu0 %v93
    %496 = vmatpush.msra.mxu0 %v92
    %497 = vmatpush.msra.mxu0 %v91
    %498 = vmatpush.msra.mxu0 %v90
    %499 = vmatpush.msra.mxu0 %v89
    %500 = vmatmul.f32.gmra.mxu0 %v482
    %v501 = vpop.f32.mrf.mxu0
    %v502 = vadd.f32 0.0, %v501
    %503 = vdwg.mxu0
    %v504 = vadd.f32 %v479, %v502
    %v505 = vrot.slane %v53, 5
    %v506 = vrot.slane %v55, 4
    %v507 = vsel %vm125, %v506, %v505
    %509 = vmatpush.msra.mxu0 %v120
    %510 = vmatpush.msra.mxu0 %v119
    %511 = vmatpush.msra.mxu0 %v118
    %512 = vmatpush.msra.mxu0 %v117
    %513 = vmatpush.msra.mxu0 %v116
    %514 = vmatpush.msra.mxu0 %v115
    %515 = vmatpush.msra.mxu0 %v114
    %516 = vmatpush.msra.mxu0 %v113
    %517 = vmatpush.msra.mxu0 %v112
    %518 = vmatpush.msra.mxu0 %v111
    %519 = vmatpush.msra.mxu0 %v110
    %520 = vmatpush.msra.mxu0 %v109
    %521 = vmatpush.msra.mxu0 %v108
    %522 = vmatpush.msra.mxu0 %v107
    %523 = vmatpush.msra.mxu0 %v106
    %524 = vmatpush.msra.mxu0 %v105
    %525 = vmatmul.f32.gmra.mxu0 %v507
    %v526 = vpop.f32.mrf.mxu0
    %v527 = vadd.f32 0.0, %v526
    %528 = vdwg.mxu0
    %v529 = vadd.f32 %v504, %v527
    %v530 = vmax.f32 %v529, 0.0
    %531 = vmatpush.msra.mxu0 %v72
    %532 = vmatpush.msra.mxu0 %v71
    %533 = vmatpush.msra.mxu0 %v70
    %534 = vmatpush.msra.mxu0 %v69
    %535 = vmatpush.msra.mxu0 %v68
    %536 = vmatpush.msra.mxu0 %v67
    %537 = vmatpush.msra.mxu0 %v66
    %538 = vmatpush.msra.mxu0 %v65
    %539 = vmatpush.msra.mxu0 %v64
    %540 = vmatpush.msra.mxu0 %v63
    %541 = vmatpush.msra.mxu0 %v62
    %542 = vmatpush.msra.mxu0 %v61
    %543 = vmatpush.msra.mxu0 %v60
    %544 = vmatpush.msra.mxu0 %v59
    %545 = vmatpush.msra.mxu0 %v58
    %546 = vmatpush.msra.mxu0 %v57
    %547 = vmatmul.f32.gmra.mxu0 %v295
    %v548 = vpop.f32.mrf.mxu0
    %v549 = vadd.f32 0.0, %v548
    %550 = vdwg.mxu0
    %v551 = vadd.f32 %v149, %v549
    %552 = vmatpush.msra.mxu0 %v88
    %553 = vmatpush.msra.mxu0 %v87
    %554 = vmatpush.msra.mxu0 %v86
    %555 = vmatpush.msra.mxu0 %v85
    %556 = vmatpush.msra.mxu0 %v84
    %557 = vmatpush.msra.mxu0 %v83
    %558 = vmatpush.msra.mxu0 %v82
    %559 = vmatpush.msra.mxu0 %v81
    %560 = vmatpush.msra.mxu0 %v80
    %561 = vmatpush.msra.mxu0 %v79
    %562 = vmatpush.msra.mxu0 %v78
    %563 = vmatpush.msra.mxu0 %v77
    %564 = vmatpush.msra.mxu0 %v76
    %565 = vmatpush.msra.mxu0 %v75
    %566 = vmatpush.msra.mxu0 %v74
    %567 = vmatpush.msra.mxu0 %v73
    %568 = vmatmul.f32.gmra.mxu0 %v325
    %v569 = vpop.f32.mrf.mxu0
    %v570 = vadd.f32 0.0, %v569
    %571 = vdwg.mxu0
    %v572 = vadd.f32 %v551, %v570
    %v573 = vrot.slane %v54, 4
    %v574 = vrot.slane %v56, 3
    %v575 = vsel %vm125, %v574, %v573
    %576 = vrot.lane.b32.xlu0 %v482, 64
    %v577 = vpop.permute.xlu0 %576
    %578 = vrot.lane.b32.xlu0 %v575, 64
    %v579 = vpop.permute.xlu0 %578
    %v580 = vsel %vm235, %v577, %v579
    %582 = vmatpush.msra.mxu0 %v104
    %583 = vmatpush.msra.mxu0 %v103
    %584 = vmatpush.msra.mxu0 %v102
    %585 = vmatpush.msra.mxu0 %v101
    %586 = vmatpush.msra.mxu0 %v100
    %587 = vmatpush.msra.mxu0 %v99
    %588 = vmatpush.msra.mxu0 %v98
    %589 = vmatpush.msra.mxu0 %v97
    %590 = vmatpush.msra.mxu0 %v96
    %591 = vmatpush.msra.mxu0 %v95
    %592 = vmatpush.msra.mxu0 %v94
    %593 = vmatpush.msra.mxu0 %v93
    %594 = vmatpush.msra.mxu0 %v92
    %595 = vmatpush.msra.mxu0 %v91
    %596 = vmatpush.msra.mxu0 %v90
    %597 = vmatpush.msra.mxu0 %v89
    %598 = vmatmul.f32.gmra.mxu0 %v580
    %v599 = vpop.f32.mrf.mxu0
    %v600 = vadd.f32 0.0, %v599
    %601 = vdwg.mxu0
    %v602 = vadd.f32 %v572, %v600
    %v603 = vrot.slane %v54, 5
    %v604 = vrot.slane %v56, 4
    %v605 = vsel %vm125, %v604, %v603
    %606 = vrot.lane.b32.xlu0 %v507, 64
    %v607 = vpop.permute.xlu0 %606
    %608 = vrot.lane.b32.xlu0 %v605, 64
    %v609 = vpop.permute.xlu0 %608
    %v610 = vsel %vm235, %v607, %v609
    %612 = vmatpush.msra.mxu0 %v120
    %613 = vmatpush.msra.mxu0 %v119
    %614 = vmatpush.msra.mxu0 %v118
    %615 = vmatpush.msra.mxu0 %v117
    %616 = vmatpush.msra.mxu0 %v116
    %617 = vmatpush.msra.mxu0 %v115
    %618 = vmatpush.msra.mxu0 %v114
    %619 = vmatpush.msra.mxu0 %v113
    %620 = vmatpush.msra.mxu0 %v112
    %621 = vmatpush.msra.mxu0 %v111
    %622 = vmatpush.msra.mxu0 %v110
    %623 = vmatpush.msra.mxu0 %v109
    %624 = vmatpush.msra.mxu0 %v108
    %625 = vmatpush.msra.mxu0 %v107
    %626 = vmatpush.msra.mxu0 %v106
    %627 = vmatpush.msra.mxu0 %v105
    %628 = vmatmul.f32.gmra.mxu0 %v610
    %v629 = vpop.f32.mrf.mxu0
    %v630 = vadd.f32 0.0, %v629
    %631 = vdwg.mxu0
    %v632 = vadd.f32 %v602, %v630
    %v633 = vmax.f32 %v632, 0.0
    %634 = vmatpush.msra.mxu0 %v72
    %635 = vmatpush.msra.mxu0 %v71
    %636 = vmatpush.msra.mxu0 %v70
    %637 = vmatpush.msra.mxu0 %v69
    %638 = vmatpush.msra.mxu0 %v68
    %639 = vmatpush.msra.mxu0 %v67
    %640 = vmatpush.msra.mxu0 %v66
    %641 = vmatpush.msra.mxu0 %v65
    %642 = vmatpush.msra.mxu0 %v64
    %643 = vmatpush.msra.mxu0 %v63
    %644 = vmatpush.msra.mxu0 %v62
    %645 = vmatpush.msra.mxu0 %v61
    %646 = vmatpush.msra.mxu0 %v60
    %647 = vmatpush.msra.mxu0 %v59
    %648 = vmatpush.msra.mxu0 %v58
    %649 = vmatpush.msra.mxu0 %v57
    %650 = vmatmul.f32.gmra.mxu0 %v290
    %v651 = vpop.f32.mrf.mxu0
    %v652 = vadd.f32 0.0, %v651
    %653 = vdwg.mxu0
    %v654 = vadd.f32 %v149, %v652
    %655 = vmatpush.msra.mxu0 %v88
    %656 = vmatpush.msra.mxu0 %v87
    %657 = vmatpush.msra.mxu0 %v86
    %658 = vmatpush.msra.mxu0 %v85
    %659 = vmatpush.msra.mxu0 %v84
    %660 = vmatpush.msra.mxu0 %v83
    %661 = vmatpush.msra.mxu0 %v82
    %662 = vmatpush.msra.mxu0 %v81
    %663 = vmatpush.msra.mxu0 %v80
    %664 = vmatpush.msra.mxu0 %v79
    %665 = vmatpush.msra.mxu0 %v78
    %666 = vmatpush.msra.mxu0 %v77
    %667 = vmatpush.msra.mxu0 %v76
    %668 = vmatpush.msra.mxu0 %v75
    %669 = vmatpush.msra.mxu0 %v74
    %670 = vmatpush.msra.mxu0 %v73
    %671 = vmatmul.f32.gmra.mxu0 %v320
    %v672 = vpop.f32.mrf.mxu0
    %v673 = vadd.f32 0.0, %v672
    %674 = vdwg.mxu0
    %v675 = vadd.f32 %v654, %v673
    %677 = vmatpush.msra.mxu0 %v104
    %678 = vmatpush.msra.mxu0 %v103
    %679 = vmatpush.msra.mxu0 %v102
    %680 = vmatpush.msra.mxu0 %v101
    %681 = vmatpush.msra.mxu0 %v100
    %682 = vmatpush.msra.mxu0 %v99
    %683 = vmatpush.msra.mxu0 %v98
    %684 = vmatpush.msra.mxu0 %v97
    %685 = vmatpush.msra.mxu0 %v96
    %686 = vmatpush.msra.mxu0 %v95
    %687 = vmatpush.msra.mxu0 %v94
    %688 = vmatpush.msra.mxu0 %v93
    %689 = vmatpush.msra.mxu0 %v92
    %690 = vmatpush.msra.mxu0 %v91
    %691 = vmatpush.msra.mxu0 %v90
    %692 = vmatpush.msra.mxu0 %v89
    %693 = vmatmul.f32.gmra.mxu0 %v575
    %v694 = vpop.f32.mrf.mxu0
    %v695 = vadd.f32 0.0, %v694
    %696 = vdwg.mxu0
    %v697 = vadd.f32 %v675, %v695
    %699 = vmatpush.msra.mxu0 %v120
    %700 = vmatpush.msra.mxu0 %v119
    %701 = vmatpush.msra.mxu0 %v118
    %702 = vmatpush.msra.mxu0 %v117
    %703 = vmatpush.msra.mxu0 %v116
    %704 = vmatpush.msra.mxu0 %v115
    %705 = vmatpush.msra.mxu0 %v114
    %706 = vmatpush.msra.mxu0 %v113
    %707 = vmatpush.msra.mxu0 %v112
    %708 = vmatpush.msra.mxu0 %v111
    %709 = vmatpush.msra.mxu0 %v110
    %710 = vmatpush.msra.mxu0 %v109
    %711 = vmatpush.msra.mxu0 %v108
    %712 = vmatpush.msra.mxu0 %v107
    %713 = vmatpush.msra.mxu0 %v106
    %714 = vmatpush.msra.mxu0 %v105
    %715 = vmatmul.f32.gmra.mxu0 %v605
    %v716 = vpop.f32.mrf.mxu0
    %v717 = vadd.f32 0.0, %v716
    %718 = vdwg.mxu0
    %v719 = vadd.f32 %v697, %v717
    %v720 = vmax.f32 %v719, 0.0
    %721 = vmatpush.msra.mxu0 %v72
    %722 = vmatpush.msra.mxu0 %v71
    %723 = vmatpush.msra.mxu0 %v70
    %724 = vmatpush.msra.mxu0 %v69
    %725 = vmatpush.msra.mxu0 %v68
    %726 = vmatpush.msra.mxu0 %v67
    %727 = vmatpush.msra.mxu0 %v66
    %728 = vmatpush.msra.mxu0 %v65
    %729 = vmatpush.msra.mxu0 %v64
    %730 = vmatpush.msra.mxu0 %v63
    %731 = vmatpush.msra.mxu0 %v62
    %732 = vmatpush.msra.mxu0 %v61
    %733 = vmatpush.msra.mxu0 %v60
    %734 = vmatpush.msra.mxu0 %v59
    %735 = vmatpush.msra.mxu0 %v58
    %736 = vmatpush.msra.mxu0 %v57
    %737 = vmatmul.f32.gmra.mxu0 %v482
    %v738 = vpop.f32.mrf.mxu0
    %v739 = vadd.f32 0.0, %v738
    %740 = vdwg.mxu0
    %v741 = vadd.f32 %v149, %v739
    %742 = vmatpush.msra.mxu0 %v88
    %743 = vmatpush.msra.mxu0 %v87
    %744 = vmatpush.msra.mxu0 %v86
    %745 = vmatpush.msra.mxu0 %v85
    %746 = vmatpush.msra.mxu0 %v84
    %747 = vmatpush.msra.mxu0 %v83
    %748 = vmatpush.msra.mxu0 %v82
    %749 = vmatpush.msra.mxu0 %v81
    %750 = vmatpush.msra.mxu0 %v80
    %751 = vmatpush.msra.mxu0 %v79
    %752 = vmatpush.msra.mxu0 %v78
    %753 = vmatpush.msra.mxu0 %v77
    %754 = vmatpush.msra.mxu0 %v76
    %755 = vmatpush.msra.mxu0 %v75
    %756 = vmatpush.msra.mxu0 %v74
    %757 = vmatpush.msra.mxu0 %v73
    %758 = vmatmul.f32.gmra.mxu0 %v507
    %v759 = vpop.f32.mrf.mxu0
    %v760 = vadd.f32 0.0, %v759
    %761 = vdwg.mxu0
    %v762 = vadd.f32 %v741, %v760
    %v763 = vrot.slane %v53, 6
    %v764 = vrot.slane %v55, 5
    %v765 = vsel %vm125, %v764, %v763
    %767 = vmatpush.msra.mxu0 %v104
    %768 = vmatpush.msra.mxu0 %v103
    %769 = vmatpush.msra.mxu0 %v102
    %770 = vmatpush.msra.mxu0 %v101
    %771 = vmatpush.msra.mxu0 %v100
    %772 = vmatpush.msra.mxu0 %v99
    %773 = vmatpush.msra.mxu0 %v98
    %774 = vmatpush.msra.mxu0 %v97
    %775 = vmatpush.msra.mxu0 %v96
    %776 = vmatpush.msra.mxu0 %v95
    %777 = vmatpush.msra.mxu0 %v94
    %778 = vmatpush.msra.mxu0 %v93
    %779 = vmatpush.msra.mxu0 %v92
    %780 = vmatpush.msra.mxu0 %v91
    %781 = vmatpush.msra.mxu0 %v90
    %782 = vmatpush.msra.mxu0 %v89
    %783 = vmatmul.f32.gmra.mxu0 %v765
    %v784 = vpop.f32.mrf.mxu0
    %v785 = vadd.f32 0.0, %v784
    %786 = vdwg.mxu0
    %v787 = vadd.f32 %v762, %v785
    %v788 = vrot.slane %v53, 7
    %v789 = vrot.slane %v55, 6
    %v790 = vsel %vm125, %v789, %v788
    %792 = vmatpush.msra.mxu0 %v120
    %793 = vmatpush.msra.mxu0 %v119
    %794 = vmatpush.msra.mxu0 %v118
    %795 = vmatpush.msra.mxu0 %v117
    %796 = vmatpush.msra.mxu0 %v116
    %797 = vmatpush.msra.mxu0 %v115
    %798 = vmatpush.msra.mxu0 %v114
    %799 = vmatpush.msra.mxu0 %v113
    %800 = vmatpush.msra.mxu0 %v112
    %801 = vmatpush.msra.mxu0 %v111
    %802 = vmatpush.msra.mxu0 %v110
    %803 = vmatpush.msra.mxu0 %v109
    %804 = vmatpush.msra.mxu0 %v108
    %805 = vmatpush.msra.mxu0 %v107
    %806 = vmatpush.msra.mxu0 %v106
    %807 = vmatpush.msra.mxu0 %v105
    %808 = vmatmul.f32.gmra.mxu0 %v790
    %v809 = vpop.f32.mrf.mxu0
    %v810 = vadd.f32 0.0, %v809
    %811 = vdwg.mxu0
    %v812 = vadd.f32 %v787, %v810
    %v813 = vmax.f32 %v812, 0.0
    %814 = vmatpush.msra.mxu0 %v72
    %815 = vmatpush.msra.mxu0 %v71
    %816 = vmatpush.msra.mxu0 %v70
    %817 = vmatpush.msra.mxu0 %v69
    %818 = vmatpush.msra.mxu0 %v68
    %819 = vmatpush.msra.mxu0 %v67
    %820 = vmatpush.msra.mxu0 %v66
    %821 = vmatpush.msra.mxu0 %v65
    %822 = vmatpush.msra.mxu0 %v64
    %823 = vmatpush.msra.mxu0 %v63
    %824 = vmatpush.msra.mxu0 %v62
    %825 = vmatpush.msra.mxu0 %v61
    %826 = vmatpush.msra.mxu0 %v60
    %827 = vmatpush.msra.mxu0 %v59
    %828 = vmatpush.msra.mxu0 %v58
    %829 = vmatpush.msra.mxu0 %v57
    %830 = vmatmul.f32.gmra.mxu0 %v580
    %v831 = vpop.f32.mrf.mxu0
    %v832 = vadd.f32 0.0, %v831
    %833 = vdwg.mxu0
    %v834 = vadd.f32 %v149, %v832
    %835 = vmatpush.msra.mxu0 %v88
    %836 = vmatpush.msra.mxu0 %v87
    %837 = vmatpush.msra.mxu0 %v86
    %838 = vmatpush.msra.mxu0 %v85
    %839 = vmatpush.msra.mxu0 %v84
    %840 = vmatpush.msra.mxu0 %v83
    %841 = vmatpush.msra.mxu0 %v82
    %842 = vmatpush.msra.mxu0 %v81
    %843 = vmatpush.msra.mxu0 %v80
    %844 = vmatpush.msra.mxu0 %v79
    %845 = vmatpush.msra.mxu0 %v78
    %846 = vmatpush.msra.mxu0 %v77
    %847 = vmatpush.msra.mxu0 %v76
    %848 = vmatpush.msra.mxu0 %v75
    %849 = vmatpush.msra.mxu0 %v74
    %850 = vmatpush.msra.mxu0 %v73
    %851 = vmatmul.f32.gmra.mxu0 %v610
    %v852 = vpop.f32.mrf.mxu0
    %v853 = vadd.f32 0.0, %v852
    %854 = vdwg.mxu0
    %v855 = vadd.f32 %v834, %v853
    %v856 = vrot.slane %v54, 6
    %v857 = vrot.slane %v56, 5
    %v858 = vsel %vm125, %v857, %v856
    %859 = vrot.lane.b32.xlu0 %v765, 64
    %v860 = vpop.permute.xlu0 %859
    %861 = vrot.lane.b32.xlu0 %v858, 64
    %v862 = vpop.permute.xlu0 %861
    %v863 = vsel %vm235, %v860, %v862
    %865 = vmatpush.msra.mxu0 %v104
    %866 = vmatpush.msra.mxu0 %v103
    %867 = vmatpush.msra.mxu0 %v102
    %868 = vmatpush.msra.mxu0 %v101
    %869 = vmatpush.msra.mxu0 %v100
    %870 = vmatpush.msra.mxu0 %v99
    %871 = vmatpush.msra.mxu0 %v98
    %872 = vmatpush.msra.mxu0 %v97
    %873 = vmatpush.msra.mxu0 %v96
    %874 = vmatpush.msra.mxu0 %v95
    %875 = vmatpush.msra.mxu0 %v94
    %876 = vmatpush.msra.mxu0 %v93
    %877 = vmatpush.msra.mxu0 %v92
    %878 = vmatpush.msra.mxu0 %v91
    %879 = vmatpush.msra.mxu0 %v90
    %880 = vmatpush.msra.mxu0 %v89
    %881 = vmatmul.f32.gmra.mxu0 %v863
    %v882 = vpop.f32.mrf.mxu0
    %v883 = vadd.f32 0.0, %v882
    %884 = vdwg.mxu0
    %v885 = vadd.f32 %v855, %v883
    %v886 = vrot.slane %v54, 7
    %v887 = vrot.slane %v56, 6
    %v888 = vsel %vm125, %v887, %v886
    %889 = vrot.lane.b32.xlu0 %v790, 64
    %v890 = vpop.permute.xlu0 %889
    %891 = vrot.lane.b32.xlu0 %v888, 64
    %v892 = vpop.permute.xlu0 %891
    %v893 = vsel %vm235, %v890, %v892
    %895 = vmatpush.msra.mxu0 %v120
    %896 = vmatpush.msra.mxu0 %v119
    %897 = vmatpush.msra.mxu0 %v118
    %898 = vmatpush.msra.mxu0 %v117
    %899 = vmatpush.msra.mxu0 %v116
    %900 = vmatpush.msra.mxu0 %v115
    %901 = vmatpush.msra.mxu0 %v114
    %902 = vmatpush.msra.mxu0 %v113
    %903 = vmatpush.msra.mxu0 %v112
    %904 = vmatpush.msra.mxu0 %v111
    %905 = vmatpush.msra.mxu0 %v110
    %906 = vmatpush.msra.mxu0 %v109
    %907 = vmatpush.msra.mxu0 %v108
    %908 = vmatpush.msra.mxu0 %v107
    %909 = vmatpush.msra.mxu0 %v106
    %910 = vmatpush.msra.mxu0 %v105
    %911 = vmatmul.f32.gmra.mxu0 %v893
    %v912 = vpop.f32.mrf.mxu0
    %v913 = vadd.f32 0.0, %v912
    %914 = vdwg.mxu0
    %v915 = vadd.f32 %v885, %v913
    %v916 = vmax.f32 %v915, 0.0
    %917 = vmatpush.msra.mxu0 %v72
    %918 = vmatpush.msra.mxu0 %v71
    %919 = vmatpush.msra.mxu0 %v70
    %920 = vmatpush.msra.mxu0 %v69
    %921 = vmatpush.msra.mxu0 %v68
    %922 = vmatpush.msra.mxu0 %v67
    %923 = vmatpush.msra.mxu0 %v66
    %924 = vmatpush.msra.mxu0 %v65
    %925 = vmatpush.msra.mxu0 %v64
    %926 = vmatpush.msra.mxu0 %v63
    %927 = vmatpush.msra.mxu0 %v62
    %928 = vmatpush.msra.mxu0 %v61
    %929 = vmatpush.msra.mxu0 %v60
    %930 = vmatpush.msra.mxu0 %v59
    %931 = vmatpush.msra.mxu0 %v58
    %932 = vmatpush.msra.mxu0 %v57
    %933 = vmatmul.f32.gmra.mxu0 %v575
    %v934 = vpop.f32.mrf.mxu0
    %v935 = vadd.f32 0.0, %v934
    %936 = vdwg.mxu0
    %v937 = vadd.f32 %v149, %v935
    %938 = vmatpush.msra.mxu0 %v88
    %939 = vmatpush.msra.mxu0 %v87
    %940 = vmatpush.msra.mxu0 %v86
    %941 = vmatpush.msra.mxu0 %v85
    %942 = vmatpush.msra.mxu0 %v84
    %943 = vmatpush.msra.mxu0 %v83
    %944 = vmatpush.msra.mxu0 %v82
    %945 = vmatpush.msra.mxu0 %v81
    %946 = vmatpush.msra.mxu0 %v80
    %947 = vmatpush.msra.mxu0 %v79
    %948 = vmatpush.msra.mxu0 %v78
    %949 = vmatpush.msra.mxu0 %v77
    %950 = vmatpush.msra.mxu0 %v76
    %951 = vmatpush.msra.mxu0 %v75
    %952 = vmatpush.msra.mxu0 %v74
    %953 = vmatpush.msra.mxu0 %v73
    %954 = vmatmul.f32.gmra.mxu0 %v605
    %v955 = vpop.f32.mrf.mxu0
    %v956 = vadd.f32 0.0, %v955
    %957 = vdwg.mxu0
    %v958 = vadd.f32 %v937, %v956
    %960 = vmatpush.msra.mxu0 %v104
    %961 = vmatpush.msra.mxu0 %v103
    %962 = vmatpush.msra.mxu0 %v102
    %963 = vmatpush.msra.mxu0 %v101
    %964 = vmatpush.msra.mxu0 %v100
    %965 = vmatpush.msra.mxu0 %v99
    %966 = vmatpush.msra.mxu0 %v98
    %967 = vmatpush.msra.mxu0 %v97
    %968 = vmatpush.msra.mxu0 %v96
    %969 = vmatpush.msra.mxu0 %v95
    %970 = vmatpush.msra.mxu0 %v94
    %971 = vmatpush.msra.mxu0 %v93
    %972 = vmatpush.msra.mxu0 %v92
    %973 = vmatpush.msra.mxu0 %v91
    %974 = vmatpush.msra.mxu0 %v90
    %975 = vmatpush.msra.mxu0 %v89
    %976 = vmatmul.f32.gmra.mxu0 %v858
    %v977 = vpop.f32.mrf.mxu0
    %v978 = vadd.f32 0.0, %v977
    %979 = vdwg.mxu0
    %v980 = vadd.f32 %v958, %v978
    %982 = vmatpush.msra.mxu0 %v120
    %983 = vmatpush.msra.mxu0 %v119
    %984 = vmatpush.msra.mxu0 %v118
    %985 = vmatpush.msra.mxu0 %v117
    %986 = vmatpush.msra.mxu0 %v116
    %987 = vmatpush.msra.mxu0 %v115
    %988 = vmatpush.msra.mxu0 %v114
    %989 = vmatpush.msra.mxu0 %v113
    %990 = vmatpush.msra.mxu0 %v112
    %991 = vmatpush.msra.mxu0 %v111
    %992 = vmatpush.msra.mxu0 %v110
    %993 = vmatpush.msra.mxu0 %v109
    %994 = vmatpush.msra.mxu0 %v108
    %995 = vmatpush.msra.mxu0 %v107
    %996 = vmatpush.msra.mxu0 %v106
    %997 = vmatpush.msra.mxu0 %v105
    %998 = vmatmul.f32.gmra.mxu0 %v888
    %v999 = vpop.f32.mrf.mxu0
    %v1000 = vadd.f32 0.0, %v999
    %1001 = vdwg.mxu0
    %v1002 = vadd.f32 %v980, %v1000
    %v1003 = vmax.f32 %v1002, 0.0
    %v1004 = vld [vmem:[%s4] sm:$0x1]
    %v1005 = vld [vmem:[%s3] sm:$0xff]
    %v1006 = vld [vmem:[%s3 + $0x8] sm:$0xff]
    %v1007 = vld [vmem:[%s3 + $0x10] sm:$0xff]
    %v1008 = vld [vmem:[%s3 + $0x18] sm:$0xff]
    %v1009 = vld [vmem:[%s3 + $0x20] sm:$0xff]
    %v1010 = vld [vmem:[%s3 + $0x28] sm:$0xff]
    %v1011 = vld [vmem:[%s3 + $0x30] sm:$0xff]
    %v1012 = vld [vmem:[%s3 + $0x38] sm:$0xff]
    %v1013 = vld [vmem:[%s3 + $0x40] sm:$0xff]
    %v1014 = vld [vmem:[%s3 + $0x48] sm:$0xff]
    %v1015 = vld [vmem:[%s3 + $0x50] sm:$0xff]
    %v1016 = vld [vmem:[%s3 + $0x58] sm:$0xff]
    %v1017 = vld [vmem:[%s3 + $0x60] sm:$0xff]
    %v1018 = vld [vmem:[%s3 + $0x68] sm:$0xff]
    %v1019 = vld [vmem:[%s3 + $0x70] sm:$0xff]
    %v1020 = vld [vmem:[%s3 + $0x78] sm:$0xff]
    %v1021 = vld [vmem:[%s3 + $0x80] sm:$0xff]
    %v1022 = vld [vmem:[%s3 + $0x88] sm:$0xff]
    %v1023 = vld [vmem:[%s3 + $0x90] sm:$0xff]
    %v1024 = vld [vmem:[%s3 + $0x98] sm:$0xff]
    %v1025 = vld [vmem:[%s3 + $0xa0] sm:$0xff]
    %v1026 = vld [vmem:[%s3 + $0xa8] sm:$0xff]
    %v1027 = vld [vmem:[%s3 + $0xb0] sm:$0xff]
    %v1028 = vld [vmem:[%s3 + $0xb8] sm:$0xff]
    %v1029 = vld [vmem:[%s3 + $0xc0] sm:$0xff]
    %v1030 = vld [vmem:[%s3 + $0xc8] sm:$0xff]
    %v1031 = vld [vmem:[%s3 + $0xd0] sm:$0xff]
    %v1032 = vld [vmem:[%s3 + $0xd8] sm:$0xff]
    %v1033 = vld [vmem:[%s3 + $0xe0] sm:$0xff]
    %v1034 = vld [vmem:[%s3 + $0xe8] sm:$0xff]
    %v1035 = vld [vmem:[%s3 + $0xf0] sm:$0xff]
    %v1036 = vld [vmem:[%s3 + $0xf8] sm:$0xff]
    %v1037 = vld [vmem:[%s3 + $0x100] sm:$0xff]
    %v1038 = vld [vmem:[%s3 + $0x108] sm:$0xff]
    %v1039 = vld [vmem:[%s3 + $0x110] sm:$0xff]
    %v1040 = vld [vmem:[%s3 + $0x118] sm:$0xff]
    %v1041 = vld [vmem:[%s3 + $0x120] sm:$0xff]
    %v1042 = vld [vmem:[%s3 + $0x128] sm:$0xff]
    %v1043 = vld [vmem:[%s3 + $0x130] sm:$0xff]
    %v1044 = vld [vmem:[%s3 + $0x138] sm:$0xff]
    %v1045 = vld [vmem:[%s3 + $0x140] sm:$0xff]
    %v1046 = vld [vmem:[%s3 + $0x148] sm:$0xff]
    %v1047 = vld [vmem:[%s3 + $0x150] sm:$0xff]
    %v1048 = vld [vmem:[%s3 + $0x158] sm:$0xff]
    %v1049 = vld [vmem:[%s3 + $0x160] sm:$0xff]
    %v1050 = vld [vmem:[%s3 + $0x168] sm:$0xff]
    %v1051 = vld [vmem:[%s3 + $0x170] sm:$0xff]
    %v1052 = vld [vmem:[%s3 + $0x178] sm:$0xff]
    %v1053 = vld [vmem:[%s3 + $0x180] sm:$0xff]
    %v1054 = vld [vmem:[%s3 + $0x188] sm:$0xff]
    %v1055 = vld [vmem:[%s3 + $0x190] sm:$0xff]
    %v1056 = vld [vmem:[%s3 + $0x198] sm:$0xff]
    %v1057 = vld [vmem:[%s3 + $0x1a0] sm:$0xff]
    %v1058 = vld [vmem:[%s3 + $0x1a8] sm:$0xff]
    %v1059 = vld [vmem:[%s3 + $0x1b0] sm:$0xff]
    %v1060 = vld [vmem:[%s3 + $0x1b8] sm:$0xff]
    %v1061 = vld [vmem:[%s3 + $0x1c0] sm:$0xff]
    %v1062 = vld [vmem:[%s3 + $0x1c8] sm:$0xff]
    %v1063 = vld [vmem:[%s3 + $0x1d0] sm:$0xff]
    %v1064 = vld [vmem:[%s3 + $0x1d8] sm:$0xff]
    %v1065 = vld [vmem:[%s3 + $0x1e0] sm:$0xff]
    %v1066 = vld [vmem:[%s3 + $0x1e8] sm:$0xff]
    %v1067 = vld [vmem:[%s3 + $0x1f0] sm:$0xff]
    %v1068 = vld [vmem:[%s3 + $0x1f8] sm:$0xff]
    %v1069 = vld [vmem:[%s3 + $0x200] sm:$0xff]
    %v1070 = vld [vmem:[%s3 + $0x208] sm:$0xff]
    %v1071 = vld [vmem:[%s3 + $0x210] sm:$0xff]
    %v1072 = vld [vmem:[%s3 + $0x218] sm:$0xff]
    %v1073 = vld [vmem:[%s3 + $0x220] sm:$0xff]
    %v1074 = vld [vmem:[%s3 + $0x228] sm:$0xff]
    %v1075 = vld [vmem:[%s3 + $0x230] sm:$0xff]
    %v1076 = vld [vmem:[%s3 + $0x238] sm:$0xff]
    %v1077 = vld [vmem:[%s6] sm:$0x3]
    %v1079 = vsel %vm235, %v226, 0
    %1081 = vmatpush.msra.mxu0 0.0
    %1082 = vmatpush.msra.mxu0 0.0
    %1083 = vmatpush.msra.mxu0 0.0
    %1084 = vmatpush.msra.mxu0 0.0
    %1085 = vmatpush.msra.mxu0 0.0
    %1086 = vmatpush.msra.mxu0 0.0
    %1087 = vmatpush.msra.mxu0 0.0
    %1088 = vmatpush.msra.mxu0 0.0
    %1089 = vmatpush.msra.mxu0 %v1012
    %1090 = vmatpush.msra.mxu0 %v1011
    %1091 = vmatpush.msra.mxu0 %v1010
    %1092 = vmatpush.msra.mxu0 %v1009
    %1093 = vmatpush.msra.mxu0 %v1008
    %1094 = vmatpush.msra.mxu0 %v1007
    %1095 = vmatpush.msra.mxu0 %v1006
    %1096 = vmatpush.msra.mxu0 %v1005
    %1097 = vmatmul.f32.gmra.mxu0 %v1079
    %v1098 = vpop.f32.mrf.mxu0
    %v1099 = vadd.f32 0.0, %v1098
    %1100 = vdwg.mxu0
    %v1102 = vperm.slane %v1004, 0
    %v1104 = vadd.f32 %v1102, %v1099
    %v1106 = vsel %vm235, %v348, 0
    %1108 = vmatpush.msra.mxu0 0.0
    %1109 = vmatpush.msra.mxu0 0.0
    %1110 = vmatpush.msra.mxu0 0.0
    %1111 = vmatpush.msra.mxu0 0.0
    %1112 = vmatpush.msra.mxu0 0.0
    %1113 = vmatpush.msra.mxu0 0.0
    %1114 = vmatpush.msra.mxu0 0.0
    %1115 = vmatpush.msra.mxu0 0.0
    %1116 = vmatpush.msra.mxu0 %v1020
    %1117 = vmatpush.msra.mxu0 %v1019
    %1118 = vmatpush.msra.mxu0 %v1018
    %1119 = vmatpush.msra.mxu0 %v1017
    %1120 = vmatpush.msra.mxu0 %v1016
    %1121 = vmatpush.msra.mxu0 %v1015
    %1122 = vmatpush.msra.mxu0 %v1014
    %1123 = vmatpush.msra.mxu0 %v1013
    %1124 = vmatmul.f32.gmra.mxu0 %v1106
    %v1125 = vpop.f32.mrf.mxu0
    %v1126 = vadd.f32 0.0, %v1125
    %1127 = vdwg.mxu0
    %v1128 = vadd.f32 %v1104, %v1126
    %v1130 = vsel %vm235, %v437, 0
    %1132 = vmatpush.msra.mxu0 0.0
    %1133 = vmatpush.msra.mxu0 0.0
    %1134 = vmatpush.msra.mxu0 0.0
    %1135 = vmatpush.msra.mxu0 0.0
    %1136 = vmatpush.msra.mxu0 0.0
    %1137 = vmatpush.msra.mxu0 0.0
    %1138 = vmatpush.msra.mxu0 0.0
    %1139 = vmatpush.msra.mxu0 0.0
    %1140 = vmatpush.msra.mxu0 %v1028
    %1141 = vmatpush.msra.mxu0 %v1027
    %1142 = vmatpush.msra.mxu0 %v1026
    %1143 = vmatpush.msra.mxu0 %v1025
    %1144 = vmatpush.msra.mxu0 %v1024
    %1145 = vmatpush.msra.mxu0 %v1023
    %1146 = vmatpush.msra.mxu0 %v1022
    %1147 = vmatpush.msra.mxu0 %v1021
    %1148 = vmatmul.f32.gmra.mxu0 %v1130
    %v1149 = vpop.f32.mrf.mxu0
    %v1150 = vadd.f32 0.0, %v1149
    %1151 = vdwg.mxu0
    %v1152 = vadd.f32 %v1128, %v1150
    %v1154 = vsel %vm235, %v530, 0
    %1156 = vmatpush.msra.mxu0 0.0
    %1157 = vmatpush.msra.mxu0 0.0
    %1158 = vmatpush.msra.mxu0 0.0
    %1159 = vmatpush.msra.mxu0 0.0
    %1160 = vmatpush.msra.mxu0 0.0
    %1161 = vmatpush.msra.mxu0 0.0
    %1162 = vmatpush.msra.mxu0 0.0
    %1163 = vmatpush.msra.mxu0 0.0
    %1164 = vmatpush.msra.mxu0 %v1036
    %1165 = vmatpush.msra.mxu0 %v1035
    %1166 = vmatpush.msra.mxu0 %v1034
    %1167 = vmatpush.msra.mxu0 %v1033
    %1168 = vmatpush.msra.mxu0 %v1032
    %1169 = vmatpush.msra.mxu0 %v1031
    %1170 = vmatpush.msra.mxu0 %v1030
    %1171 = vmatpush.msra.mxu0 %v1029
    %1172 = vmatmul.f32.gmra.mxu0 %v1154
    %v1173 = vpop.f32.mrf.mxu0
    %v1174 = vadd.f32 0.0, %v1173
    %1175 = vdwg.mxu0
    %v1176 = vadd.f32 %v1152, %v1174
    %v1178 = vsel %vm235, %v633, 0
    %1180 = vmatpush.msra.mxu0 0.0
    %1181 = vmatpush.msra.mxu0 0.0
    %1182 = vmatpush.msra.mxu0 0.0
    %1183 = vmatpush.msra.mxu0 0.0
    %1184 = vmatpush.msra.mxu0 0.0
    %1185 = vmatpush.msra.mxu0 0.0
    %1186 = vmatpush.msra.mxu0 0.0
    %1187 = vmatpush.msra.mxu0 0.0
    %1188 = vmatpush.msra.mxu0 %v1044
    %1189 = vmatpush.msra.mxu0 %v1043
    %1190 = vmatpush.msra.mxu0 %v1042
    %1191 = vmatpush.msra.mxu0 %v1041
    %1192 = vmatpush.msra.mxu0 %v1040
    %1193 = vmatpush.msra.mxu0 %v1039
    %1194 = vmatpush.msra.mxu0 %v1038
    %1195 = vmatpush.msra.mxu0 %v1037
    %1196 = vmatmul.f32.gmra.mxu0 %v1178
    %v1197 = vpop.f32.mrf.mxu0
    %v1198 = vadd.f32 0.0, %v1197
    %1199 = vdwg.mxu0
    %v1200 = vadd.f32 %v1176, %v1198
    %v1202 = vsel %vm235, %v720, 0
    %1204 = vmatpush.msra.mxu0 0.0
    %1205 = vmatpush.msra.mxu0 0.0
    %1206 = vmatpush.msra.mxu0 0.0
    %1207 = vmatpush.msra.mxu0 0.0
    %1208 = vmatpush.msra.mxu0 0.0
    %1209 = vmatpush.msra.mxu0 0.0
    %1210 = vmatpush.msra.mxu0 0.0
    %1211 = vmatpush.msra.mxu0 0.0
    %1212 = vmatpush.msra.mxu0 %v1052
    %1213 = vmatpush.msra.mxu0 %v1051
    %1214 = vmatpush.msra.mxu0 %v1050
    %1215 = vmatpush.msra.mxu0 %v1049
    %1216 = vmatpush.msra.mxu0 %v1048
    %1217 = vmatpush.msra.mxu0 %v1047
    %1218 = vmatpush.msra.mxu0 %v1046
    %1219 = vmatpush.msra.mxu0 %v1045
    %1220 = vmatmul.f32.gmra.mxu0 %v1202
    %v1221 = vpop.f32.mrf.mxu0
    %v1222 = vadd.f32 0.0, %v1221
    %1223 = vdwg.mxu0
    %v1224 = vadd.f32 %v1200, %v1222
    %v1226 = vsel %vm235, %v813, 0
    %1228 = vmatpush.msra.mxu0 0.0
    %1229 = vmatpush.msra.mxu0 0.0
    %1230 = vmatpush.msra.mxu0 0.0
    %1231 = vmatpush.msra.mxu0 0.0
    %1232 = vmatpush.msra.mxu0 0.0
    %1233 = vmatpush.msra.mxu0 0.0
    %1234 = vmatpush.msra.mxu0 0.0
    %1235 = vmatpush.msra.mxu0 0.0
    %1236 = vmatpush.msra.mxu0 %v1060
    %1237 = vmatpush.msra.mxu0 %v1059
    %1238 = vmatpush.msra.mxu0 %v1058
    %1239 = vmatpush.msra.mxu0 %v1057
    %1240 = vmatpush.msra.mxu0 %v1056
    %1241 = vmatpush.msra.mxu0 %v1055
    %1242 = vmatpush.msra.mxu0 %v1054
    %1243 = vmatpush.msra.mxu0 %v1053
    %1244 = vmatmul.f32.gmra.mxu0 %v1226
    %v1245 = vpop.f32.mrf.mxu0
    %v1246 = vadd.f32 0.0, %v1245
    %1247 = vdwg.mxu0
    %v1248 = vadd.f32 %v1224, %v1246
    %v1250 = vsel %vm235, %v916, 0
    %1252 = vmatpush.msra.mxu0 0.0
    %1253 = vmatpush.msra.mxu0 0.0
    %1254 = vmatpush.msra.mxu0 0.0
    %1255 = vmatpush.msra.mxu0 0.0
    %1256 = vmatpush.msra.mxu0 0.0
    %1257 = vmatpush.msra.mxu0 0.0
    %1258 = vmatpush.msra.mxu0 0.0
    %1259 = vmatpush.msra.mxu0 0.0
    %1260 = vmatpush.msra.mxu0 %v1068
    %1261 = vmatpush.msra.mxu0 %v1067
    %1262 = vmatpush.msra.mxu0 %v1066
    %1263 = vmatpush.msra.mxu0 %v1065
    %1264 = vmatpush.msra.mxu0 %v1064
    %1265 = vmatpush.msra.mxu0 %v1063
    %1266 = vmatpush.msra.mxu0 %v1062
    %1267 = vmatpush.msra.mxu0 %v1061
    %1268 = vmatmul.f32.gmra.mxu0 %v1250
    %v1269 = vpop.f32.mrf.mxu0
    %v1270 = vadd.f32 0.0, %v1269
    %1271 = vdwg.mxu0
    %v1272 = vadd.f32 %v1248, %v1270
    %v1274 = vsel %vm235, %v1003, 0
    %1276 = vmatpush.msra.mxu0 0.0
    %1277 = vmatpush.msra.mxu0 0.0
    %1278 = vmatpush.msra.mxu0 0.0
    %1279 = vmatpush.msra.mxu0 0.0
    %1280 = vmatpush.msra.mxu0 0.0
    %1281 = vmatpush.msra.mxu0 0.0
    %1282 = vmatpush.msra.mxu0 0.0
    %1283 = vmatpush.msra.mxu0 0.0
    %1284 = vmatpush.msra.mxu0 %v1076
    %1285 = vmatpush.msra.mxu0 %v1075
    %1286 = vmatpush.msra.mxu0 %v1074
    %1287 = vmatpush.msra.mxu0 %v1073
    %1288 = vmatpush.msra.mxu0 %v1072
    %1289 = vmatpush.msra.mxu0 %v1071
    %1290 = vmatpush.msra.mxu0 %v1070
    %1291 = vmatpush.msra.mxu0 %v1069
    %1292 = vmatmul.f32.gmra.mxu0 %v1274
    %v1293 = vpop.f32.mrf.mxu0
    %v1294 = vadd.f32 0.0, %v1293
    %1295 = vdwg.mxu0
    %v1296 = vadd.f32 %v1272, %v1294
    %v1297 = vmax.f32 %v1296, 0.0
    %v1298 = vld [vmem:[%s5] sm:$0xff]
    %v1299 = vld [vmem:[%s5 + $0x8] sm:$0xff]
    %v1300 = vld [vmem:[%s5 + $0x10] sm:$0xff]
    %v1301 = vld [vmem:[%s5 + $0x18] sm:$0xff]
    %v1302 = vld [vmem:[%s5 + $0x20] sm:$0xff]
    %v1303 = vld [vmem:[%s5 + $0x28] sm:$0xff]
    %v1304 = vld [vmem:[%s5 + $0x30] sm:$0xff]
    %v1305 = vld [vmem:[%s5 + $0x38] sm:$0xff]
    %v1306 = vld [vmem:[%s5 + $0x40] sm:$0xff]
    %v1307 = vld [vmem:[%s5 + $0x48] sm:$0xff]
    %v1308 = vld [vmem:[%s5 + $0x50] sm:$0xff]
    %v1309 = vld [vmem:[%s5 + $0x58] sm:$0xff]
    %v1310 = vld [vmem:[%s5 + $0x60] sm:$0xff]
    %v1311 = vld [vmem:[%s5 + $0x68] sm:$0xff]
    %v1312 = vld [vmem:[%s5 + $0x70] sm:$0xff]
    %v1313 = vld [vmem:[%s5 + $0x78] sm:$0xff]
    %v1315 = vsel %vm235, %v1297, 0
    %1317 = vmatpush.msra.mxu0 0.0
    %1318 = vmatpush.msra.mxu0 0.0
    %1319 = vmatpush.msra.mxu0 0.0
    %1320 = vmatpush.msra.mxu0 0.0
    %1321 = vmatpush.msra.mxu0 0.0
    %1322 = vmatpush.msra.mxu0 0.0
    %1323 = vmatpush.msra.mxu0 0.0
    %1324 = vmatpush.msra.mxu0 0.0
    %1325 = vmatpush.msra.mxu0 %v1312
    %1326 = vmatpush.msra.mxu0 %v1310
    %1327 = vmatpush.msra.mxu0 %v1308
    %1328 = vmatpush.msra.mxu0 %v1306
    %1329 = vmatpush.msra.mxu0 %v1304
    %1330 = vmatpush.msra.mxu0 %v1302
    %1331 = vmatpush.msra.mxu0 %v1300
    %1332 = vmatpush.msra.mxu0 %v1298
    %1333 = vmatmul.f32.gmra.mxu0 %v1315
    %v1334 = vpop.f32.mrf.mxu0
    %v1335 = vadd.f32 0.0, %v1334
    %1336 = vdwg.mxu0
    %1337 = vmatpush.msra.mxu0 0.0
    %1338 = vmatpush.msra.mxu0 0.0
    %1339 = vmatpush.msra.mxu0 0.0
    %1340 = vmatpush.msra.mxu0 0.0
    %1341 = vmatpush.msra.mxu0 0.0
    %1342 = vmatpush.msra.mxu0 0.0
    %1343 = vmatpush.msra.mxu0 0.0
    %1344 = vmatpush.msra.mxu0 0.0
    %1345 = vmatpush.msra.mxu0 %v1313
    %1346 = vmatpush.msra.mxu0 %v1311
    %1347 = vmatpush.msra.mxu0 %v1309
    %1348 = vmatpush.msra.mxu0 %v1307
    %1349 = vmatpush.msra.mxu0 %v1305
    %1350 = vmatpush.msra.mxu0 %v1303
    %1351 = vmatpush.msra.mxu0 %v1301
    %1352 = vmatpush.msra.mxu0 %v1299
    %1353 = vmatmul.f32.gmra.mxu0 %v1315
    %v1354 = vpop.f32.mrf.mxu0
    %v1355 = vadd.f32 0.0, %v1354
    %1356 = vdwg.mxu0
    %v1358 = vperm.slane %v1077, 0
    %v1359 = vperm.slane %v1077, 1
    %v1362 = vadd.f32 %v1358, %v1335
    %v1363 = vadd.f32 %v1359, %v1355
    %v1364 = vmax.f32 %v1362, 0.0
    %v1365 = vmax.f32 %v1363, 0.0
    %v1366 = vld [vmem:[%s7] sm:$0xff]
    %v1367 = vld [vmem:[%s7 + $0x8] sm:$0xff]
    %v1368 = vld [vmem:[%s7 + $0x10] sm:$0xff]
    %v1369 = vld [vmem:[%s7 + $0x18] sm:$0xff]
    %v1370 = vld [vmem:[%s7 + $0x20] sm:$0xff]
    %v1371 = vld [vmem:[%s7 + $0x28] sm:$0xff]
    %v1372 = vld [vmem:[%s7 + $0x30] sm:$0xff]
    %v1373 = vld [vmem:[%s7 + $0x38] sm:$0xff]
    %v1374 = vld [vmem:[%s7 + $0x40] sm:$0xff]
    %v1375 = vld [vmem:[%s7 + $0x48] sm:$0xff]
    %v1376 = vld [vmem:[%s7 + $0x50] sm:$0xff]
    %v1377 = vld [vmem:[%s7 + $0x58] sm:$0xff]
    %v1378 = vld [vmem:[%s7 + $0x60] sm:$0xff]
    %v1379 = vld [vmem:[%s7 + $0x68] sm:$0xff]
    %v1380 = vld [vmem:[%s7 + $0x70] sm:$0xff]
    %v1381 = vld [vmem:[%s7 + $0x78] sm:$0xff]
    %v1382 = vld [vmem:[%s7 + $0x80] sm:$0xff]
    %v1383 = vld [vmem:[%s7 + $0x88] sm:$0xff]
    %v1384 = vld [vmem:[%s7 + $0x90] sm:$0xff]
    %v1385 = vld [vmem:[%s7 + $0x98] sm:$0xff]
    %v1386 = vld [vmem:[%s7 + $0xa0] sm:$0xff]
    %v1387 = vld [vmem:[%s7 + $0xa8] sm:$0xff]
    %v1388 = vld [vmem:[%s7 + $0xb0] sm:$0xff]
    %v1389 = vld [vmem:[%s7 + $0xb8] sm:$0xff]
    %v1390 = vld [vmem:[%s7 + $0xc0] sm:$0xff]
    %v1391 = vld [vmem:[%s7 + $0xc8] sm:$0xff]
    %v1392 = vld [vmem:[%s7 + $0xd0] sm:$0xff]
    %v1393 = vld [vmem:[%s7 + $0xd8] sm:$0xff]
    %v1394 = vld [vmem:[%s7 + $0xe0] sm:$0xff]
    %v1395 = vld [vmem:[%s7 + $0xe8] sm:$0xff]
    %v1396 = vld [vmem:[%s7 + $0xf0] sm:$0xff]
    %v1397 = vld [vmem:[%s7 + $0xf8] sm:$0xff]
    %v1398 = vld [vmem:[%s7 + $0x100] sm:$0xff]
    %v1399 = vld [vmem:[%s7 + $0x108] sm:$0xff]
    %v1400 = vld [vmem:[%s7 + $0x110] sm:$0xff]
    %v1401 = vld [vmem:[%s7 + $0x118] sm:$0xff]
    %v1402 = vld [vmem:[%s7 + $0x120] sm:$0xff]
    %v1403 = vld [vmem:[%s7 + $0x128] sm:$0xff]
    %v1404 = vld [vmem:[%s7 + $0x130] sm:$0xff]
    %v1405 = vld [vmem:[%s7 + $0x138] sm:$0xff]
    %v1406 = vld [vmem:[%s7 + $0x140] sm:$0xff]
    %v1407 = vld [vmem:[%s7 + $0x148] sm:$0xff]
    %v1408 = vld [vmem:[%s7 + $0x150] sm:$0xff]
    %v1409 = vld [vmem:[%s7 + $0x158] sm:$0xff]
    %v1410 = vld [vmem:[%s7 + $0x160] sm:$0xff]
    %v1411 = vld [vmem:[%s7 + $0x168] sm:$0xff]
    %v1412 = vld [vmem:[%s7 + $0x170] sm:$0xff]
    %v1413 = vld [vmem:[%s7 + $0x178] sm:$0xff]
    %v1414 = vld [vmem:[%s7 + $0x180] sm:$0xff]
    %v1415 = vld [vmem:[%s7 + $0x188] sm:$0xff]
    %v1416 = vld [vmem:[%s7 + $0x190] sm:$0xff]
    %v1417 = vld [vmem:[%s7 + $0x198] sm:$0xff]
    %v1418 = vld [vmem:[%s7 + $0x1a0] sm:$0xff]
    %v1419 = vld [vmem:[%s7 + $0x1a8] sm:$0xff]
    %v1420 = vld [vmem:[%s7 + $0x1b0] sm:$0xff]
    %v1421 = vld [vmem:[%s7 + $0x1b8] sm:$0xff]
    %v1422 = vld [vmem:[%s7 + $0x1c0] sm:$0xff]
    %v1423 = vld [vmem:[%s7 + $0x1c8] sm:$0xff]
    %v1424 = vld [vmem:[%s7 + $0x1d0] sm:$0xff]
    %v1425 = vld [vmem:[%s7 + $0x1d8] sm:$0xff]
    %v1426 = vld [vmem:[%s7 + $0x1e0] sm:$0xff]
    %v1427 = vld [vmem:[%s7 + $0x1e8] sm:$0xff]
    %v1428 = vld [vmem:[%s7 + $0x1f0] sm:$0xff]
    %v1429 = vld [vmem:[%s7 + $0x1f8] sm:$0xff]
    %v1430 = vld [vmem:[%s7 + $0x200] sm:$0xff]
    %v1431 = vld [vmem:[%s7 + $0x208] sm:$0xff]
    %v1432 = vld [vmem:[%s7 + $0x210] sm:$0xff]
    %v1433 = vld [vmem:[%s7 + $0x218] sm:$0xff]
    %v1434 = vld [vmem:[%s7 + $0x220] sm:$0xff]
    %v1435 = vld [vmem:[%s7 + $0x228] sm:$0xff]
    %v1436 = vld [vmem:[%s7 + $0x230] sm:$0xff]
    %v1437 = vld [vmem:[%s7 + $0x238] sm:$0xff]
    %v1438 = vld [vmem:[%s7 + $0x240] sm:$0xff]
    %v1439 = vld [vmem:[%s7 + $0x248] sm:$0xff]
    %v1440 = vld [vmem:[%s7 + $0x250] sm:$0xff]
    %v1441 = vld [vmem:[%s7 + $0x258] sm:$0xff]
    %v1442 = vld [vmem:[%s7 + $0x260] sm:$0xff]
    %v1443 = vld [vmem:[%s7 + $0x268] sm:$0xff]
    %v1444 = vld [vmem:[%s7 + $0x270] sm:$0xff]
    %v1445 = vld [vmem:[%s7 + $0x278] sm:$0xff]
    %v1446 = vld [vmem:[%s7 + $0x280] sm:$0xff]
    %v1447 = vld [vmem:[%s7 + $0x288] sm:$0xff]
    %v1448 = vld [vmem:[%s7 + $0x290] sm:$0xff]
    %v1449 = vld [vmem:[%s7 + $0x298] sm:$0xff]
    %v1450 = vld [vmem:[%s7 + $0x2a0] sm:$0xff]
    %v1451 = vld [vmem:[%s7 + $0x2a8] sm:$0xff]
    %v1452 = vld [vmem:[%s7 + $0x2b0] sm:$0xff]
    %v1453 = vld [vmem:[%s7 + $0x2b8] sm:$0xff]
    %v1454 = vld [vmem:[%s7 + $0x2c0] sm:$0xff]
    %v1455 = vld [vmem:[%s7 + $0x2c8] sm:$0xff]
    %v1456 = vld [vmem:[%s7 + $0x2d0] sm:$0xff]
    %v1457 = vld [vmem:[%s7 + $0x2d8] sm:$0xff]
    %v1458 = vld [vmem:[%s7 + $0x2e0] sm:$0xff]
    %v1459 = vld [vmem:[%s7 + $0x2e8] sm:$0xff]
    %v1460 = vld [vmem:[%s7 + $0x2f0] sm:$0xff]
    %v1461 = vld [vmem:[%s7 + $0x2f8] sm:$0xff]
    %v1462 = vld [vmem:[%s7 + $0x300] sm:$0xff]
    %v1463 = vld [vmem:[%s7 + $0x308] sm:$0xff]
    %v1464 = vld [vmem:[%s7 + $0x310] sm:$0xff]
    %v1465 = vld [vmem:[%s7 + $0x318] sm:$0xff]
    %v1466 = vld [vmem:[%s7 + $0x320] sm:$0xff]
    %v1467 = vld [vmem:[%s7 + $0x328] sm:$0xff]
    %v1468 = vld [vmem:[%s7 + $0x330] sm:$0xff]
    %v1469 = vld [vmem:[%s7 + $0x338] sm:$0xff]
    %v1470 = vld [vmem:[%s7 + $0x340] sm:$0xff]
    %v1471 = vld [vmem:[%s7 + $0x348] sm:$0xff]
    %v1472 = vld [vmem:[%s7 + $0x350] sm:$0xff]
    %v1473 = vld [vmem:[%s7 + $0x358] sm:$0xff]
    %v1474 = vld [vmem:[%s7 + $0x360] sm:$0xff]
    %v1475 = vld [vmem:[%s7 + $0x368] sm:$0xff]
    %v1476 = vld [vmem:[%s7 + $0x370] sm:$0xff]
    %v1477 = vld [vmem:[%s7 + $0x378] sm:$0xff]
    %v1478 = vld [vmem:[%s7 + $0x380] sm:$0xff]
    %v1479 = vld [vmem:[%s7 + $0x388] sm:$0xff]
    %v1480 = vld [vmem:[%s7 + $0x390] sm:$0xff]
    %v1481 = vld [vmem:[%s7 + $0x398] sm:$0xff]
    %v1482 = vld [vmem:[%s7 + $0x3a0] sm:$0xff]
    %v1483 = vld [vmem:[%s7 + $0x3a8] sm:$0xff]
    %v1484 = vld [vmem:[%s7 + $0x3b0] sm:$0xff]
    %v1485 = vld [vmem:[%s7 + $0x3b8] sm:$0xff]
    %v1486 = vld [vmem:[%s7 + $0x3c0] sm:$0xff]
    %v1487 = vld [vmem:[%s7 + $0x3c8] sm:$0xff]
    %v1488 = vld [vmem:[%s7 + $0x3d0] sm:$0xff]
    %v1489 = vld [vmem:[%s7 + $0x3d8] sm:$0xff]
    %v1490 = vld [vmem:[%s7 + $0x3e0] sm:$0xff]
    %v1491 = vld [vmem:[%s7 + $0x3e8] sm:$0xff]
    %v1492 = vld [vmem:[%s7 + $0x3f0] sm:$0xff]
    %v1493 = vld [vmem:[%s7 + $0x3f8] sm:$0xff]
    %v1494 = vld [vmem:[%s8] sm:$0xf]
    %v1496 = vperm.slane %v1494, 0
    %v1497 = vperm.slane %v1494, 1
    %v1498 = vperm.slane %v1494, 2
    %v1499 = vperm.slane %v1494, 3
    %1504 = vmatpush.msra.mxu0 %v1426
    %1505 = vmatpush.msra.mxu0 %v1422
    %1506 = vmatpush.msra.mxu0 %v1418
    %1507 = vmatpush.msra.mxu0 %v1414
    %1508 = vmatpush.msra.mxu0 %v1410
    %1509 = vmatpush.msra.mxu0 %v1406
    %1510 = vmatpush.msra.mxu0 %v1402
    %1511 = vmatpush.msra.mxu0 %v1398
    %1512 = vmatpush.msra.mxu0 %v1394
    %1513 = vmatpush.msra.mxu0 %v1390
    %1514 = vmatpush.msra.mxu0 %v1386
    %1515 = vmatpush.msra.mxu0 %v1382
    %1516 = vmatpush.msra.mxu0 %v1378
    %1517 = vmatpush.msra.mxu0 %v1374
    %1518 = vmatpush.msra.mxu0 %v1370
    %1519 = vmatpush.msra.mxu0 %v1366
    %1520 = vmatmul.f32.gmra.mxu0 %v1364
    %v1521 = vpop.f32.mrf.mxu0
    %v1522 = vadd.f32 %v1496, %v1521
    %1523 = vdwg.mxu0
    %1524 = vmatpush.msra.mxu0 %v1490
    %1525 = vmatpush.msra.mxu0 %v1486
    %1526 = vmatpush.msra.mxu0 %v1482
    %1527 = vmatpush.msra.mxu0 %v1478
    %1528 = vmatpush.msra.mxu0 %v1474
    %1529 = vmatpush.msra.mxu0 %v1470
    %1530 = vmatpush.msra.mxu0 %v1466
    %1531 = vmatpush.msra.mxu0 %v1462
    %1532 = vmatpush.msra.mxu0 %v1458
    %1533 = vmatpush.msra.mxu0 %v1454
    %1534 = vmatpush.msra.mxu0 %v1450
    %1535 = vmatpush.msra.mxu0 %v1446
    %1536 = vmatpush.msra.mxu0 %v1442
    %1537 = vmatpush.msra.mxu0 %v1438
    %1538 = vmatpush.msra.mxu0 %v1434
    %1539 = vmatpush.msra.mxu0 %v1430
    %1540 = vmatmul.f32.gmra.mxu0 %v1365
    %v1541 = vpop.f32.mrf.mxu0
    %v1542 = vadd.f32 %v1522, %v1541
    %1543 = vdwg.mxu0
    %1544 = vmatpush.msra.mxu0 %v1427
    %1545 = vmatpush.msra.mxu0 %v1423
    %1546 = vmatpush.msra.mxu0 %v1419
    %1547 = vmatpush.msra.mxu0 %v1415
    %1548 = vmatpush.msra.mxu0 %v1411
    %1549 = vmatpush.msra.mxu0 %v1407
    %1550 = vmatpush.msra.mxu0 %v1403
    %1551 = vmatpush.msra.mxu0 %v1399
    %1552 = vmatpush.msra.mxu0 %v1395
    %1553 = vmatpush.msra.mxu0 %v1391
    %1554 = vmatpush.msra.mxu0 %v1387
    %1555 = vmatpush.msra.mxu0 %v1383
    %1556 = vmatpush.msra.mxu0 %v1379
    %1557 = vmatpush.msra.mxu0 %v1375
    %1558 = vmatpush.msra.mxu0 %v1371
    %1559 = vmatpush.msra.mxu0 %v1367
    %1560 = vmatmul.f32.gmra.mxu0 %v1364
    %v1561 = vpop.f32.mrf.mxu0
    %v1562 = vadd.f32 %v1497, %v1561
    %1563 = vdwg.mxu0
    %1564 = vmatpush.msra.mxu0 %v1491
    %1565 = vmatpush.msra.mxu0 %v1487
    %1566 = vmatpush.msra.mxu0 %v1483
    %1567 = vmatpush.msra.mxu0 %v1479
    %1568 = vmatpush.msra.mxu0 %v1475
    %1569 = vmatpush.msra.mxu0 %v1471
    %1570 = vmatpush.msra.mxu0 %v1467
    %1571 = vmatpush.msra.mxu0 %v1463
    %1572 = vmatpush.msra.mxu0 %v1459
    %1573 = vmatpush.msra.mxu0 %v1455
    %1574 = vmatpush.msra.mxu0 %v1451
    %1575 = vmatpush.msra.mxu0 %v1447
    %1576 = vmatpush.msra.mxu0 %v1443
    %1577 = vmatpush.msra.mxu0 %v1439
    %1578 = vmatpush.msra.mxu0 %v1435
    %1579 = vmatpush.msra.mxu0 %v1431
    %1580 = vmatmul.f32.gmra.mxu0 %v1365
    %v1581 = vpop.f32.mrf.mxu0
    %v1582 = vadd.f32 %v1562, %v1581
    %1583 = vdwg.mxu0
    %1584 = vmatpush.msra.mxu0 %v1428
    %1585 = vmatpush.msra.mxu0 %v1424
    %1586 = vmatpush.msra.mxu0 %v1420
    %1587 = vmatpush.msra.mxu0 %v1416
    %1588 = vmatpush.msra.mxu0 %v1412
    %1589 = vmatpush.msra.mxu0 %v1408
    %1590 = vmatpush.msra.mxu0 %v1404
    %1591 = vmatpush.msra.mxu0 %v1400
    %1592 = vmatpush.msra.mxu0 %v1396
    %1593 = vmatpush.msra.mxu0 %v1392
    %1594 = vmatpush.msra.mxu0 %v1388
    %1595 = vmatpush.msra.mxu0 %v1384
    %1596 = vmatpush.msra.mxu0 %v1380
    %1597 = vmatpush.msra.mxu0 %v1376
    %1598 = vmatpush.msra.mxu0 %v1372
    %1599 = vmatpush.msra.mxu0 %v1368
    %1600 = vmatmul.f32.gmra.mxu0 %v1364
    %v1601 = vpop.f32.mrf.mxu0
    %v1602 = vadd.f32 %v1498, %v1601
    %1603 = vdwg.mxu0
    %1604 = vmatpush.msra.mxu0 %v1492
    %1605 = vmatpush.msra.mxu0 %v1488
    %1606 = vmatpush.msra.mxu0 %v1484
    %1607 = vmatpush.msra.mxu0 %v1480
    %1608 = vmatpush.msra.mxu0 %v1476
    %1609 = vmatpush.msra.mxu0 %v1472
    %1610 = vmatpush.msra.mxu0 %v1468
    %1611 = vmatpush.msra.mxu0 %v1464
    %1612 = vmatpush.msra.mxu0 %v1460
    %1613 = vmatpush.msra.mxu0 %v1456
    %1614 = vmatpush.msra.mxu0 %v1452
    %1615 = vmatpush.msra.mxu0 %v1448
    %1616 = vmatpush.msra.mxu0 %v1444
    %1617 = vmatpush.msra.mxu0 %v1440
    %1618 = vmatpush.msra.mxu0 %v1436
    %1619 = vmatpush.msra.mxu0 %v1432
    %1620 = vmatmul.f32.gmra.mxu0 %v1365
    %v1621 = vpop.f32.mrf.mxu0
    %v1622 = vadd.f32 %v1602, %v1621
    %1623 = vdwg.mxu0
    %1624 = vmatpush.msra.mxu0 %v1429
    %1625 = vmatpush.msra.mxu0 %v1425
    %1626 = vmatpush.msra.mxu0 %v1421
    %1627 = vmatpush.msra.mxu0 %v1417
    %1628 = vmatpush.msra.mxu0 %v1413
    %1629 = vmatpush.msra.mxu0 %v1409
    %1630 = vmatpush.msra.mxu0 %v1405
    %1631 = vmatpush.msra.mxu0 %v1401
    %1632 = vmatpush.msra.mxu0 %v1397
    %1633 = vmatpush.msra.mxu0 %v1393
    %1634 = vmatpush.msra.mxu0 %v1389
    %1635 = vmatpush.msra.mxu0 %v1385
    %1636 = vmatpush.msra.mxu0 %v1381
    %1637 = vmatpush.msra.mxu0 %v1377
    %1638 = vmatpush.msra.mxu0 %v1373
    %1639 = vmatpush.msra.mxu0 %v1369
    %1640 = vmatmul.f32.gmra.mxu0 %v1364
    %v1641 = vpop.f32.mrf.mxu0
    %v1642 = vadd.f32 %v1499, %v1641
    %1643 = vdwg.mxu0
    %1644 = vmatpush.msra.mxu0 %v1493
    %1645 = vmatpush.msra.mxu0 %v1489
    %1646 = vmatpush.msra.mxu0 %v1485
    %1647 = vmatpush.msra.mxu0 %v1481
    %1648 = vmatpush.msra.mxu0 %v1477
    %1649 = vmatpush.msra.mxu0 %v1473
    %1650 = vmatpush.msra.mxu0 %v1469
    %1651 = vmatpush.msra.mxu0 %v1465
    %1652 = vmatpush.msra.mxu0 %v1461
    %1653 = vmatpush.msra.mxu0 %v1457
    %1654 = vmatpush.msra.mxu0 %v1453
    %1655 = vmatpush.msra.mxu0 %v1449
    %1656 = vmatpush.msra.mxu0 %v1445
    %1657 = vmatpush.msra.mxu0 %v1441
    %1658 = vmatpush.msra.mxu0 %v1437
    %1659 = vmatpush.msra.mxu0 %v1433
    %1660 = vmatmul.f32.gmra.mxu0 %v1365
    %v1661 = vpop.f32.mrf.mxu0
    %v1662 = vadd.f32 %v1642, %v1661
    %1663 = vdwg.mxu0
    %v1664 = vmax.f32 %v1542, 0.0
    %v1665 = vmax.f32 %v1582, 0.0
    %v1666 = vmax.f32 %v1622, 0.0
    %v1667 = vmax.f32 %v1662, 0.0
    %v1668 = vld [vmem:[%s9] sm:$0xff]
    %v1669 = vld [vmem:[%s9 + $0x8] sm:$0xff]
    %v1670 = vld [vmem:[%s9 + $0x10] sm:$0xff]
    %v1671 = vld [vmem:[%s9 + $0x18] sm:$0xff]
    %v1672 = vld [vmem:[%s9 + $0x20] sm:$0xff]
    %v1673 = vld [vmem:[%s9 + $0x28] sm:$0xff]
    %v1674 = vld [vmem:[%s9 + $0x30] sm:$0xff]
    %v1675 = vld [vmem:[%s9 + $0x38] sm:$0xff]
    %v1676 = vld [vmem:[%s9 + $0x40] sm:$0xff]
    %v1677 = vld [vmem:[%s9 + $0x48] sm:$0xff]
    %v1678 = vld [vmem:[%s9 + $0x50] sm:$0xff]
    %v1679 = vld [vmem:[%s9 + $0x58] sm:$0xff]
    %v1680 = vld [vmem:[%s9 + $0x60] sm:$0xff]
    %v1681 = vld [vmem:[%s9 + $0x68] sm:$0xff]
    %v1682 = vld [vmem:[%s9 + $0x70] sm:$0xff]
    %v1683 = vld [vmem:[%s9 + $0x78] sm:$0xff]
    %v1684 = vld [vmem:[%s9 + $0x80] sm:$0xff]
    %v1685 = vld [vmem:[%s9 + $0x88] sm:$0xff]
    %v1686 = vld [vmem:[%s9 + $0x90] sm:$0xff]
    %v1687 = vld [vmem:[%s9 + $0x98] sm:$0xff]
    %v1688 = vld [vmem:[%s9 + $0xa0] sm:$0xff]
    %v1689 = vld [vmem:[%s9 + $0xa8] sm:$0xff]
    %v1690 = vld [vmem:[%s9 + $0xb0] sm:$0xff]
    %v1691 = vld [vmem:[%s9 + $0xb8] sm:$0xff]
    %v1692 = vld [vmem:[%s9 + $0xc0] sm:$0xff]
    %v1693 = vld [vmem:[%s9 + $0xc8] sm:$0xff]
    %v1694 = vld [vmem:[%s9 + $0xd0] sm:$0xff]
    %v1695 = vld [vmem:[%s9 + $0xd8] sm:$0xff]
    %v1696 = vld [vmem:[%s9 + $0xe0] sm:$0xff]
    %v1697 = vld [vmem:[%s9 + $0xe8] sm:$0xff]
    %v1698 = vld [vmem:[%s9 + $0xf0] sm:$0xff]
    %v1699 = vld [vmem:[%s9 + $0xf8] sm:$0xff]
    %v1700 = vld [vmem:[%s9 + $0x100] sm:$0xff]
    %v1701 = vld [vmem:[%s9 + $0x108] sm:$0xff]
    %v1702 = vld [vmem:[%s9 + $0x110] sm:$0xff]
    %v1703 = vld [vmem:[%s9 + $0x118] sm:$0xff]
    %v1704 = vld [vmem:[%s9 + $0x120] sm:$0xff]
    %v1705 = vld [vmem:[%s9 + $0x128] sm:$0xff]
    %v1706 = vld [vmem:[%s9 + $0x130] sm:$0xff]
    %v1707 = vld [vmem:[%s9 + $0x138] sm:$0xff]
    %v1708 = vld [vmem:[%s9 + $0x140] sm:$0xff]
    %v1709 = vld [vmem:[%s9 + $0x148] sm:$0xff]
    %v1710 = vld [vmem:[%s9 + $0x150] sm:$0xff]
    %v1711 = vld [vmem:[%s9 + $0x158] sm:$0xff]
    %v1712 = vld [vmem:[%s9 + $0x160] sm:$0xff]
    %v1713 = vld [vmem:[%s9 + $0x168] sm:$0xff]
    %v1714 = vld [vmem:[%s9 + $0x170] sm:$0xff]
    %v1715 = vld [vmem:[%s9 + $0x178] sm:$0xff]
    %v1716 = vld [vmem:[%s9 + $0x180] sm:$0xff]
    %v1717 = vld [vmem:[%s9 + $0x188] sm:$0xff]
    %v1718 = vld [vmem:[%s9 + $0x190] sm:$0xff]
    %v1719 = vld [vmem:[%s9 + $0x198] sm:$0xff]
    %v1720 = vld [vmem:[%s9 + $0x1a0] sm:$0xff]
    %v1721 = vld [vmem:[%s9 + $0x1a8] sm:$0xff]
    %v1722 = vld [vmem:[%s9 + $0x1b0] sm:$0xff]
    %v1723 = vld [vmem:[%s9 + $0x1b8] sm:$0xff]
    %v1724 = vld [vmem:[%s9 + $0x1c0] sm:$0xff]
    %v1725 = vld [vmem:[%s9 + $0x1c8] sm:$0xff]
    %v1726 = vld [vmem:[%s9 + $0x1d0] sm:$0xff]
    %v1727 = vld [vmem:[%s9 + $0x1d8] sm:$0xff]
    %v1728 = vld [vmem:[%s9 + $0x1e0] sm:$0xff]
    %v1729 = vld [vmem:[%s9 + $0x1e8] sm:$0xff]
    %v1730 = vld [vmem:[%s9 + $0x1f0] sm:$0xff]
    %v1731 = vld [vmem:[%s9 + $0x1f8] sm:$0xff]
    %v1732 = vld [vmem:[%s9 + $0x200] sm:$0xff]
    %v1733 = vld [vmem:[%s9 + $0x208] sm:$0xff]
    %v1734 = vld [vmem:[%s9 + $0x210] sm:$0xff]
    %v1735 = vld [vmem:[%s9 + $0x218] sm:$0xff]
    %v1736 = vld [vmem:[%s9 + $0x220] sm:$0xff]
    %v1737 = vld [vmem:[%s9 + $0x228] sm:$0xff]
    %v1738 = vld [vmem:[%s9 + $0x230] sm:$0xff]
    %v1739 = vld [vmem:[%s9 + $0x238] sm:$0xff]
    %v1740 = vld [vmem:[%s9 + $0x240] sm:$0xff]
    %v1741 = vld [vmem:[%s9 + $0x248] sm:$0xff]
    %v1742 = vld [vmem:[%s9 + $0x250] sm:$0xff]
    %v1743 = vld [vmem:[%s9 + $0x258] sm:$0xff]
    %v1744 = vld [vmem:[%s9 + $0x260] sm:$0xff]
    %v1745 = vld [vmem:[%s9 + $0x268] sm:$0xff]
    %v1746 = vld [vmem:[%s9 + $0x270] sm:$0xff]
    %v1747 = vld [vmem:[%s9 + $0x278] sm:$0xff]
    %v1748 = vld [vmem:[%s9 + $0x280] sm:$0xff]
    %v1749 = vld [vmem:[%s9 + $0x288] sm:$0xff]
    %v1750 = vld [vmem:[%s9 + $0x290] sm:$0xff]
    %v1751 = vld [vmem:[%s9 + $0x298] sm:$0xff]
    %v1752 = vld [vmem:[%s9 + $0x2a0] sm:$0xff]
    %v1753 = vld [vmem:[%s9 + $0x2a8] sm:$0xff]
    %v1754 = vld [vmem:[%s9 + $0x2b0] sm:$0xff]
    %v1755 = vld [vmem:[%s9 + $0x2b8] sm:$0xff]
    %v1756 = vld [vmem:[%s9 + $0x2c0] sm:$0xff]
    %v1757 = vld [vmem:[%s9 + $0x2c8] sm:$0xff]
    %v1758 = vld [vmem:[%s9 + $0x2d0] sm:$0xff]
    %v1759 = vld [vmem:[%s9 + $0x2d8] sm:$0xff]
    %v1760 = vld [vmem:[%s9 + $0x2e0] sm:$0xff]
    %v1761 = vld [vmem:[%s9 + $0x2e8] sm:$0xff]
    %v1762 = vld [vmem:[%s9 + $0x2f0] sm:$0xff]
    %v1763 = vld [vmem:[%s9 + $0x2f8] sm:$0xff]
    %v1764 = vld [vmem:[%s9 + $0x300] sm:$0xff]
    %v1765 = vld [vmem:[%s9 + $0x308] sm:$0xff]
    %v1766 = vld [vmem:[%s9 + $0x310] sm:$0xff]
    %v1767 = vld [vmem:[%s9 + $0x318] sm:$0xff]
    %v1768 = vld [vmem:[%s9 + $0x320] sm:$0xff]
    %v1769 = vld [vmem:[%s9 + $0x328] sm:$0xff]
    %v1770 = vld [vmem:[%s9 + $0x330] sm:$0xff]
    %v1771 = vld [vmem:[%s9 + $0x338] sm:$0xff]
    %v1772 = vld [vmem:[%s9 + $0x340] sm:$0xff]
    %v1773 = vld [vmem:[%s9 + $0x348] sm:$0xff]
    %v1774 = vld [vmem:[%s9 + $0x350] sm:$0xff]
    %v1775 = vld [vmem:[%s9 + $0x358] sm:$0xff]
    %v1776 = vld [vmem:[%s9 + $0x360] sm:$0xff]
    %v1777 = vld [vmem:[%s9 + $0x368] sm:$0xff]
    %v1778 = vld [vmem:[%s9 + $0x370] sm:$0xff]
    %v1779 = vld [vmem:[%s9 + $0x378] sm:$0xff]
    %v1780 = vld [vmem:[%s9 + $0x380] sm:$0xff]
    %v1781 = vld [vmem:[%s9 + $0x388] sm:$0xff]
    %v1782 = vld [vmem:[%s9 + $0x390] sm:$0xff]
    %v1783 = vld [vmem:[%s9 + $0x398] sm:$0xff]
    %v1784 = vld [vmem:[%s9 + $0x3a0] sm:$0xff]
    %v1785 = vld [vmem:[%s9 + $0x3a8] sm:$0xff]
    %v1786 = vld [vmem:[%s9 + $0x3b0] sm:$0xff]
    %v1787 = vld [vmem:[%s9 + $0x3b8] sm:$0xff]
    %v1788 = vld [vmem:[%s9 + $0x3c0] sm:$0xff]
    %v1789 = vld [vmem:[%s9 + $0x3c8] sm:$0xff]
    %v1790 = vld [vmem:[%s9 + $0x3d0] sm:$0xff]
    %v1791 = vld [vmem:[%s9 + $0x3d8] sm:$0xff]
    %v1792 = vld [vmem:[%s9 + $0x3e0] sm:$0xff]
    %v1793 = vld [vmem:[%s9 + $0x3e8] sm:$0xff]
    %v1794 = vld [vmem:[%s9 + $0x3f0] sm:$0xff]
    %v1795 = vld [vmem:[%s9 + $0x3f8] sm:$0xff]
    %v1796 = vld [vmem:[%s9 + $0x400] sm:$0xff]
    %v1797 = vld [vmem:[%s9 + $0x408] sm:$0xff]
    %v1798 = vld [vmem:[%s9 + $0x410] sm:$0xff]
    %v1799 = vld [vmem:[%s9 + $0x418] sm:$0xff]
    %v1800 = vld [vmem:[%s9 + $0x420] sm:$0xff]
    %v1801 = vld [vmem:[%s9 + $0x428] sm:$0xff]
    %v1802 = vld [vmem:[%s9 + $0x430] sm:$0xff]
    %v1803 = vld [vmem:[%s9 + $0x438] sm:$0xff]
    %v1804 = vld [vmem:[%s9 + $0x440] sm:$0xff]
    %v1805 = vld [vmem:[%s9 + $0x448] sm:$0xff]
    %v1806 = vld [vmem:[%s9 + $0x450] sm:$0xff]
    %v1807 = vld [vmem:[%s9 + $0x458] sm:$0xff]
    %v1808 = vld [vmem:[%s9 + $0x460] sm:$0xff]
    %v1809 = vld [vmem:[%s9 + $0x468] sm:$0xff]
    %v1810 = vld [vmem:[%s9 + $0x470] sm:$0xff]
    %v1811 = vld [vmem:[%s9 + $0x478] sm:$0xff]
    %v1812 = vld [vmem:[%s9 + $0x480] sm:$0xff]
    %v1813 = vld [vmem:[%s9 + $0x488] sm:$0xff]
    %v1814 = vld [vmem:[%s9 + $0x490] sm:$0xff]
    %v1815 = vld [vmem:[%s9 + $0x498] sm:$0xff]
    %v1816 = vld [vmem:[%s9 + $0x4a0] sm:$0xff]
    %v1817 = vld [vmem:[%s9 + $0x4a8] sm:$0xff]
    %v1818 = vld [vmem:[%s9 + $0x4b0] sm:$0xff]
    %v1819 = vld [vmem:[%s9 + $0x4b8] sm:$0xff]
    %v1820 = vld [vmem:[%s9 + $0x4c0] sm:$0xff]
    %v1821 = vld [vmem:[%s9 + $0x4c8] sm:$0xff]
    %v1822 = vld [vmem:[%s9 + $0x4d0] sm:$0xff]
    %v1823 = vld [vmem:[%s9 + $0x4d8] sm:$0xff]
    %v1824 = vld [vmem:[%s9 + $0x4e0] sm:$0xff]
    %v1825 = vld [vmem:[%s9 + $0x4e8] sm:$0xff]
    %v1826 = vld [vmem:[%s9 + $0x4f0] sm:$0xff]
    %v1827 = vld [vmem:[%s9 + $0x4f8] sm:$0xff]
    %v1828 = vld [vmem:[%s9 + $0x500] sm:$0xff]
    %v1829 = vld [vmem:[%s9 + $0x508] sm:$0xff]
    %v1830 = vld [vmem:[%s9 + $0x510] sm:$0xff]
    %v1831 = vld [vmem:[%s9 + $0x518] sm:$0xff]
    %v1832 = vld [vmem:[%s9 + $0x520] sm:$0xff]
    %v1833 = vld [vmem:[%s9 + $0x528] sm:$0xff]
    %v1834 = vld [vmem:[%s9 + $0x530] sm:$0xff]
    %v1835 = vld [vmem:[%s9 + $0x538] sm:$0xff]
    %v1836 = vld [vmem:[%s9 + $0x540] sm:$0xff]
    %v1837 = vld [vmem:[%s9 + $0x548] sm:$0xff]
    %v1838 = vld [vmem:[%s9 + $0x550] sm:$0xff]
    %v1839 = vld [vmem:[%s9 + $0x558] sm:$0xff]
    %v1840 = vld [vmem:[%s9 + $0x560] sm:$0xff]
    %v1841 = vld [vmem:[%s9 + $0x568] sm:$0xff]
    %v1842 = vld [vmem:[%s9 + $0x570] sm:$0xff]
    %v1843 = vld [vmem:[%s9 + $0x578] sm:$0xff]
    %v1844 = vld [vmem:[%s9 + $0x580] sm:$0xff]
    %v1845 = vld [vmem:[%s9 + $0x588] sm:$0xff]
    %v1846 = vld [vmem:[%s9 + $0x590] sm:$0xff]
    %v1847 = vld [vmem:[%s9 + $0x598] sm:$0xff]
    %v1848 = vld [vmem:[%s9 + $0x5a0] sm:$0xff]
    %v1849 = vld [vmem:[%s9 + $0x5a8] sm:$0xff]
    %v1850 = vld [vmem:[%s9 + $0x5b0] sm:$0xff]
    %v1851 = vld [vmem:[%s9 + $0x5b8] sm:$0xff]
    %v1852 = vld [vmem:[%s9 + $0x5c0] sm:$0xff]
    %v1853 = vld [vmem:[%s9 + $0x5c8] sm:$0xff]
    %v1854 = vld [vmem:[%s9 + $0x5d0] sm:$0xff]
    %v1855 = vld [vmem:[%s9 + $0x5d8] sm:$0xff]
    %v1856 = vld [vmem:[%s9 + $0x5e0] sm:$0xff]
    %v1857 = vld [vmem:[%s9 + $0x5e8] sm:$0xff]
    %v1858 = vld [vmem:[%s9 + $0x5f0] sm:$0xff]
    %v1859 = vld [vmem:[%s9 + $0x5f8] sm:$0xff]
    %v1860 = vld [vmem:[%s9 + $0x600] sm:$0xff]
    %v1861 = vld [vmem:[%s9 + $0x608] sm:$0xff]
    %v1862 = vld [vmem:[%s9 + $0x610] sm:$0xff]
    %v1863 = vld [vmem:[%s9 + $0x618] sm:$0xff]
    %v1864 = vld [vmem:[%s9 + $0x620] sm:$0xff]
    %v1865 = vld [vmem:[%s9 + $0x628] sm:$0xff]
    %v1866 = vld [vmem:[%s9 + $0x630] sm:$0xff]
    %v1867 = vld [vmem:[%s9 + $0x638] sm:$0xff]
    %v1868 = vld [vmem:[%s9 + $0x640] sm:$0xff]
    %v1869 = vld [vmem:[%s9 + $0x648] sm:$0xff]
    %v1870 = vld [vmem:[%s9 + $0x650] sm:$0xff]
    %v1871 = vld [vmem:[%s9 + $0x658] sm:$0xff]
    %v1872 = vld [vmem:[%s9 + $0x660] sm:$0xff]
    %v1873 = vld [vmem:[%s9 + $0x668] sm:$0xff]
    %v1874 = vld [vmem:[%s9 + $0x670] sm:$0xff]
    %v1875 = vld [vmem:[%s9 + $0x678] sm:$0xff]
    %v1876 = vld [vmem:[%s9 + $0x680] sm:$0xff]
    %v1877 = vld [vmem:[%s9 + $0x688] sm:$0xff]
    %v1878 = vld [vmem:[%s9 + $0x690] sm:$0xff]
    %v1879 = vld [vmem:[%s9 + $0x698] sm:$0xff]
    %v1880 = vld [vmem:[%s9 + $0x6a0] sm:$0xff]
    %v1881 = vld [vmem:[%s9 + $0x6a8] sm:$0xff]
    %v1882 = vld [vmem:[%s9 + $0x6b0] sm:$0xff]
    %v1883 = vld [vmem:[%s9 + $0x6b8] sm:$0xff]
    %v1884 = vld [vmem:[%s9 + $0x6c0] sm:$0xff]
    %v1885 = vld [vmem:[%s9 + $0x6c8] sm:$0xff]
    %v1886 = vld [vmem:[%s9 + $0x6d0] sm:$0xff]
    %v1887 = vld [vmem:[%s9 + $0x6d8] sm:$0xff]
    %v1888 = vld [vmem:[%s9 + $0x6e0] sm:$0xff]
    %v1889 = vld [vmem:[%s9 + $0x6e8] sm:$0xff]
    %v1890 = vld [vmem:[%s9 + $0x6f0] sm:$0xff]
    %v1891 = vld [vmem:[%s9 + $0x6f8] sm:$0xff]
    %v1892 = vld [vmem:[%s9 + $0x700] sm:$0xff]
    %v1893 = vld [vmem:[%s9 + $0x708] sm:$0xff]
    %v1894 = vld [vmem:[%s9 + $0x710] sm:$0xff]
    %v1895 = vld [vmem:[%s9 + $0x718] sm:$0xff]
    %v1896 = vld [vmem:[%s9 + $0x720] sm:$0xff]
    %v1897 = vld [vmem:[%s9 + $0x728] sm:$0xff]
    %v1898 = vld [vmem:[%s9 + $0x730] sm:$0xff]
    %v1899 = vld [vmem:[%s9 + $0x738] sm:$0xff]
    %v1900 = vld [vmem:[%s9 + $0x740] sm:$0xff]
    %v1901 = vld [vmem:[%s9 + $0x748] sm:$0xff]
    %v1902 = vld [vmem:[%s9 + $0x750] sm:$0xff]
    %v1903 = vld [vmem:[%s9 + $0x758] sm:$0xff]
    %v1904 = vld [vmem:[%s9 + $0x760] sm:$0xff]
    %v1905 = vld [vmem:[%s9 + $0x768] sm:$0xff]
    %v1906 = vld [vmem:[%s9 + $0x770] sm:$0xff]
    %v1907 = vld [vmem:[%s9 + $0x778] sm:$0xff]
    %v1908 = vld [vmem:[%s9 + $0x780] sm:$0xff]
    %v1909 = vld [vmem:[%s9 + $0x788] sm:$0xff]
    %v1910 = vld [vmem:[%s9 + $0x790] sm:$0xff]
    %v1911 = vld [vmem:[%s9 + $0x798] sm:$0xff]
    %v1912 = vld [vmem:[%s9 + $0x7a0] sm:$0xff]
    %v1913 = vld [vmem:[%s9 + $0x7a8] sm:$0xff]
    %v1914 = vld [vmem:[%s9 + $0x7b0] sm:$0xff]
    %v1915 = vld [vmem:[%s9 + $0x7b8] sm:$0xff]
    %v1916 = vld [vmem:[%s9 + $0x7c0] sm:$0xff]
    %v1917 = vld [vmem:[%s9 + $0x7c8] sm:$0xff]
    %v1918 = vld [vmem:[%s9 + $0x7d0] sm:$0xff]
    %v1919 = vld [vmem:[%s9 + $0x7d8] sm:$0xff]
    %v1920 = vld [vmem:[%s9 + $0x7e0] sm:$0xff]
    %v1921 = vld [vmem:[%s9 + $0x7e8] sm:$0xff]
    %v1922 = vld [vmem:[%s9 + $0x7f0] sm:$0xff]
    %v1923 = vld [vmem:[%s9 + $0x7f8] sm:$0xff]
    %v1924 = vld [vmem:[%s9 + $0x800] sm:$0xff]
    %v1925 = vld [vmem:[%s9 + $0x808] sm:$0xff]
    %v1926 = vld [vmem:[%s9 + $0x810] sm:$0xff]
    %v1927 = vld [vmem:[%s9 + $0x818] sm:$0xff]
    %v1928 = vld [vmem:[%s9 + $0x820] sm:$0xff]
    %v1929 = vld [vmem:[%s9 + $0x828] sm:$0xff]
    %v1930 = vld [vmem:[%s9 + $0x830] sm:$0xff]
    %v1931 = vld [vmem:[%s9 + $0x838] sm:$0xff]
    %v1932 = vld [vmem:[%s9 + $0x840] sm:$0xff]
    %v1933 = vld [vmem:[%s9 + $0x848] sm:$0xff]
    %v1934 = vld [vmem:[%s9 + $0x850] sm:$0xff]
    %v1935 = vld [vmem:[%s9 + $0x858] sm:$0xff]
    %v1936 = vld [vmem:[%s9 + $0x860] sm:$0xff]
    %v1937 = vld [vmem:[%s9 + $0x868] sm:$0xff]
    %v1938 = vld [vmem:[%s9 + $0x870] sm:$0xff]
    %v1939 = vld [vmem:[%s9 + $0x878] sm:$0xff]
    %v1940 = vld [vmem:[%s9 + $0x880] sm:$0xff]
    %v1941 = vld [vmem:[%s9 + $0x888] sm:$0xff]
    %v1942 = vld [vmem:[%s9 + $0x890] sm:$0xff]
    %v1943 = vld [vmem:[%s9 + $0x898] sm:$0xff]
    %v1944 = vld [vmem:[%s9 + $0x8a0] sm:$0xff]
    %v1945 = vld [vmem:[%s9 + $0x8a8] sm:$0xff]
    %v1946 = vld [vmem:[%s9 + $0x8b0] sm:$0xff]
    %v1947 = vld [vmem:[%s9 + $0x8b8] sm:$0xff]
    %v1948 = vld [vmem:[%s9 + $0x8c0] sm:$0xff]
    %v1949 = vld [vmem:[%s9 + $0x8c8] sm:$0xff]
    %v1950 = vld [vmem:[%s9 + $0x8d0] sm:$0xff]
    %v1951 = vld [vmem:[%s9 + $0x8d8] sm:$0xff]
    %v1952 = vld [vmem:[%s9 + $0x8e0] sm:$0xff]
    %v1953 = vld [vmem:[%s9 + $0x8e8] sm:$0xff]
    %v1954 = vld [vmem:[%s9 + $0x8f0] sm:$0xff]
    %v1955 = vld [vmem:[%s9 + $0x8f8] sm:$0xff]
    %v1956 = vld [vmem:[%s9 + $0x900] sm:$0xff]
    %v1957 = vld [vmem:[%s9 + $0x908] sm:$0xff]
    %v1958 = vld [vmem:[%s9 + $0x910] sm:$0xff]
    %v1959 = vld [vmem:[%s9 + $0x918] sm:$0xff]
    %v1960 = vld [vmem:[%s9 + $0x920] sm:$0xff]
    %v1961 = vld [vmem:[%s9 + $0x928] sm:$0xff]
    %v1962 = vld [vmem:[%s9 + $0x930] sm:$0xff]
    %v1963 = vld [vmem:[%s9 + $0x938] sm:$0xff]
    %v1964 = vld [vmem:[%s9 + $0x940] sm:$0xff]
    %v1965 = vld [vmem:[%s9 + $0x948] sm:$0xff]
    %v1966 = vld [vmem:[%s9 + $0x950] sm:$0xff]
    %v1967 = vld [vmem:[%s9 + $0x958] sm:$0xff]
    %v1968 = vld [vmem:[%s9 + $0x960] sm:$0xff]
    %v1969 = vld [vmem:[%s9 + $0x968] sm:$0xff]
    %v1970 = vld [vmem:[%s9 + $0x970] sm:$0xff]
    %v1971 = vld [vmem:[%s9 + $0x978] sm:$0xff]
    %v1972 = vld [vmem:[%s9 + $0x980] sm:$0xff]
    %v1973 = vld [vmem:[%s9 + $0x988] sm:$0xff]
    %v1974 = vld [vmem:[%s9 + $0x990] sm:$0xff]
    %v1975 = vld [vmem:[%s9 + $0x998] sm:$0xff]
    %v1976 = vld [vmem:[%s9 + $0x9a0] sm:$0xff]
    %v1977 = vld [vmem:[%s9 + $0x9a8] sm:$0xff]
    %v1978 = vld [vmem:[%s9 + $0x9b0] sm:$0xff]
    %v1979 = vld [vmem:[%s9 + $0x9b8] sm:$0xff]
    %v1980 = vld [vmem:[%s9 + $0x9c0] sm:$0xff]
    %v1981 = vld [vmem:[%s9 + $0x9c8] sm:$0xff]
    %v1982 = vld [vmem:[%s9 + $0x9d0] sm:$0xff]
    %v1983 = vld [vmem:[%s9 + $0x9d8] sm:$0xff]
    %v1984 = vld [vmem:[%s9 + $0x9e0] sm:$0xff]
    %v1985 = vld [vmem:[%s9 + $0x9e8] sm:$0xff]
    %v1986 = vld [vmem:[%s9 + $0x9f0] sm:$0xff]
    %v1987 = vld [vmem:[%s9 + $0x9f8] sm:$0xff]
    %v1988 = vld [vmem:[%s9 + $0xa00] sm:$0xff]
    %v1989 = vld [vmem:[%s9 + $0xa08] sm:$0xff]
    %v1990 = vld [vmem:[%s9 + $0xa10] sm:$0xff]
    %v1991 = vld [vmem:[%s9 + $0xa18] sm:$0xff]
    %v1992 = vld [vmem:[%s9 + $0xa20] sm:$0xff]
    %v1993 = vld [vmem:[%s9 + $0xa28] sm:$0xff]
    %v1994 = vld [vmem:[%s9 + $0xa30] sm:$0xff]
    %v1995 = vld [vmem:[%s9 + $0xa38] sm:$0xff]
    %v1996 = vld [vmem:[%s9 + $0xa40] sm:$0xff]
    %v1997 = vld [vmem:[%s9 + $0xa48] sm:$0xff]
    %v1998 = vld [vmem:[%s9 + $0xa50] sm:$0xff]
    %v1999 = vld [vmem:[%s9 + $0xa58] sm:$0xff]
    %v2000 = vld [vmem:[%s9 + $0xa60] sm:$0xff]
    %v2001 = vld [vmem:[%s9 + $0xa68] sm:$0xff]
    %v2002 = vld [vmem:[%s9 + $0xa70] sm:$0xff]
    %v2003 = vld [vmem:[%s9 + $0xa78] sm:$0xff]
    %v2004 = vld [vmem:[%s9 + $0xa80] sm:$0xff]
    %v2005 = vld [vmem:[%s9 + $0xa88] sm:$0xff]
    %v2006 = vld [vmem:[%s9 + $0xa90] sm:$0xff]
    %v2007 = vld [vmem:[%s9 + $0xa98] sm:$0xff]
    %v2008 = vld [vmem:[%s9 + $0xaa0] sm:$0xff]
    %v2009 = vld [vmem:[%s9 + $0xaa8] sm:$0xff]
    %v2010 = vld [vmem:[%s9 + $0xab0] sm:$0xff]
    %v2011 = vld [vmem:[%s9 + $0xab8] sm:$0xff]
    %v2012 = vld [vmem:[%s9 + $0xac0] sm:$0xff]
    %v2013 = vld [vmem:[%s9 + $0xac8] sm:$0xff]
    %v2014 = vld [vmem:[%s9 + $0xad0] sm:$0xff]
    %v2015 = vld [vmem:[%s9 + $0xad8] sm:$0xff]
    %v2016 = vld [vmem:[%s9 + $0xae0] sm:$0xff]
    %v2017 = vld [vmem:[%s9 + $0xae8] sm:$0xff]
    %v2018 = vld [vmem:[%s9 + $0xaf0] sm:$0xff]
    %v2019 = vld [vmem:[%s9 + $0xaf8] sm:$0xff]
    %v2020 = vld [vmem:[%s9 + $0xb00] sm:$0xff]
    %v2021 = vld [vmem:[%s9 + $0xb08] sm:$0xff]
    %v2022 = vld [vmem:[%s9 + $0xb10] sm:$0xff]
    %v2023 = vld [vmem:[%s9 + $0xb18] sm:$0xff]
    %v2024 = vld [vmem:[%s9 + $0xb20] sm:$0xff]
    %v2025 = vld [vmem:[%s9 + $0xb28] sm:$0xff]
    %v2026 = vld [vmem:[%s9 + $0xb30] sm:$0xff]
    %v2027 = vld [vmem:[%s9 + $0xb38] sm:$0xff]
    %v2028 = vld [vmem:[%s9 + $0xb40] sm:$0xff]
    %v2029 = vld [vmem:[%s9 + $0xb48] sm:$0xff]
    %v2030 = vld [vmem:[%s9 + $0xb50] sm:$0xff]
    %v2031 = vld [vmem:[%s9 + $0xb58] sm:$0xff]
    %v2032 = vld [vmem:[%s9 + $0xb60] sm:$0xff]
    %v2033 = vld [vmem:[%s9 + $0xb68] sm:$0xff]
    %v2034 = vld [vmem:[%s9 + $0xb70] sm:$0xff]
    %v2035 = vld [vmem:[%s9 + $0xb78] sm:$0xff]
    %v2036 = vld [vmem:[%s9 + $0xb80] sm:$0xff]
    %v2037 = vld [vmem:[%s9 + $0xb88] sm:$0xff]
    %v2038 = vld [vmem:[%s9 + $0xb90] sm:$0xff]
    %v2039 = vld [vmem:[%s9 + $0xb98] sm:$0xff]
    %v2040 = vld [vmem:[%s9 + $0xba0] sm:$0xff]
    %v2041 = vld [vmem:[%s9 + $0xba8] sm:$0xff]
    %v2042 = vld [vmem:[%s9 + $0xbb0] sm:$0xff]
    %v2043 = vld [vmem:[%s9 + $0xbb8] sm:$0xff]
    %v2044 = vld [vmem:[%s9 + $0xbc0] sm:$0xff]
    %v2045 = vld [vmem:[%s9 + $0xbc8] sm:$0xff]
    %v2046 = vld [vmem:[%s9 + $0xbd0] sm:$0xff]
    %v2047 = vld [vmem:[%s9 + $0xbd8] sm:$0xff]
    %v2048 = vld [vmem:[%s9 + $0xbe0] sm:$0xff]
    %v2049 = vld [vmem:[%s9 + $0xbe8] sm:$0xff]
    %v2050 = vld [vmem:[%s9 + $0xbf0] sm:$0xff]
    %v2051 = vld [vmem:[%s9 + $0xbf8] sm:$0xff]
    %v2052 = vld [vmem:[%s9 + $0xc00] sm:$0xff]
    %v2053 = vld [vmem:[%s9 + $0xc08] sm:$0xff]
    %v2054 = vld [vmem:[%s9 + $0xc10] sm:$0xff]
    %v2055 = vld [vmem:[%s9 + $0xc18] sm:$0xff]
    %v2056 = vld [vmem:[%s9 + $0xc20] sm:$0xff]
    %v2057 = vld [vmem:[%s9 + $0xc28] sm:$0xff]
    %v2058 = vld [vmem:[%s9 + $0xc30] sm:$0xff]
    %v2059 = vld [vmem:[%s9 + $0xc38] sm:$0xff]
    %v2060 = vld [vmem:[%s9 + $0xc40] sm:$0xff]
    %v2061 = vld [vmem:[%s9 + $0xc48] sm:$0xff]
    %v2062 = vld [vmem:[%s9 + $0xc50] sm:$0xff]
    %v2063 = vld [vmem:[%s9 + $0xc58] sm:$0xff]
    %v2064 = vld [vmem:[%s9 + $0xc60] sm:$0xff]
    %v2065 = vld [vmem:[%s9 + $0xc68] sm:$0xff]
    %v2066 = vld [vmem:[%s9 + $0xc70] sm:$0xff]
    %v2067 = vld [vmem:[%s9 + $0xc78] sm:$0xff]
    %v2068 = vld [vmem:[%s9 + $0xc80] sm:$0xff]
    %v2069 = vld [vmem:[%s9 + $0xc88] sm:$0xff]
    %v2070 = vld [vmem:[%s9 + $0xc90] sm:$0xff]
    %v2071 = vld [vmem:[%s9 + $0xc98] sm:$0xff]
    %v2072 = vld [vmem:[%s9 + $0xca0] sm:$0xff]
    %v2073 = vld [vmem:[%s9 + $0xca8] sm:$0xff]
    %v2074 = vld [vmem:[%s9 + $0xcb0] sm:$0xff]
    %v2075 = vld [vmem:[%s9 + $0xcb8] sm:$0xff]
    %v2076 = vld [vmem:[%s9 + $0xcc0] sm:$0xff]
    %v2077 = vld [vmem:[%s9 + $0xcc8] sm:$0xff]
    %v2078 = vld [vmem:[%s9 + $0xcd0] sm:$0xff]
    %v2079 = vld [vmem:[%s9 + $0xcd8] sm:$0xff]
    %v2080 = vld [vmem:[%s9 + $0xce0] sm:$0xff]
    %v2081 = vld [vmem:[%s9 + $0xce8] sm:$0xff]
    %v2082 = vld [vmem:[%s9 + $0xcf0] sm:$0xff]
    %v2083 = vld [vmem:[%s9 + $0xcf8] sm:$0xff]
    %v2084 = vld [vmem:[%s9 + $0xd00] sm:$0xff]
    %v2085 = vld [vmem:[%s9 + $0xd08] sm:$0xff]
    %v2086 = vld [vmem:[%s9 + $0xd10] sm:$0xff]
    %v2087 = vld [vmem:[%s9 + $0xd18] sm:$0xff]
    %v2088 = vld [vmem:[%s9 + $0xd20] sm:$0xff]
    %v2089 = vld [vmem:[%s9 + $0xd28] sm:$0xff]
    %v2090 = vld [vmem:[%s9 + $0xd30] sm:$0xff]
    %v2091 = vld [vmem:[%s9 + $0xd38] sm:$0xff]
    %v2092 = vld [vmem:[%s9 + $0xd40] sm:$0xff]
    %v2093 = vld [vmem:[%s9 + $0xd48] sm:$0xff]
    %v2094 = vld [vmem:[%s9 + $0xd50] sm:$0xff]
    %v2095 = vld [vmem:[%s9 + $0xd58] sm:$0xff]
    %v2096 = vld [vmem:[%s9 + $0xd60] sm:$0xff]
    %v2097 = vld [vmem:[%s9 + $0xd68] sm:$0xff]
    %v2098 = vld [vmem:[%s9 + $0xd70] sm:$0xff]
    %v2099 = vld [vmem:[%s9 + $0xd78] sm:$0xff]
    %v2100 = vld [vmem:[%s9 + $0xd80] sm:$0xff]
    %v2101 = vld [vmem:[%s9 + $0xd88] sm:$0xff]
    %v2102 = vld [vmem:[%s9 + $0xd90] sm:$0xff]
    %v2103 = vld [vmem:[%s9 + $0xd98] sm:$0xff]
    %v2104 = vld [vmem:[%s9 + $0xda0] sm:$0xff]
    %v2105 = vld [vmem:[%s9 + $0xda8] sm:$0xff]
    %v2106 = vld [vmem:[%s9 + $0xdb0] sm:$0xff]
    %v2107 = vld [vmem:[%s9 + $0xdb8] sm:$0xff]
    %v2108 = vld [vmem:[%s9 + $0xdc0] sm:$0xff]
    %v2109 = vld [vmem:[%s9 + $0xdc8] sm:$0xff]
    %v2110 = vld [vmem:[%s9 + $0xdd0] sm:$0xff]
    %v2111 = vld [vmem:[%s9 + $0xdd8] sm:$0xff]
    %v2112 = vld [vmem:[%s9 + $0xde0] sm:$0xff]
    %v2113 = vld [vmem:[%s9 + $0xde8] sm:$0xff]
    %v2114 = vld [vmem:[%s9 + $0xdf0] sm:$0xff]
    %v2115 = vld [vmem:[%s9 + $0xdf8] sm:$0xff]
    %v2116 = vld [vmem:[%s10] sm:$0xff]
    %v2118 = vperm.slane %v2116, 0
    %v2119 = vperm.slane %v2116, 1
    %v2120 = vperm.slane %v2116, 2
    %v2121 = vperm.slane %v2116, 3
    %v2122 = vperm.slane %v2116, 4
    %v2123 = vperm.slane %v2116, 5
    %v2124 = vperm.slane %v2116, 6
    %v2125 = vperm.slane %v2116, 7
    %v2135 = vsel %vm235, %v1667, 0
    %2137 = vmatpush.msra.mxu0 %v1788
    %2138 = vmatpush.msra.mxu0 %v1780
    %2139 = vmatpush.msra.mxu0 %v1772
    %2140 = vmatpush.msra.mxu0 %v1764
    %2141 = vmatpush.msra.mxu0 %v1756
    %2142 = vmatpush.msra.mxu0 %v1748
    %2143 = vmatpush.msra.mxu0 %v1740
    %2144 = vmatpush.msra.mxu0 %v1732
    %2145 = vmatpush.msra.mxu0 %v1724
    %2146 = vmatpush.msra.mxu0 %v1716
    %2147 = vmatpush.msra.mxu0 %v1708
    %2148 = vmatpush.msra.mxu0 %v1700
    %2149 = vmatpush.msra.mxu0 %v1692
    %2150 = vmatpush.msra.mxu0 %v1684
    %2151 = vmatpush.msra.mxu0 %v1676
    %2152 = vmatpush.msra.mxu0 %v1668
    %2153 = vmatmul.f32.gmra.mxu0 %v1664
    %v2154 = vpop.f32.mrf.mxu0
    %v2155 = vadd.f32 %v2118, %v2154
    %2156 = vdwg.mxu0
    %2157 = vmatpush.msra.mxu0 %v1916
    %2158 = vmatpush.msra.mxu0 %v1908
    %2159 = vmatpush.msra.mxu0 %v1900
    %2160 = vmatpush.msra.mxu0 %v1892
    %2161 = vmatpush.msra.mxu0 %v1884
    %2162 = vmatpush.msra.mxu0 %v1876
    %2163 = vmatpush.msra.mxu0 %v1868
    %2164 = vmatpush.msra.mxu0 %v1860
    %2165 = vmatpush.msra.mxu0 %v1852
    %2166 = vmatpush.msra.mxu0 %v1844
    %2167 = vmatpush.msra.mxu0 %v1836
    %2168 = vmatpush.msra.mxu0 %v1828
    %2169 = vmatpush.msra.mxu0 %v1820
    %2170 = vmatpush.msra.mxu0 %v1812
    %2171 = vmatpush.msra.mxu0 %v1804
    %2172 = vmatpush.msra.mxu0 %v1796
    %2173 = vmatmul.f32.gmra.mxu0 %v1665
    %v2174 = vpop.f32.mrf.mxu0
    %v2175 = vadd.f32 %v2155, %v2174
    %2176 = vdwg.mxu0
    %2177 = vmatpush.msra.mxu0 %v2044
    %2178 = vmatpush.msra.mxu0 %v2036
    %2179 = vmatpush.msra.mxu0 %v2028
    %2180 = vmatpush.msra.mxu0 %v2020
    %2181 = vmatpush.msra.mxu0 %v2012
    %2182 = vmatpush.msra.mxu0 %v2004
    %2183 = vmatpush.msra.mxu0 %v1996
    %2184 = vmatpush.msra.mxu0 %v1988
    %2185 = vmatpush.msra.mxu0 %v1980
    %2186 = vmatpush.msra.mxu0 %v1972
    %2187 = vmatpush.msra.mxu0 %v1964
    %2188 = vmatpush.msra.mxu0 %v1956
    %2189 = vmatpush.msra.mxu0 %v1948
    %2190 = vmatpush.msra.mxu0 %v1940
    %2191 = vmatpush.msra.mxu0 %v1932
    %2192 = vmatpush.msra.mxu0 %v1924
    %2193 = vmatmul.f32.gmra.mxu0 %v1666
    %v2194 = vpop.f32.mrf.mxu0
    %v2195 = vadd.f32 %v2175, %v2194
    %2196 = vdwg.mxu0
    %2197 = vmatpush.msra.mxu0 0.0
    %2198 = vmatpush.msra.mxu0 0.0
    %2199 = vmatpush.msra.mxu0 0.0
    %2200 = vmatpush.msra.mxu0 0.0
    %2201 = vmatpush.msra.mxu0 0.0
    %2202 = vmatpush.msra.mxu0 0.0
    %2203 = vmatpush.msra.mxu0 0.0
    %2204 = vmatpush.msra.mxu0 0.0
    %2205 = vmatpush.msra.mxu0 %v2108
    %2206 = vmatpush.msra.mxu0 %v2100
    %2207 = vmatpush.msra.mxu0 %v2092
    %2208 = vmatpush.msra.mxu0 %v2084
    %2209 = vmatpush.msra.mxu0 %v2076
    %2210 = vmatpush.msra.mxu0 %v2068
    %2211 = vmatpush.msra.mxu0 %v2060
    %2212 = vmatpush.msra.mxu0 %v2052
    %2213 = vmatmul.f32.gmra.mxu0 %v2135
    %v2214 = vpop.f32.mrf.mxu0
    %v2215 = vadd.f32 %v2195, %v2214
    %2216 = vdwg.mxu0
    %2217 = vmatpush.msra.mxu0 %v1789
    %2218 = vmatpush.msra.mxu0 %v1781
    %2219 = vmatpush.msra.mxu0 %v1773
    %2220 = vmatpush.msra.mxu0 %v1765
    %2221 = vmatpush.msra.mxu0 %v1757
    %2222 = vmatpush.msra.mxu0 %v1749
    %2223 = vmatpush.msra.mxu0 %v1741
    %2224 = vmatpush.msra.mxu0 %v1733
    %2225 = vmatpush.msra.mxu0 %v1725
    %2226 = vmatpush.msra.mxu0 %v1717
    %2227 = vmatpush.msra.mxu0 %v1709
    %2228 = vmatpush.msra.mxu0 %v1701
    %2229 = vmatpush.msra.mxu0 %v1693
    %2230 = vmatpush.msra.mxu0 %v1685
    %2231 = vmatpush.msra.mxu0 %v1677
    %2232 = vmatpush.msra.mxu0 %v1669
    %2233 = vmatmul.f32.gmra.mxu0 %v1664
    %v2234 = vpop.f32.mrf.mxu0
    %v2235 = vadd.f32 %v2119, %v2234
    %2236 = vdwg.mxu0
    %2237 = vmatpush.msra.mxu0 %v1917
    %2238 = vmatpush.msra.mxu0 %v1909
    %2239 = vmatpush.msra.mxu0 %v1901
    %2240 = vmatpush.msra.mxu0 %v1893
    %2241 = vmatpush.msra.mxu0 %v1885
    %2242 = vmatpush.msra.mxu0 %v1877
    %2243 = vmatpush.msra.mxu0 %v1869
    %2244 = vmatpush.msra.mxu0 %v1861
    %2245 = vmatpush.msra.mxu0 %v1853
    %2246 = vmatpush.msra.mxu0 %v1845
    %2247 = vmatpush.msra.mxu0 %v1837
    %2248 = vmatpush.msra.mxu0 %v1829
    %2249 = vmatpush.msra.mxu0 %v1821
    %2250 = vmatpush.msra.mxu0 %v1813
    %2251 = vmatpush.msra.mxu0 %v1805
    %2252 = vmatpush.msra.mxu0 %v1797
    %2253 = vmatmul.f32.gmra.mxu0 %v1665
    %v2254 = vpop.f32.mrf.mxu0
    %v2255 = vadd.f32 %v2235, %v2254
    %2256 = vdwg.mxu0
    %2257 = vmatpush.msra.mxu0 %v2045
    %2258 = vmatpush.msra.mxu0 %v2037
    %2259 = vmatpush.msra.mxu0 %v2029
    %2260 = vmatpush.msra.mxu0 %v2021
    %2261 = vmatpush.msra.mxu0 %v2013
    %2262 = vmatpush.msra.mxu0 %v2005
    %2263 = vmatpush.msra.mxu0 %v1997
    %2264 = vmatpush.msra.mxu0 %v1989
    %2265 = vmatpush.msra.mxu0 %v1981
    %2266 = vmatpush.msra.mxu0 %v1973
    %2267 = vmatpush.msra.mxu0 %v1965
    %2268 = vmatpush.msra.mxu0 %v1957
    %2269 = vmatpush.msra.mxu0 %v1949
    %2270 = vmatpush.msra.mxu0 %v1941
    %2271 = vmatpush.msra.mxu0 %v1933
    %2272 = vmatpush.msra.mxu0 %v1925
    %2273 = vmatmul.f32.gmra.mxu0 %v1666
    %v2274 = vpop.f32.mrf.mxu0
    %v2275 = vadd.f32 %v2255, %v2274
    %2276 = vdwg.mxu0
    %2277 = vmatpush.msra.mxu0 0.0
    %2278 = vmatpush.msra.mxu0 0.0
    %2279 = vmatpush.msra.mxu0 0.0
    %2280 = vmatpush.msra.mxu0 0.0
    %2281 = vmatpush.msra.mxu0 0.0
    %2282 = vmatpush.msra.mxu0 0.0
    %2283 = vmatpush.msra.mxu0 0.0
    %2284 = vmatpush.msra.mxu0 0.0
    %2285 = vmatpush.msra.mxu0 %v2109
    %2286 = vmatpush.msra.mxu0 %v2101
    %2287 = vmatpush.msra.mxu0 %v2093
    %2288 = vmatpush.msra.mxu0 %v2085
    %2289 = vmatpush.msra.mxu0 %v2077
    %2290 = vmatpush.msra.mxu0 %v2069
    %2291 = vmatpush.msra.mxu0 %v2061
    %2292 = vmatpush.msra.mxu0 %v2053
    %2293 = vmatmul.f32.gmra.mxu0 %v2135
    %v2294 = vpop.f32.mrf.mxu0
    %v2295 = vadd.f32 %v2275, %v2294
    %2296 = vdwg.mxu0
    %2297 = vmatpush.msra.mxu0 %v1790
    %2298 = vmatpush.msra.mxu0 %v1782
    %2299 = vmatpush.msra.mxu0 %v1774
    %2300 = vmatpush.msra.mxu0 %v1766
    %2301 = vmatpush.msra.mxu0 %v1758
    %2302 = vmatpush.msra.mxu0 %v1750
    %2303 = vmatpush.msra.mxu0 %v1742
    %2304 = vmatpush.msra.mxu0 %v1734
    %2305 = vmatpush.msra.mxu0 %v1726
    %2306 = vmatpush.msra.mxu0 %v1718
    %2307 = vmatpush.msra.mxu0 %v1710
    %2308 = vmatpush.msra.mxu0 %v1702
    %2309 = vmatpush.msra.mxu0 %v1694
    %2310 = vmatpush.msra.mxu0 %v1686
    %2311 = vmatpush.msra.mxu0 %v1678
    %2312 = vmatpush.msra.mxu0 %v1670
    %2313 = vmatmul.f32.gmra.mxu0 %v1664
    %v2314 = vpop.f32.mrf.mxu0
    %v2315 = vadd.f32 %v2120, %v2314
    %2316 = vdwg.mxu0
    %2317 = vmatpush.msra.mxu0 %v1918
    %2318 = vmatpush.msra.mxu0 %v1910
    %2319 = vmatpush.msra.mxu0 %v1902
    %2320 = vmatpush.msra.mxu0 %v1894
    %2321 = vmatpush.msra.mxu0 %v1886
    %2322 = vmatpush.msra.mxu0 %v1878
    %2323 = vmatpush.msra.mxu0 %v1870
    %2324 = vmatpush.msra.mxu0 %v1862
    %2325 = vmatpush.msra.mxu0 %v1854
    %2326 = vmatpush.msra.mxu0 %v1846
    %2327 = vmatpush.msra.mxu0 %v1838
    %2328 = vmatpush.msra.mxu0 %v1830
    %2329 = vmatpush.msra.mxu0 %v1822
    %2330 = vmatpush.msra.mxu0 %v1814
    %2331 = vmatpush.msra.mxu0 %v1806
    %2332 = vmatpush.msra.mxu0 %v1798
    %2333 = vmatmul.f32.gmra.mxu0 %v1665
    %v2334 = vpop.f32.mrf.mxu0
    %v2335 = vadd.f32 %v2315, %v2334
    %2336 = vdwg.mxu0
    %2337 = vmatpush.msra.mxu0 %v2046
    %2338 = vmatpush.msra.mxu0 %v2038
    %2339 = vmatpush.msra.mxu0 %v2030
    %2340 = vmatpush.msra.mxu0 %v2022
    %2341 = vmatpush.msra.mxu0 %v2014
    %2342 = vmatpush.msra.mxu0 %v2006
    %2343 = vmatpush.msra.mxu0 %v1998
    %2344 = vmatpush.msra.mxu0 %v1990
    %2345 = vmatpush.msra.mxu0 %v1982
    %2346 = vmatpush.msra.mxu0 %v1974
    %2347 = vmatpush.msra.mxu0 %v1966
    %2348 = vmatpush.msra.mxu0 %v1958
    %2349 = vmatpush.msra.mxu0 %v1950
    %2350 = vmatpush.msra.mxu0 %v1942
    %2351 = vmatpush.msra.mxu0 %v1934
    %2352 = vmatpush.msra.mxu0 %v1926
    %2353 = vmatmul.f32.gmra.mxu0 %v1666
    %v2354 = vpop.f32.mrf.mxu0
    %v2355 = vadd.f32 %v2335, %v2354
    %2356 = vdwg.mxu0
    %2357 = vmatpush.msra.mxu0 0.0
    %2358 = vmatpush.msra.mxu0 0.0
    %2359 = vmatpush.msra.mxu0 0.0
    %2360 = vmatpush.msra.mxu0 0.0
    %2361 = vmatpush.msra.mxu0 0.0
    %2362 = vmatpush.msra.mxu0 0.0
    %2363 = vmatpush.msra.mxu0 0.0
    %2364 = vmatpush.msra.mxu0 0.0
    %2365 = vmatpush.msra.mxu0 %v2110
    %2366 = vmatpush.msra.mxu0 %v2102
    %2367 = vmatpush.msra.mxu0 %v2094
    %2368 = vmatpush.msra.mxu0 %v2086
    %2369 = vmatpush.msra.mxu0 %v2078
    %2370 = vmatpush.msra.mxu0 %v2070
    %2371 = vmatpush.msra.mxu0 %v2062
    %2372 = vmatpush.msra.mxu0 %v2054
    %2373 = vmatmul.f32.gmra.mxu0 %v2135
    %v2374 = vpop.f32.mrf.mxu0
    %v2375 = vadd.f32 %v2355, %v2374
    %2376 = vdwg.mxu0
    %2377 = vmatpush.msra.mxu0 %v1791
    %2378 = vmatpush.msra.mxu0 %v1783
    %2379 = vmatpush.msra.mxu0 %v1775
    %2380 = vmatpush.msra.mxu0 %v1767
    %2381 = vmatpush.msra.mxu0 %v1759
    %2382 = vmatpush.msra.mxu0 %v1751
    %2383 = vmatpush.msra.mxu0 %v1743
    %2384 = vmatpush.msra.mxu0 %v1735
    %2385 = vmatpush.msra.mxu0 %v1727
    %2386 = vmatpush.msra.mxu0 %v1719
    %2387 = vmatpush.msra.mxu0 %v1711
    %2388 = vmatpush.msra.mxu0 %v1703
    %2389 = vmatpush.msra.mxu0 %v1695
    %2390 = vmatpush.msra.mxu0 %v1687
    %2391 = vmatpush.msra.mxu0 %v1679
    %2392 = vmatpush.msra.mxu0 %v1671
    %2393 = vmatmul.f32.gmra.mxu0 %v1664
    %v2394 = vpop.f32.mrf.mxu0
    %v2395 = vadd.f32 %v2121, %v2394
    %2396 = vdwg.mxu0
    %2397 = vmatpush.msra.mxu0 %v1919
    %2398 = vmatpush.msra.mxu0 %v1911
    %2399 = vmatpush.msra.mxu0 %v1903
    %2400 = vmatpush.msra.mxu0 %v1895
    %2401 = vmatpush.msra.mxu0 %v1887
    %2402 = vmatpush.msra.mxu0 %v1879
    %2403 = vmatpush.msra.mxu0 %v1871
    %2404 = vmatpush.msra.mxu0 %v1863
    %2405 = vmatpush.msra.mxu0 %v1855
    %2406 = vmatpush.msra.mxu0 %v1847
    %2407 = vmatpush.msra.mxu0 %v1839
    %2408 = vmatpush.msra.mxu0 %v1831
    %2409 = vmatpush.msra.mxu0 %v1823
    %2410 = vmatpush.msra.mxu0 %v1815
    %2411 = vmatpush.msra.mxu0 %v1807
    %2412 = vmatpush.msra.mxu0 %v1799
    %2413 = vmatmul.f32.gmra.mxu0 %v1665
    %v2414 = vpop.f32.mrf.mxu0
    %v2415 = vadd.f32 %v2395, %v2414
    %2416 = vdwg.mxu0
    %2417 = vmatpush.msra.mxu0 %v2047
    %2418 = vmatpush.msra.mxu0 %v2039
    %2419 = vmatpush.msra.mxu0 %v2031
    %2420 = vmatpush.msra.mxu0 %v2023
    %2421 = vmatpush.msra.mxu0 %v2015
    %2422 = vmatpush.msra.mxu0 %v2007
    %2423 = vmatpush.msra.mxu0 %v1999
    %2424 = vmatpush.msra.mxu0 %v1991
    %2425 = vmatpush.msra.mxu0 %v1983
    %2426 = vmatpush.msra.mxu0 %v1975
    %2427 = vmatpush.msra.mxu0 %v1967
    %2428 = vmatpush.msra.mxu0 %v1959
    %2429 = vmatpush.msra.mxu0 %v1951
    %2430 = vmatpush.msra.mxu0 %v1943
    %2431 = vmatpush.msra.mxu0 %v1935
    %2432 = vmatpush.msra.mxu0 %v1927
    %2433 = vmatmul.f32.gmra.mxu0 %v1666
    %v2434 = vpop.f32.mrf.mxu0
    %v2435 = vadd.f32 %v2415, %v2434
    %2436 = vdwg.mxu0
    %2437 = vmatpush.msra.mxu0 0.0
    %2438 = vmatpush.msra.mxu0 0.0
    %2439 = vmatpush.msra.mxu0 0.0
    %2440 = vmatpush.msra.mxu0 0.0
    %2441 = vmatpush.msra.mxu0 0.0
    %2442 = vmatpush.msra.mxu0 0.0
    %2443 = vmatpush.msra.mxu0 0.0
    %2444 = vmatpush.msra.mxu0 0.0
    %2445 = vmatpush.msra.mxu0 %v2111
    %2446 = vmatpush.msra.mxu0 %v2103
    %2447 = vmatpush.msra.mxu0 %v2095
    %2448 = vmatpush.msra.mxu0 %v2087
    %2449 = vmatpush.msra.mxu0 %v2079
    %2450 = vmatpush.msra.mxu0 %v2071
    %2451 = vmatpush.msra.mxu0 %v2063
    %2452 = vmatpush.msra.mxu0 %v2055
    %2453 = vmatmul.f32.gmra.mxu0 %v2135
    %v2454 = vpop.f32.mrf.mxu0
    %v2455 = vadd.f32 %v2435, %v2454
    %2456 = vdwg.mxu0
    %2457 = vmatpush.msra.mxu0 %v1792
    %2458 = vmatpush.msra.mxu0 %v1784
    %2459 = vmatpush.msra.mxu0 %v1776
    %2460 = vmatpush.msra.mxu0 %v1768
    %2461 = vmatpush.msra.mxu0 %v1760
    %2462 = vmatpush.msra.mxu0 %v1752
    %2463 = vmatpush.msra.mxu0 %v1744
    %2464 = vmatpush.msra.mxu0 %v1736
    %2465 = vmatpush.msra.mxu0 %v1728
    %2466 = vmatpush.msra.mxu0 %v1720
    %2467 = vmatpush.msra.mxu0 %v1712
    %2468 = vmatpush.msra.mxu0 %v1704
    %2469 = vmatpush.msra.mxu0 %v1696
    %2470 = vmatpush.msra.mxu0 %v1688
    %2471 = vmatpush.msra.mxu0 %v1680
    %2472 = vmatpush.msra.mxu0 %v1672
    %2473 = vmatmul.f32.gmra.mxu0 %v1664
    %v2474 = vpop.f32.mrf.mxu0
    %v2475 = vadd.f32 %v2122, %v2474
    %2476 = vdwg.mxu0
    %2477 = vmatpush.msra.mxu0 %v1920
    %2478 = vmatpush.msra.mxu0 %v1912
    %2479 = vmatpush.msra.mxu0 %v1904
    %2480 = vmatpush.msra.mxu0 %v1896
    %2481 = vmatpush.msra.mxu0 %v1888
    %2482 = vmatpush.msra.mxu0 %v1880
    %2483 = vmatpush.msra.mxu0 %v1872
    %2484 = vmatpush.msra.mxu0 %v1864
    %2485 = vmatpush.msra.mxu0 %v1856
    %2486 = vmatpush.msra.mxu0 %v1848
    %2487 = vmatpush.msra.mxu0 %v1840
    %2488 = vmatpush.msra.mxu0 %v1832
    %2489 = vmatpush.msra.mxu0 %v1824
    %2490 = vmatpush.msra.mxu0 %v1816
    %2491 = vmatpush.msra.mxu0 %v1808
    %2492 = vmatpush.msra.mxu0 %v1800
    %2493 = vmatmul.f32.gmra.mxu0 %v1665
    %v2494 = vpop.f32.mrf.mxu0
    %v2495 = vadd.f32 %v2475, %v2494
    %2496 = vdwg.mxu0
    %2497 = vmatpush.msra.mxu0 %v2048
    %2498 = vmatpush.msra.mxu0 %v2040
    %2499 = vmatpush.msra.mxu0 %v2032
    %2500 = vmatpush.msra.mxu0 %v2024
    %2501 = vmatpush.msra.mxu0 %v2016
    %2502 = vmatpush.msra.mxu0 %v2008
    %2503 = vmatpush.msra.mxu0 %v2000
    %2504 = vmatpush.msra.mxu0 %v1992
    %2505 = vmatpush.msra.mxu0 %v1984
    %2506 = vmatpush.msra.mxu0 %v1976
    %2507 = vmatpush.msra.mxu0 %v1968
    %2508 = vmatpush.msra.mxu0 %v1960
    %2509 = vmatpush.msra.mxu0 %v1952
    %2510 = vmatpush.msra.mxu0 %v1944
    %2511 = vmatpush.msra.mxu0 %v1936
    %2512 = vmatpush.msra.mxu0 %v1928
    %2513 = vmatmul.f32.gmra.mxu0 %v1666
    %v2514 = vpop.f32.mrf.mxu0
    %v2515 = vadd.f32 %v2495, %v2514
    %2516 = vdwg.mxu0
    %2517 = vmatpush.msra.mxu0 0.0
    %2518 = vmatpush.msra.mxu0 0.0
    %2519 = vmatpush.msra.mxu0 0.0
    %2520 = vmatpush.msra.mxu0 0.0
    %2521 = vmatpush.msra.mxu0 0.0
    %2522 = vmatpush.msra.mxu0 0.0
    %2523 = vmatpush.msra.mxu0 0.0
    %2524 = vmatpush.msra.mxu0 0.0
    %2525 = vmatpush.msra.mxu0 %v2112
    %2526 = vmatpush.msra.mxu0 %v2104
    %2527 = vmatpush.msra.mxu0 %v2096
    %2528 = vmatpush.msra.mxu0 %v2088
    %2529 = vmatpush.msra.mxu0 %v2080
    %2530 = vmatpush.msra.mxu0 %v2072
    %2531 = vmatpush.msra.mxu0 %v2064
    %2532 = vmatpush.msra.mxu0 %v2056
    %2533 = vmatmul.f32.gmra.mxu0 %v2135
    %v2534 = vpop.f32.mrf.mxu0
    %v2535 = vadd.f32 %v2515, %v2534
    %2536 = vdwg.mxu0
    %2537 = vmatpush.msra.mxu0 %v1793
    %2538 = vmatpush.msra.mxu0 %v1785
    %2539 = vmatpush.msra.mxu0 %v1777
    %2540 = vmatpush.msra.mxu0 %v1769
    %2541 = vmatpush.msra.mxu0 %v1761
    %2542 = vmatpush.msra.mxu0 %v1753
    %2543 = vmatpush.msra.mxu0 %v1745
    %2544 = vmatpush.msra.mxu0 %v1737
    %2545 = vmatpush.msra.mxu0 %v1729
    %2546 = vmatpush.msra.mxu0 %v1721
    %2547 = vmatpush.msra.mxu0 %v1713
    %2548 = vmatpush.msra.mxu0 %v1705
    %2549 = vmatpush.msra.mxu0 %v1697
    %2550 = vmatpush.msra.mxu0 %v1689
    %2551 = vmatpush.msra.mxu0 %v1681
    %2552 = vmatpush.msra.mxu0 %v1673
    %2553 = vmatmul.f32.gmra.mxu0 %v1664
    %v2554 = vpop.f32.mrf.mxu0
    %v2555 = vadd.f32 %v2123, %v2554
    %2556 = vdwg.mxu0
    %2557 = vmatpush.msra.mxu0 %v1921
    %2558 = vmatpush.msra.mxu0 %v1913
    %2559 = vmatpush.msra.mxu0 %v1905
    %2560 = vmatpush.msra.mxu0 %v1897
    %2561 = vmatpush.msra.mxu0 %v1889
    %2562 = vmatpush.msra.mxu0 %v1881
    %2563 = vmatpush.msra.mxu0 %v1873
    %2564 = vmatpush.msra.mxu0 %v1865
    %2565 = vmatpush.msra.mxu0 %v1857
    %2566 = vmatpush.msra.mxu0 %v1849
    %2567 = vmatpush.msra.mxu0 %v1841
    %2568 = vmatpush.msra.mxu0 %v1833
    %2569 = vmatpush.msra.mxu0 %v1825
    %2570 = vmatpush.msra.mxu0 %v1817
    %2571 = vmatpush.msra.mxu0 %v1809
    %2572 = vmatpush.msra.mxu0 %v1801
    %2573 = vmatmul.f32.gmra.mxu0 %v1665
    %v2574 = vpop.f32.mrf.mxu0
    %v2575 = vadd.f32 %v2555, %v2574
    %2576 = vdwg.mxu0
    %2577 = vmatpush.msra.mxu0 %v2049
    %2578 = vmatpush.msra.mxu0 %v2041
    %2579 = vmatpush.msra.mxu0 %v2033
    %2580 = vmatpush.msra.mxu0 %v2025
    %2581 = vmatpush.msra.mxu0 %v2017
    %2582 = vmatpush.msra.mxu0 %v2009
    %2583 = vmatpush.msra.mxu0 %v2001
    %2584 = vmatpush.msra.mxu0 %v1993
    %2585 = vmatpush.msra.mxu0 %v1985
    %2586 = vmatpush.msra.mxu0 %v1977
    %2587 = vmatpush.msra.mxu0 %v1969
    %2588 = vmatpush.msra.mxu0 %v1961
    %2589 = vmatpush.msra.mxu0 %v1953
    %2590 = vmatpush.msra.mxu0 %v1945
    %2591 = vmatpush.msra.mxu0 %v1937
    %2592 = vmatpush.msra.mxu0 %v1929
    %2593 = vmatmul.f32.gmra.mxu0 %v1666
    %v2594 = vpop.f32.mrf.mxu0
    %v2595 = vadd.f32 %v2575, %v2594
    %2596 = vdwg.mxu0
    %2597 = vmatpush.msra.mxu0 0.0
    %2598 = vmatpush.msra.mxu0 0.0
    %2599 = vmatpush.msra.mxu0 0.0
    %2600 = vmatpush.msra.mxu0 0.0
    %2601 = vmatpush.msra.mxu0 0.0
    %2602 = vmatpush.msra.mxu0 0.0
    %2603 = vmatpush.msra.mxu0 0.0
    %2604 = vmatpush.msra.mxu0 0.0
    %2605 = vmatpush.msra.mxu0 %v2113
    %2606 = vmatpush.msra.mxu0 %v2105
    %2607 = vmatpush.msra.mxu0 %v2097
    %2608 = vmatpush.msra.mxu0 %v2089
    %2609 = vmatpush.msra.mxu0 %v2081
    %2610 = vmatpush.msra.mxu0 %v2073
    %2611 = vmatpush.msra.mxu0 %v2065
    %2612 = vmatpush.msra.mxu0 %v2057
    %2613 = vmatmul.f32.gmra.mxu0 %v2135
    %v2614 = vpop.f32.mrf.mxu0
    %v2615 = vadd.f32 %v2595, %v2614
    %2616 = vdwg.mxu0
    %2617 = vmatpush.msra.mxu0 %v1794
    %2618 = vmatpush.msra.mxu0 %v1786
    %2619 = vmatpush.msra.mxu0 %v1778
    %2620 = vmatpush.msra.mxu0 %v1770
    %2621 = vmatpush.msra.mxu0 %v1762
    %2622 = vmatpush.msra.mxu0 %v1754
    %2623 = vmatpush.msra.mxu0 %v1746
    %2624 = vmatpush.msra.mxu0 %v1738
    %2625 = vmatpush.msra.mxu0 %v1730
    %2626 = vmatpush.msra.mxu0 %v1722
    %2627 = vmatpush.msra.mxu0 %v1714
    %2628 = vmatpush.msra.mxu0 %v1706
    %2629 = vmatpush.msra.mxu0 %v1698
    %2630 = vmatpush.msra.mxu0 %v1690
    %2631 = vmatpush.msra.mxu0 %v1682
    %2632 = vmatpush.msra.mxu0 %v1674
    %2633 = vmatmul.f32.gmra.mxu0 %v1664
    %v2634 = vpop.f32.mrf.mxu0
    %v2635 = vadd.f32 %v2124, %v2634
    %2636 = vdwg.mxu0
    %2637 = vmatpush.msra.mxu0 %v1922
    %2638 = vmatpush.msra.mxu0 %v1914
    %2639 = vmatpush.msra.mxu0 %v1906
    %2640 = vmatpush.msra.mxu0 %v1898
    %2641 = vmatpush.msra.mxu0 %v1890
    %2642 = vmatpush.msra.mxu0 %v1882
    %2643 = vmatpush.msra.mxu0 %v1874
    %2644 = vmatpush.msra.mxu0 %v1866
    %2645 = vmatpush.msra.mxu0 %v1858
    %2646 = vmatpush.msra.mxu0 %v1850
    %2647 = vmatpush.msra.mxu0 %v1842
    %2648 = vmatpush.msra.mxu0 %v1834
    %2649 = vmatpush.msra.mxu0 %v1826
    %2650 = vmatpush.msra.mxu0 %v1818
    %2651 = vmatpush.msra.mxu0 %v1810
    %2652 = vmatpush.msra.mxu0 %v1802
    %2653 = vmatmul.f32.gmra.mxu0 %v1665
    %v2654 = vpop.f32.mrf.mxu0
    %v2655 = vadd.f32 %v2635, %v2654
    %2656 = vdwg.mxu0
    %2657 = vmatpush.msra.mxu0 %v2050
    %2658 = vmatpush.msra.mxu0 %v2042
    %2659 = vmatpush.msra.mxu0 %v2034
    %2660 = vmatpush.msra.mxu0 %v2026
    %2661 = vmatpush.msra.mxu0 %v2018
    %2662 = vmatpush.msra.mxu0 %v2010
    %2663 = vmatpush.msra.mxu0 %v2002
    %2664 = vmatpush.msra.mxu0 %v1994
    %2665 = vmatpush.msra.mxu0 %v1986
    %2666 = vmatpush.msra.mxu0 %v1978
    %2667 = vmatpush.msra.mxu0 %v1970
    %2668 = vmatpush.msra.mxu0 %v1962
    %2669 = vmatpush.msra.mxu0 %v1954
    %2670 = vmatpush.msra.mxu0 %v1946
    %2671 = vmatpush.msra.mxu0 %v1938
    %2672 = vmatpush.msra.mxu0 %v1930
    %2673 = vmatmul.f32.gmra.mxu0 %v1666
    %v2674 = vpop.f32.mrf.mxu0
    %v2675 = vadd.f32 %v2655, %v2674
    %2676 = vdwg.mxu0
    %2677 = vmatpush.msra.mxu0 0.0
    %2678 = vmatpush.msra.mxu0 0.0
    %2679 = vmatpush.msra.mxu0 0.0
    %2680 = vmatpush.msra.mxu0 0.0
    %2681 = vmatpush.msra.mxu0 0.0
    %2682 = vmatpush.msra.mxu0 0.0
    %2683 = vmatpush.msra.mxu0 0.0
    %2684 = vmatpush.msra.mxu0 0.0
    %2685 = vmatpush.msra.mxu0 %v2114
    %2686 = vmatpush.msra.mxu0 %v2106
    %2687 = vmatpush.msra.mxu0 %v2098
    %2688 = vmatpush.msra.mxu0 %v2090
    %2689 = vmatpush.msra.mxu0 %v2082
    %2690 = vmatpush.msra.mxu0 %v2074
    %2691 = vmatpush.msra.mxu0 %v2066
    %2692 = vmatpush.msra.mxu0 %v2058
    %2693 = vmatmul.f32.gmra.mxu0 %v2135
    %v2694 = vpop.f32.mrf.mxu0
    %v2695 = vadd.f32 %v2675, %v2694
    %2696 = vdwg.mxu0
    %2697 = vmatpush.msra.mxu0 %v1795
    %2698 = vmatpush.msra.mxu0 %v1787
    %2699 = vmatpush.msra.mxu0 %v1779
    %2700 = vmatpush.msra.mxu0 %v1771
    %2701 = vmatpush.msra.mxu0 %v1763
    %2702 = vmatpush.msra.mxu0 %v1755
    %2703 = vmatpush.msra.mxu0 %v1747
    %2704 = vmatpush.msra.mxu0 %v1739
    %2705 = vmatpush.msra.mxu0 %v1731
    %2706 = vmatpush.msra.mxu0 %v1723
    %2707 = vmatpush.msra.mxu0 %v1715
    %2708 = vmatpush.msra.mxu0 %v1707
    %2709 = vmatpush.msra.mxu0 %v1699
    %2710 = vmatpush.msra.mxu0 %v1691
    %2711 = vmatpush.msra.mxu0 %v1683
    %2712 = vmatpush.msra.mxu0 %v1675
    %2713 = vmatmul.f32.gmra.mxu0 %v1664
    %v2714 = vpop.f32.mrf.mxu0
    %v2715 = vadd.f32 %v2125, %v2714
    %2716 = vdwg.mxu0
    %2717 = vmatpush.msra.mxu0 %v1923
    %2718 = vmatpush.msra.mxu0 %v1915
    %2719 = vmatpush.msra.mxu0 %v1907
    %2720 = vmatpush.msra.mxu0 %v1899
    %2721 = vmatpush.msra.mxu0 %v1891
    %2722 = vmatpush.msra.mxu0 %v1883
    %2723 = vmatpush.msra.mxu0 %v1875
    %2724 = vmatpush.msra.mxu0 %v1867
    %2725 = vmatpush.msra.mxu0 %v1859
    %2726 = vmatpush.msra.mxu0 %v1851
    %2727 = vmatpush.msra.mxu0 %v1843
    %2728 = vmatpush.msra.mxu0 %v1835
    %2729 = vmatpush.msra.mxu0 %v1827
    %2730 = vmatpush.msra.mxu0 %v1819
    %2731 = vmatpush.msra.mxu0 %v1811
    %2732 = vmatpush.msra.mxu0 %v1803
    %2733 = vmatmul.f32.gmra.mxu0 %v1665
    %v2734 = vpop.f32.mrf.mxu0
    %v2735 = vadd.f32 %v2715, %v2734
    %2736 = vdwg.mxu0
    %2737 = vmatpush.msra.mxu0 %v2051
    %2738 = vmatpush.msra.mxu0 %v2043
    %2739 = vmatpush.msra.mxu0 %v2035
    %2740 = vmatpush.msra.mxu0 %v2027
    %2741 = vmatpush.msra.mxu0 %v2019
    %2742 = vmatpush.msra.mxu0 %v2011
    %2743 = vmatpush.msra.mxu0 %v2003
    %2744 = vmatpush.msra.mxu0 %v1995
    %2745 = vmatpush.msra.mxu0 %v1987
    %2746 = vmatpush.msra.mxu0 %v1979
    %2747 = vmatpush.msra.mxu0 %v1971
    %2748 = vmatpush.msra.mxu0 %v1963
    %2749 = vmatpush.msra.mxu0 %v1955
    %2750 = vmatpush.msra.mxu0 %v1947
    %2751 = vmatpush.msra.mxu0 %v1939
    %2752 = vmatpush.msra.mxu0 %v1931
    %2753 = vmatmul.f32.gmra.mxu0 %v1666
    %v2754 = vpop.f32.mrf.mxu0
    %v2755 = vadd.f32 %v2735, %v2754
    %2756 = vdwg.mxu0
    %2757 = vmatpush.msra.mxu0 0.0
    %2758 = vmatpush.msra.mxu0 0.0
    %2759 = vmatpush.msra.mxu0 0.0
    %2760 = vmatpush.msra.mxu0 0.0
    %2761 = vmatpush.msra.mxu0 0.0
    %2762 = vmatpush.msra.mxu0 0.0
    %2763 = vmatpush.msra.mxu0 0.0
    %2764 = vmatpush.msra.mxu0 0.0
    %2765 = vmatpush.msra.mxu0 %v2115
    %2766 = vmatpush.msra.mxu0 %v2107
    %2767 = vmatpush.msra.mxu0 %v2099
    %2768 = vmatpush.msra.mxu0 %v2091
    %2769 = vmatpush.msra.mxu0 %v2083
    %2770 = vmatpush.msra.mxu0 %v2075
    %2771 = vmatpush.msra.mxu0 %v2067
    %2772 = vmatpush.msra.mxu0 %v2059
    %2773 = vmatmul.f32.gmra.mxu0 %v2135
    %v2774 = vpop.f32.mrf.mxu0
    %v2775 = vadd.f32 %v2755, %v2774
    %2776 = vdwg.mxu0
    %v2777 = vmax.f32 %v2215, 0.0
    %v2778 = vmax.f32 %v2295, 0.0
    %v2779 = vmax.f32 %v2375, 0.0
    %v2780 = vmax.f32 %v2455, 0.0
    %v2781 = vmax.f32 %v2535, 0.0
    %v2782 = vmax.f32 %v2615, 0.0
    %v2783 = vmax.f32 %v2695, 0.0
    %v2784 = vmax.f32 %v2775, 0.0
    %v2785 = vadd.f32 %v1664, %v2777
    %v2786 = vadd.f32 %v1665, %v2778
    %v2787 = vadd.f32 %v1666, %v2779
    %v2788 = vadd.f32 %v1667, %v2780
    %v2789 = vadd.f32 %v1664, %v2781
    %v2790 = vadd.f32 %v1665, %v2782
    %v2791 = vadd.f32 %v1666, %v2783
    %v2792 = vadd.f32 %v1667, %v2784
    %v2793 = vld [vmem:[%s11] sm:$0xff]
    %v2794 = vld [vmem:[%s11 + $0x8] sm:$0xff]
    %v2795 = vld [vmem:[%s11 + $0x10] sm:$0xff]
    %v2796 = vld [vmem:[%s11 + $0x18] sm:$0xff]
    %v2797 = vld [vmem:[%s11 + $0x20] sm:$0xff]
    %v2798 = vld [vmem:[%s11 + $0x28] sm:$0xff]
    %v2799 = vld [vmem:[%s11 + $0x30] sm:$0xff]
    %v2800 = vld [vmem:[%s11 + $0x38] sm:$0xff]
    %v2801 = vld [vmem:[%s11 + $0x40] sm:$0xff]
    %v2802 = vld [vmem:[%s11 + $0x48] sm:$0xff]
    %v2803 = vld [vmem:[%s11 + $0x50] sm:$0xff]
    %v2804 = vld [vmem:[%s11 + $0x58] sm:$0xff]
    %v2805 = vld [vmem:[%s11 + $0x60] sm:$0xff]
    %v2806 = vld [vmem:[%s11 + $0x68] sm:$0xff]
    %v2807 = vld [vmem:[%s11 + $0x70] sm:$0xff]
    %v2808 = vld [vmem:[%s11 + $0x78] sm:$0xff]
    %v2809 = vld [vmem:[%s11 + $0x80] sm:$0xff]
    %v2810 = vld [vmem:[%s11 + $0x88] sm:$0xff]
    %v2811 = vld [vmem:[%s11 + $0x90] sm:$0xff]
    %v2812 = vld [vmem:[%s11 + $0x98] sm:$0xff]
    %v2813 = vld [vmem:[%s11 + $0xa0] sm:$0xff]
    %v2814 = vld [vmem:[%s11 + $0xa8] sm:$0xff]
    %v2815 = vld [vmem:[%s11 + $0xb0] sm:$0xff]
    %v2816 = vld [vmem:[%s11 + $0xb8] sm:$0xff]
    %v2817 = vld [vmem:[%s11 + $0xc0] sm:$0xff]
    %v2818 = vld [vmem:[%s11 + $0xc8] sm:$0xff]
    %v2819 = vld [vmem:[%s11 + $0xd0] sm:$0xff]
    %v2820 = vld [vmem:[%s11 + $0xd8] sm:$0xff]
    %v2821 = vld [vmem:[%s11 + $0xe0] sm:$0xff]
    %v2822 = vld [vmem:[%s11 + $0xe8] sm:$0xff]
    %v2823 = vld [vmem:[%s11 + $0xf0] sm:$0xff]
    %v2824 = vld [vmem:[%s11 + $0xf8] sm:$0xff]
    %v2825 = vld [vmem:[%s11 + $0x100] sm:$0xff]
    %v2826 = vld [vmem:[%s11 + $0x108] sm:$0xff]
    %v2827 = vld [vmem:[%s11 + $0x110] sm:$0xff]
    %v2828 = vld [vmem:[%s11 + $0x118] sm:$0xff]
    %v2829 = vld [vmem:[%s11 + $0x120] sm:$0xff]
    %v2830 = vld [vmem:[%s11 + $0x128] sm:$0xff]
    %v2831 = vld [vmem:[%s11 + $0x130] sm:$0xff]
    %v2832 = vld [vmem:[%s11 + $0x138] sm:$0xff]
    %v2833 = vld [vmem:[%s11 + $0x140] sm:$0xff]
    %v2834 = vld [vmem:[%s11 + $0x148] sm:$0xff]
    %v2835 = vld [vmem:[%s11 + $0x150] sm:$0xff]
    %v2836 = vld [vmem:[%s11 + $0x158] sm:$0xff]
    %v2837 = vld [vmem:[%s11 + $0x160] sm:$0xff]
    %v2838 = vld [vmem:[%s11 + $0x168] sm:$0xff]
    %v2839 = vld [vmem:[%s11 + $0x170] sm:$0xff]
    %v2840 = vld [vmem:[%s11 + $0x178] sm:$0xff]
    %v2841 = vld [vmem:[%s11 + $0x180] sm:$0xff]
    %v2842 = vld [vmem:[%s11 + $0x188] sm:$0xff]
    %v2843 = vld [vmem:[%s11 + $0x190] sm:$0xff]
    %v2844 = vld [vmem:[%s11 + $0x198] sm:$0xff]
    %v2845 = vld [vmem:[%s11 + $0x1a0] sm:$0xff]
    %v2846 = vld [vmem:[%s11 + $0x1a8] sm:$0xff]
    %v2847 = vld [vmem:[%s11 + $0x1b0] sm:$0xff]
    %v2848 = vld [vmem:[%s11 + $0x1b8] sm:$0xff]
    %v2849 = vld [vmem:[%s12] sm:$0x1]
    %v2851 = vperm.slane %v2849, 0
    %v2854 = vsel %vm235, %v2788, 0
    %2856 = vmatpush.msra.mxu0 %v2808
    %2857 = vmatpush.msra.mxu0 %v2807
    %2858 = vmatpush.msra.mxu0 %v2806
    %2859 = vmatpush.msra.mxu0 %v2805
    %2860 = vmatpush.msra.mxu0 %v2804
    %2861 = vmatpush.msra.mxu0 %v2803
    %2862 = vmatpush.msra.mxu0 %v2802
    %2863 = vmatpush.msra.mxu0 %v2801
    %2864 = vmatpush.msra.mxu0 %v2800
    %2865 = vmatpush.msra.mxu0 %v2799
    %2866 = vmatpush.msra.mxu0 %v2798
    %2867 = vmatpush.msra.mxu0 %v2797
    %2868 = vmatpush.msra.mxu0 %v2796
    %2869 = vmatpush.msra.mxu0 %v2795
    %2870 = vmatpush.msra.mxu0 %v2794
    %2871 = vmatpush.msra.mxu0 %v2793
    %2872 = vmatmul.f32.gmra.mxu0 %v2785
    %v2873 = vpop.f32.mrf.mxu0
    %v2874 = vadd.f32 %v2851, %v2873
    %2875 = vdwg.mxu0
    %2876 = vmatpush.msra.mxu0 %v2824
    %2877 = vmatpush.msra.mxu0 %v2823
    %2878 = vmatpush.msra.mxu0 %v2822
    %2879 = vmatpush.msra.mxu0 %v2821
    %2880 = vmatpush.msra.mxu0 %v2820
    %2881 = vmatpush.msra.mxu0 %v2819
    %2882 = vmatpush.msra.mxu0 %v2818
    %2883 = vmatpush.msra.mxu0 %v2817
    %2884 = vmatpush.msra.mxu0 %v2816
    %2885 = vmatpush.msra.mxu0 %v2815
    %2886 = vmatpush.msra.mxu0 %v2814
    %2887 = vmatpush.msra.mxu0 %v2813
    %2888 = vmatpush.msra.mxu0 %v2812
    %2889 = vmatpush.msra.mxu0 %v2811
    %2890 = vmatpush.msra.mxu0 %v2810
    %2891 = vmatpush.msra.mxu0 %v2809
    %2892 = vmatmul.f32.gmra.mxu0 %v2786
    %v2893 = vpop.f32.mrf.mxu0
    %v2894 = vadd.f32 %v2874, %v2893
    %2895 = vdwg.mxu0
    %2896 = vmatpush.msra.mxu0 %v2840
    %2897 = vmatpush.msra.mxu0 %v2839
    %2898 = vmatpush.msra.mxu0 %v2838
    %2899 = vmatpush.msra.mxu0 %v2837
    %2900 = vmatpush.msra.mxu0 %v2836
    %2901 = vmatpush.msra.mxu0 %v2835
    %2902 = vmatpush.msra.mxu0 %v2834
    %2903 = vmatpush.msra.mxu0 %v2833
    %2904 = vmatpush.msra.mxu0 %v2832
    %2905 = vmatpush.msra.mxu0 %v2831
    %2906 = vmatpush.msra.mxu0 %v2830
    %2907 = vmatpush.msra.mxu0 %v2829
    %2908 = vmatpush.msra.mxu0 %v2828
    %2909 = vmatpush.msra.mxu0 %v2827
    %2910 = vmatpush.msra.mxu0 %v2826
    %2911 = vmatpush.msra.mxu0 %v2825
    %2912 = vmatmul.f32.gmra.mxu0 %v2787
    %v2913 = vpop.f32.mrf.mxu0
    %v2914 = vadd.f32 %v2894, %v2913
    %2915 = vdwg.mxu0
    %2916 = vmatpush.msra.mxu0 0.0
    %2917 = vmatpush.msra.mxu0 0.0
    %2918 = vmatpush.msra.mxu0 0.0
    %2919 = vmatpush.msra.mxu0 0.0
    %2920 = vmatpush.msra.mxu0 0.0
    %2921 = vmatpush.msra.mxu0 0.0
    %2922 = vmatpush.msra.mxu0 0.0
    %2923 = vmatpush.msra.mxu0 0.0
    %2924 = vmatpush.msra.mxu0 %v2848
    %2925 = vmatpush.msra.mxu0 %v2847
    %2926 = vmatpush.msra.mxu0 %v2846
    %2927 = vmatpush.msra.mxu0 %v2845
    %2928 = vmatpush.msra.mxu0 %v2844
    %2929 = vmatpush.msra.mxu0 %v2843
    %2930 = vmatpush.msra.mxu0 %v2842
    %2931 = vmatpush.msra.mxu0 %v2841
    %2932 = vmatmul.f32.gmra.mxu0 %v2854
    %v2933 = vpop.f32.mrf.mxu0
    %v2934 = vadd.f32 %v2914, %v2933
    %2935 = vdwg.mxu0
    %vm2936 = vcmask 9216
    %2937 = vst.msk [vmem:[%s15] sm:$0x3] %vm2936, %v2934
    %v2938 = vld [vmem:[%s13] sm:$0xff]
    %v2939 = vld [vmem:[%s13 + $0x8] sm:$0xff]
    %v2940 = vld [vmem:[%s13 + $0x10] sm:$0xff]
    %v2941 = vld [vmem:[%s13 + $0x18] sm:$0xff]
    %v2942 = vld [vmem:[%s13 + $0x20] sm:$0xff]
    %v2943 = vld [vmem:[%s13 + $0x28] sm:$0xff]
    %v2944 = vld [vmem:[%s13 + $0x30] sm:$0xff]
    %v2945 = vld [vmem:[%s13 + $0x38] sm:$0xff]
    %v2946 = vld [vmem:[%s13 + $0x40] sm:$0xff]
    %v2947 = vld [vmem:[%s13 + $0x48] sm:$0xff]
    %v2948 = vld [vmem:[%s13 + $0x50] sm:$0xff]
    %v2949 = vld [vmem:[%s13 + $0x58] sm:$0xff]
    %v2950 = vld [vmem:[%s13 + $0x60] sm:$0xff]
    %v2951 = vld [vmem:[%s13 + $0x68] sm:$0xff]
    %v2952 = vld [vmem:[%s13 + $0x70] sm:$0xff]
    %v2953 = vld [vmem:[%s13 + $0x78] sm:$0xff]
    %v2954 = vld [vmem:[%s13 + $0x80] sm:$0xff]
    %v2955 = vld [vmem:[%s13 + $0x88] sm:$0xff]
    %v2956 = vld [vmem:[%s13 + $0x90] sm:$0xff]
    %v2957 = vld [vmem:[%s13 + $0x98] sm:$0xff]
    %v2958 = vld [vmem:[%s13 + $0xa0] sm:$0xff]
    %v2959 = vld [vmem:[%s13 + $0xa8] sm:$0xff]
    %v2960 = vld [vmem:[%s13 + $0xb0] sm:$0xff]
    %v2961 = vld [vmem:[%s13 + $0xb8] sm:$0xff]
    %v2962 = vld [vmem:[%s13 + $0xc0] sm:$0xff]
    %v2963 = vld [vmem:[%s13 + $0xc8] sm:$0xff]
    %v2964 = vld [vmem:[%s13 + $0xd0] sm:$0xff]
    %v2965 = vld [vmem:[%s13 + $0xd8] sm:$0xff]
    %v2966 = vld [vmem:[%s13 + $0xe0] sm:$0xff]
    %v2967 = vld [vmem:[%s13 + $0xe8] sm:$0xff]
    %v2968 = vld [vmem:[%s13 + $0xf0] sm:$0xff]
    %v2969 = vld [vmem:[%s13 + $0xf8] sm:$0xff]
    %v2970 = vld [vmem:[%s13 + $0x100] sm:$0xff]
    %v2971 = vld [vmem:[%s13 + $0x108] sm:$0xff]
    %v2972 = vld [vmem:[%s13 + $0x110] sm:$0xff]
    %v2973 = vld [vmem:[%s13 + $0x118] sm:$0xff]
    %v2974 = vld [vmem:[%s13 + $0x120] sm:$0xff]
    %v2975 = vld [vmem:[%s13 + $0x128] sm:$0xff]
    %v2976 = vld [vmem:[%s13 + $0x130] sm:$0xff]
    %v2977 = vld [vmem:[%s13 + $0x138] sm:$0xff]
    %v2978 = vld [vmem:[%s13 + $0x140] sm:$0xff]
    %v2979 = vld [vmem:[%s13 + $0x148] sm:$0xff]
    %v2980 = vld [vmem:[%s13 + $0x150] sm:$0xff]
    %v2981 = vld [vmem:[%s13 + $0x158] sm:$0xff]
    %v2982 = vld [vmem:[%s13 + $0x160] sm:$0xff]
    %v2983 = vld [vmem:[%s13 + $0x168] sm:$0xff]
    %v2984 = vld [vmem:[%s13 + $0x170] sm:$0xff]
    %v2985 = vld [vmem:[%s13 + $0x178] sm:$0xff]
    %v2986 = vld [vmem:[%s13 + $0x180] sm:$0xff]
    %v2987 = vld [vmem:[%s13 + $0x188] sm:$0xff]
    %v2988 = vld [vmem:[%s13 + $0x190] sm:$0xff]
    %v2989 = vld [vmem:[%s13 + $0x198] sm:$0xff]
    %v2990 = vld [vmem:[%s13 + $0x1a0] sm:$0xff]
    %v2991 = vld [vmem:[%s13 + $0x1a8] sm:$0xff]
    %v2992 = vld [vmem:[%s13 + $0x1b0] sm:$0xff]
    %v2993 = vld [vmem:[%s13 + $0x1b8] sm:$0xff]
    %v2994 = vld [vmem:[%s14] sm:$0x1]
    %v2996 = vperm.slane %v2994, 0
    %v2999 = vsel %vm235, %v2792, 0
    %3001 = vmatpush.msra.mxu0 %v2953
    %3002 = vmatpush.msra.mxu0 %v2952
    %3003 = vmatpush.msra.mxu0 %v2951
    %3004 = vmatpush.msra.mxu0 %v2950
    %3005 = vmatpush.msra.mxu0 %v2949
    %3006 = vmatpush.msra.mxu0 %v2948
    %3007 = vmatpush.msra.mxu0 %v2947
    %3008 = vmatpush.msra.mxu0 %v2946
    %3009 = vmatpush.msra.mxu0 %v2945
    %3010 = vmatpush.msra.mxu0 %v2944
    %3011 = vmatpush.msra.mxu0 %v2943
    %3012 = vmatpush.msra.mxu0 %v2942
    %3013 = vmatpush.msra.mxu0 %v2941
    %3014 = vmatpush.msra.mxu0 %v2940
    %3015 = vmatpush.msra.mxu0 %v2939
    %3016 = vmatpush.msra.mxu0 %v2938
    %3017 = vmatmul.f32.gmra.mxu0 %v2789
    %v3018 = vpop.f32.mrf.mxu0
    %v3019 = vadd.f32 %v2996, %v3018
    %3020 = vdwg.mxu0
    %3021 = vmatpush.msra.mxu0 %v2969
    %3022 = vmatpush.msra.mxu0 %v2968
    %3023 = vmatpush.msra.mxu0 %v2967
    %3024 = vmatpush.msra.mxu0 %v2966
    %3025 = vmatpush.msra.mxu0 %v2965
    %3026 = vmatpush.msra.mxu0 %v2964
    %3027 = vmatpush.msra.mxu0 %v2963
    %3028 = vmatpush.msra.mxu0 %v2962
    %3029 = vmatpush.msra.mxu0 %v2961
    %3030 = vmatpush.msra.mxu0 %v2960
    %3031 = vmatpush.msra.mxu0 %v2959
    %3032 = vmatpush.msra.mxu0 %v2958
    %3033 = vmatpush.msra.mxu0 %v2957
    %3034 = vmatpush.msra.mxu0 %v2956
    %3035 = vmatpush.msra.mxu0 %v2955
    %3036 = vmatpush.msra.mxu0 %v2954
    %3037 = vmatmul.f32.gmra.mxu0 %v2790
    %v3038 = vpop.f32.mrf.mxu0
    %v3039 = vadd.f32 %v3019, %v3038
    %3040 = vdwg.mxu0
    %3041 = vmatpush.msra.mxu0 %v2985
    %3042 = vmatpush.msra.mxu0 %v2984
    %3043 = vmatpush.msra.mxu0 %v2983
    %3044 = vmatpush.msra.mxu0 %v2982
    %3045 = vmatpush.msra.mxu0 %v2981
    %3046 = vmatpush.msra.mxu0 %v2980
    %3047 = vmatpush.msra.mxu0 %v2979
    %3048 = vmatpush.msra.mxu0 %v2978
    %3049 = vmatpush.msra.mxu0 %v2977
    %3050 = vmatpush.msra.mxu0 %v2976
    %3051 = vmatpush.msra.mxu0 %v2975
    %3052 = vmatpush.msra.mxu0 %v2974
    %3053 = vmatpush.msra.mxu0 %v2973
    %3054 = vmatpush.msra.mxu0 %v2972
    %3055 = vmatpush.msra.mxu0 %v2971
    %3056 = vmatpush.msra.mxu0 %v2970
    %3057 = vmatmul.f32.gmra.mxu0 %v2791
    %v3058 = vpop.f32.mrf.mxu0
    %v3059 = vadd.f32 %v3039, %v3058
    %3060 = vdwg.mxu0
    %3061 = vmatpush.msra.mxu0 0.0
    %3062 = vmatpush.msra.mxu0 0.0
    %3063 = vmatpush.msra.mxu0 0.0
    %3064 = vmatpush.msra.mxu0 0.0
    %3065 = vmatpush.msra.mxu0 0.0
    %3066 = vmatpush.msra.mxu0 0.0
    %3067 = vmatpush.msra.mxu0 0.0
    %3068 = vmatpush.msra.mxu0 0.0
    %3069 = vmatpush.msra.mxu0 %v2993
    %3070 = vmatpush.msra.mxu0 %v2992
    %3071 = vmatpush.msra.mxu0 %v2991
    %3072 = vmatpush.msra.mxu0 %v2990
    %3073 = vmatpush.msra.mxu0 %v2989
    %3074 = vmatpush.msra.mxu0 %v2988
    %3075 = vmatpush.msra.mxu0 %v2987
    %3076 = vmatpush.msra.mxu0 %v2986
    %3077 = vmatmul.f32.gmra.mxu0 %v2999
    %v3078 = vpop.f32.mrf.mxu0
    %v3079 = vadd.f32 %v3059, %v3078
    %3080 = vdwg.mxu0
    %vm3081 = vcmask 41984
    %v3082 = vsel %vm3081, %v3079, -inf
    %3083 = vmax.xlane.f32.xlu0 %v3082
    %v3084 = vpop.xlane.xlu0 %3083
    %v3085 = vsub.f32 %v3079, %v3084
    %v3086 = vmul.f32 %v3085, 1.442695
    %v3087 = vpow.pop %v3086
    %v3088 = vsel %vm3081, %v3087, 0.0
    %3089 = vadd.xlane.f32.xlu0 %v3088
    %v3090 = vpop.xlane.xlu0 %3089
    %v3091 = vrcp.pop %v3090
    %v3092 = vmul.f32 %v3090, %v3091
    %v3093 = vsub.f32 1.0, %v3092
    %v3094 = vmul.f32 %v3091, %v3093
    %v3095 = vadd.f32 %v3091, %v3094
    %vm3096 = vweird.f32 %v3090
    %vm3097 = vweird.f32 %v3091
    %vm3098 = vmor %vm3096, %vm3097
    %v3099 = vsel %vm3098, %v3091, %v3095
    %v3100 = vand.u32 2147483647, %v3090
    %vm3101 = vcmp.eq.f32.partialorder %v3100, 8.507059e+37
    %v3102 = vand.u32 %v3090, 2147483648
    %v3103 = vor.u32 1.1754944e-38, %v3102
    %v3104 = vsel %vm3101, %v3103, %v3099
    %v3105 = vmul.f32 %v3087, %v3104
    %3106 = vst.msk [vmem:[#allocation2] sm:$0x3] %vm3081, %v3105
    // Predicated region
    $region62: #{quant_policy_forward.3} parent=1 // pred_check
      _
    $region63: #{quant_policy_forward.3} parent=1 // pred_check_branch
      %3108 = sbr.rel (0) target = $region65
    $region64: #{quant_policy_forward.3} parent=1 // pred_region
      _
    $region65: #{quant_policy_forward.3} parent=1 // pred_fallthru
      _
    // Predicated region
    $region66: #{quant_policy_forward.3} parent=1 // pred_check
      _
    $region67: #{quant_policy_forward.3} parent=1 // pred_check_branch
      %3110 = sbr.rel (0) target = $region69
    $region68: #{quant_policy_forward.3} parent=1 // pred_region
      %3112 = vsyncadd [#allocation3], 0
      %s3114 = sshll.u32 [#allocation2], 4
      %s3115 = int_to_ptr.vmem [resolvable:$true] %s3114
      %s3116 = sshll.u32 %s16, 4
      %s3117 = int_to_ptr.hbm [resolvable:$true] %s3116
      %3119 = dma.vmem_to_hbm [thread:$0]  %s3115, 32, %s3117, [#allocation3]
    $region69: #{quant_policy_forward.3} parent=1 // pred_fallthru
      _
    // Predicated region
    $region70: #{quant_policy_forward.3} parent=1 // pred_check
      _
    $region71: #{quant_policy_forward.3} parent=1 // pred_check_branch
      %3121 = sbr.rel (0) target = $region73
    $region72: #{quant_policy_forward.3} parent=1 // pred_region
      _
    $region73: #{quant_policy_forward.3} parent=1 // pred_fallthru
      _
    // Predicated region
    $region74: #{quant_policy_forward.3} parent=1 // pred_check
      _
    $region75: #{quant_policy_forward.3} parent=1 // pred_check_branch
      %3123 = sbr.rel (0) target = $region77
    $region76: #{quant_policy_forward.3} parent=1 // pred_region
      %3125 = dma.done [#allocation3], 32
    $region77: #{quant_policy_forward.3} parent=1 // pred_fallthru
      _
    %3126 = vsyncpa [#allocation3], 1

</llo_original>
